<compile_context>
chip_gen: v7x
topology: tpu7x:2x2x1
jax: 0.10.0
libtpu: 0.0.40
codegen_flags: <defaults>
</compile_context>

<pallas_src>
import functools

import jax
import jax.numpy as jnp
from jax.experimental import pallas as pl
from jax.experimental.pallas import tpu as pltpu

EPS = 1e-5
MXU_DTYPE = jnp.bfloat16        # MXU operand dtype (accumulation stays f32)
STORE_DTYPE = jnp.bfloat16      # dtype of the pre-BN intermediates in HBM
_VMEM_LIMIT = 48 * 1024 * 1024  # > 32 MiB scoped default, < v7x 64 MiB physical


def _compiler_params():
    return pltpu.CompilerParams(dimension_semantics=("parallel",),
                                vmem_limit_bytes=_VMEM_LIMIT)


# ----------------------------------------------------------------------------
# Kernel 1: per-image 9-tap implicit conv + per-image BN partial statistics.
# Optionally fuses the *previous* BN + ReLU into the tap load (used for conv2).
# ----------------------------------------------------------------------------
def _make_conv_stats_kernel(OH, OW, Cin, Cout, tap_offsets, fuse_bn_relu,
                            store_dtype, mxu_dtype):
    def kernel(*refs):
        if fuse_bn_relu:
            x_ref, scale_ref, shift_ref, w_ref, y_ref, s_ref, q_ref = refs
            # x_ref holds the previous conv's PRE-BN output (bf16, unpadded).
            a = (x_ref[0].astype(jnp.float32) * scale_ref[...].reshape(1, 1, Cin)
                 + shift_ref[...].reshape(1, 1, Cin))
            a = jnp.maximum(a, 0.0).astype(mxu_dtype)
            # zero-pad H and W by 1 (3x3, pad=1) in-register via concatenate.
            ih, iw = a.shape[0], a.shape[1]
            zcol = jnp.zeros((ih, 1, Cin), mxu_dtype)
            a = jnp.concatenate([zcol, a, zcol], axis=1)
            zrow = jnp.zeros((1, iw + 2, Cin), mxu_dtype)
            a = jnp.concatenate([zrow, a, zrow], axis=0)
        else:
            x_ref, w_ref, y_ref, s_ref, q_ref = refs
            a = x_ref[0]                      # already padded (+reordered), bf16

        acc = jnp.zeros((OH * OW, Cout), jnp.float32)
        for t, (r0, c0) in enumerate(tap_offsets):       # static unroll, 9 taps
            win = a[r0:r0 + OH, c0:c0 + OW, :].reshape(OH * OW, Cin)
            acc = acc + jnp.dot(win, w_ref[t],
                                preferred_element_type=jnp.float32)

        y_ref[0] = acc.reshape(OH, OW, Cout).astype(store_dtype)
        # Per-image partial stats from the f32 accumulator (before bf16 cast).
        s_ref[0] = jnp.sum(acc, axis=0, keepdims=True)
        q_ref[0] = jnp.sum(acc * acc, axis=0, keepdims=True)

    return kernel


def _conv_stats_call(x_slab, w_taps, OH, OW, tap_offsets, scale=None, shift=None):
    """x_slab: (N, IH, IW, Cin); w_taps: (9, Cin, Cout).
    Returns y (N, OH, OW, Cout) bf16 pre-BN output and (N,1,Cout) partial stats."""
    N = x_slab.shape[0]
    Cin = x_slab.shape[-1]
    Cout = w_taps.shape[-1]
    fuse = scale is not None
    kernel = _make_conv_stats_kernel(OH, OW, Cin, Cout, tap_offsets, fuse,
                                     STORE_DTYPE, MXU_DTYPE)

    in_specs = [pl.BlockSpec((1,) + tuple(x_slab.shape[1:]),
                             lambda n: (n, 0, 0, 0))]
    inputs = [x_slab]
    if fuse:
        in_specs += [pl.BlockSpec((1, Cin), lambda n: (0, 0)),
                     pl.BlockSpec((1, Cin), lambda n: (0, 0))]
        inputs += [scale, shift]
    in_specs.append(pl.BlockSpec(tuple(w_taps.shape), lambda n: (0, 0, 0)))
    inputs.append(w_taps)

    out_specs = (pl.BlockSpec((1, OH, OW, Cout), lambda n: (n, 0, 0, 0)),
                 pl.BlockSpec((1, 1, Cout), lambda n: (n, 0, 0)),
                 pl.BlockSpec((1, 1, Cout), lambda n: (n, 0, 0)))
    out_shape = (jax.ShapeDtypeStruct((N, OH, OW, Cout), STORE_DTYPE),
                 jax.ShapeDtypeStruct((N, 1, Cout), jnp.float32),
                 jax.ShapeDtypeStruct((N, 1, Cout), jnp.float32))

    return pl.pallas_call(kernel, grid=(N,), in_specs=in_specs,
                          out_specs=out_specs, out_shape=out_shape,
                          compiler_params=_compiler_params())(*inputs)


# ----------------------------------------------------------------------------
# Kernel 2: stats-only 1x1-conv pass for the projection shortcut (no y output).
# ----------------------------------------------------------------------------
def _make_matmul_stats_kernel(OH, OW, Cin, Cout):
    def kernel(x_ref, w_ref, s_ref, q_ref):
        lhs = x_ref[0].reshape(OH * OW, Cin)
        y = jnp.dot(lhs, w_ref[...], preferred_element_type=jnp.float32)
        s_ref[0] = jnp.sum(y, axis=0, keepdims=True)
        q_ref[0] = jnp.sum(y * y, axis=0, keepdims=True)
    return kernel


def _matmul_stats_call(x_sub, w):
    N, OH, OW, Cin = x_sub.shape
    Cout = w.shape[-1]
    kernel = _make_matmul_stats_kernel(OH, OW, Cin, Cout)
    return pl.pallas_call(
        kernel, grid=(N,),
        in_specs=[pl.BlockSpec((1, OH, OW, Cin), lambda n: (n, 0, 0, 0)),
                  pl.BlockSpec((Cin, Cout), lambda n: (0, 0))],
        out_specs=(pl.BlockSpec((1, 1, Cout), lambda n: (n, 0, 0)),
                   pl.BlockSpec((1, 1, Cout), lambda n: (n, 0, 0))),
        out_shape=(jax.ShapeDtypeStruct((N, 1, Cout), jnp.float32),
                   jax.ShapeDtypeStruct((N, 1, Cout), jnp.float32)),
        compiler_params=_compiler_params())(x_sub, w)


# ----------------------------------------------------------------------------
# Kernel 3: finalize  y2*scale2+shift2  (+ shortcut-BN(1x1 recompute) | + x)
#           then ReLU.  The projection shortcut is recomputed here so its
#           (M, Cout) pre-BN output never touches HBM.
# ----------------------------------------------------------------------------
def _make_finalize_kernel(OH, OW, Cout, proj, Cin_sc):
    def kernel(*refs):
        if proj:
            y_ref, sc2_ref, sh2_ref, xs_ref, ws_ref, scs_ref, shs_ref, o_ref = refs
        else:
            y_ref, sc2_ref, sh2_ref, r_ref, o_ref = refs

        out = (y_ref[0].astype(jnp.float32) * sc2_ref[...].reshape(1, 1, Cout)
               + sh2_ref[...].reshape(1, 1, Cout))
        if proj:
            lhs = xs_ref[0].reshape(OH * OW, Cin_sc)
            r = jnp.dot(lhs, ws_ref[...], preferred_element_type=jnp.float32)
            r = (r.reshape(OH, OW, Cout) * scs_ref[...].reshape(1, 1, Cout)
                 + shs_ref[...].reshape(1, 1, Cout))
        else:
            r = r_ref[0].astype(jnp.float32)
        o_ref[0] = jnp.maximum(out + r, 0.0)

    return kernel


def _finalize_call(y2, scale2, shift2, *, x_sub=None, w_sc=None,
                   scale_sc=None, shift_sc=None, residual=None):
    N, OH, OW, Cout = y2.shape
    img_spec = pl.BlockSpec((1, OH, OW, Cout), lambda n: (n, 0, 0, 0))

    def vec_spec(c):
        return pl.BlockSpec((1, c), lambda n: (0, 0))

    proj = x_sub is not None
    if proj:
        Cin_sc = x_sub.shape[-1]
        kernel = _make_finalize_kernel(OH, OW, Cout, True, Cin_sc)
        in_specs = [img_spec, vec_spec(Cout), vec_spec(Cout),
                    pl.BlockSpec((1, OH, OW, Cin_sc), lambda n: (n, 0, 0, 0)),
                    pl.BlockSpec((Cin_sc, Cout), lambda n: (0, 0)),
                    vec_spec(Cout), vec_spec(Cout)]
        inputs = [y2, scale2, shift2, x_sub, w_sc, scale_sc, shift_sc]
    else:
        kernel = _make_finalize_kernel(OH, OW, Cout, False, None)
        in_specs = [img_spec, vec_spec(Cout), vec_spec(Cout),
                    pl.BlockSpec((1, OH, OW, Cout), lambda n: (n, 0, 0, 0))]
        inputs = [y2, scale2, shift2, residual]

    return pl.pallas_call(kernel, grid=(N,), in_specs=in_specs,
                          out_specs=img_spec,
                          out_shape=jax.ShapeDtypeStruct((N, OH, OW, Cout),
                                                         jnp.float32),
                          compiler_params=_compiler_params())(*inputs)


# ----------------------------------------------------------------------------
# Wrapper-side helpers (tiny XLA ops)
# ----------------------------------------------------------------------------
def _bn_scale_shift(psum, psumsq, gamma, beta, count):
    """Reduce per-image partial stats and build per-channel scale/shift once."""
    # TODO(synk): E[x^2]-E[x]^2 in f32 cancels catastrophically when
    # count = N*OH*OW is very large and |mean| >> std; switch to a
    # mean-centred second pass (or compensated sum-of-squares) at that scale.
    s = jnp.sum(psum, axis=0)          # (1, C)
    q = jnp.sum(psumsq, axis=0)        # (1, C)
    mean = s / count
    var = jnp.maximum(q / count - mean * mean, 0.0)   # biased batch variance
    scale = gamma.reshape(1, -1) * jax.lax.rsqrt(var + EPS)
    shift = beta.reshape(1, -1) - mean * scale
    return scale, shift


def _prep_conv_input(x_nhwc, stride, OH, OW):
    """Zero-pad (pad=1) and, for stride 2, phase-reorder rows/cols so that every
    3x3 tap window is a contiguous static slice inside the kernel.
    Returns (slab, tap_offsets) with tap_offsets[t]=(row_off,col_off), t=kh*3+kw."""
    xp = jnp.pad(x_nhwc, ((0, 0), (1, 1), (1, 1), (0, 0)))
    if stride == 1:
        return xp, [(kh, kw) for kh in range(3) for kw in range(3)]
    if stride != 2:
        raise NotImplementedError("only stride 1 and 2 are supported")
    # rows reordered as [even-phase rows (OH+1) | odd-phase rows (OH)]
    xr = jnp.concatenate([xp[:, 0::2][:, :OH + 1], xp[:, 1::2][:, :OH]], axis=1)
    # cols reordered as [even-phase cols (OW+1) | odd-phase cols (OW)]
    xr = jnp.concatenate([xr[:, :, 0::2][:, :, :OW + 1],
                          xr[:, :, 1::2][:, :, :OW]], axis=2)
    roff = {0: 0, 1: OH + 1, 2: 1}
    coff = {0: 0, 1: OW + 1, 2: 1}
    return xr, [(roff[kh], coff[kw]) for kh in range(3) for kw in range(3)]


def init_residual_block_params(key, in_channels, out_channels, stride):
    """Deterministic synthetic parameters (shapes match the PyTorch module)."""
    ks = jax.random.split(key, 16)
    p = {
        "w1": jax.random.normal(ks[0], (out_channels, in_channels, 3, 3)) * 0.1,
        "b1": jax.random.normal(ks[1], (out_channels,)) * 0.1,
        "g1": 1.0 + 0.1 * jax.random.normal(ks[2], (out_channels,)),
        "be1": 0.1 * jax.random.normal(ks[3], (out_channels,)),
        "w2": jax.random.normal(ks[4], (out_channels, out_channels, 3, 3)) * 0.1,
        "b2": jax.random.normal(ks[5], (out_channels,)) * 0.1,
        "g2": 1.0 + 0.1 * jax.random.normal(ks[6], (out_channels,)),
        "be2": 0.1 * jax.random.normal(ks[7], (out_channels,)),
    }
    if stride != 1 or in_channels != out_channels:
        p.update({
            "ws": jax.random.normal(ks[8], (out_channels, in_channels, 1, 1)) * 0.1,
            "bs": jax.random.normal(ks[9], (out_channels,)) * 0.1,
            "gs": 1.0 + 0.1 * jax.random.normal(ks[10], (out_channels,)),
            "bes": 0.1 * jax.random.normal(ks[11], (out_channels,)),
        })
    return jax.tree_util.tree_map(lambda a: a.astype(jnp.float32), p)


def prepare_params(params, in_channels, out_channels, stride):
    """Reshape weights to per-tap (9, Cin, Cout) layout and cast MXU operands to
    bf16 ONCE outside the jitted forward.  Conv biases (b1/b2/bs) are dropped:
    a per-channel bias immediately before training-mode BatchNorm is cancelled
    exactly by the mean subtraction, so the forward output is unchanged."""
    def tap_weight(w):                    # (Cout, Cin, 3, 3) -> (9, Cin, Cout)
        co, ci = w.shape[0], w.shape[1]
        return jnp.transpose(w, (2, 3, 1, 0)).reshape(9, ci, co).astype(MXU_DTYPE)

    prep = {
        "w1": tap_weight(params["w1"]),
        "g1": params["g1"].astype(jnp.float32),
        "be1": params["be1"].astype(jnp.float32),
        "w2": tap_weight(params["w2"]),
        "g2": params["g2"].astype(jnp.float32),
        "be2": params["be2"].astype(jnp.float32),
    }
    if stride != 1 or in_channels != out_channels:
        prep["ws"] = jnp.transpose(params["ws"][:, :, 0, 0]).astype(MXU_DTYPE)
        prep["gs"] = params["gs"].astype(jnp.float32)
        prep["bes"] = params["bes"].astype(jnp.float32)
    return prep


@functools.partial(jax.jit, static_argnames=("stride",))
def residual_block_pallas(x_nchw, prep, stride):
    """Forward pass of ResidualBlock. x: (N, Cin, H, W) -> (N, Cout, OH, OW)."""
    N, Cin, H, W = x_nchw.shape
    OH = (H + 2 - 3) // stride + 1
    OW = (W + 2 - 3) // stride + 1
    x_nhwc = jnp.transpose(x_nchw, (0, 2, 3, 1)).astype(jnp.float32)

    # --- conv1 (+ per-image BN1 partial stats) -------------------------------
    # TODO(synk): pad / phase-reorder + NCHW<->NHWC transposes still run as XLA
    # ops (~1x input bytes); a halo-DMA row-slab variant would move them
    # in-kernel and cover images too large for a per-image VMEM block.
    x1, taps1 = _prep_conv_input(x_nhwc.astype(MXU_DTYPE), stride, OH, OW)
    y1, s1, q1 = _conv_stats_call(x1, prep["w1"], OH, OW, taps1)
    scale1, shift1 = _bn_scale_shift(s1, q1, prep["g1"], prep["be1"],
                                     N * OH * OW)

    # --- conv2 with BN1+ReLU fused into the tap load (+ BN2 partial stats) ---
    taps2 = [(kh, kw) for kh in range(3) for kw in range(3)]
    y2, s2, q2 = _conv_stats_call(y1, prep["w2"], OH, OW, taps2,
                                  scale=scale1, shift=shift1)
    scale2, shift2 = _bn_scale_shift(s2, q2, prep["g2"], prep["be2"],
                                     N * OH * OW)

    # --- shortcut + fused BN2 [+ shortcut BN] + add + ReLU --------------------
    if "ws" in prep:
        x_sub = x_nhwc[:, ::stride, ::stride, :][:, :OH, :OW].astype(MXU_DTYPE)
        ss, qs = _matmul_stats_call(x_sub, prep["ws"])
        scale_s, shift_s = _bn_scale_shift(ss, qs, prep["gs"], prep["bes"],
                                           N * OH * OW)
        out = _finalize_call(y2, scale2, shift2, x_sub=x_sub, w_sc=prep["ws"],
                             scale_sc=scale_s, shift_sc=shift_s)
    else:
        out = _finalize_call(y2, scale2, shift2, residual=x_nhwc)

    return jnp.transpose(out, (0, 3, 1, 2))


# ----------------------------------------------------------------------------
# Pure-JAX reference (mirrors the PyTorch module in training mode, f32)
# ----------------------------------------------------------------------------
def residual_block_ref(x, params, stride):
    def conv(x, w, b, s, pad):
        y = jax.lax.conv_general_dilated(
            x, w, (s, s), [(pad, pad), (pad, pad)],
            dimension_numbers=("NCHW", "OIHW", "NCHW"))
        return y + b[None, :, None, None]

    def bn(y, g, be):
        mean = y.mean(axis=(0, 2, 3), keepdims=True)
        var = ((y - mean) ** 2).mean(axis=(0, 2, 3), keepdims=True)
        yhat = (y - mean) * jax.lax.rsqrt(var + EPS)
        return g[None, :, None, None] * yhat + be[None, :, None, None]

    out = jax.nn.relu(bn(conv(x, params["w1"], params["b1"], stride, 1),
                         params["g1"], params["be1"]))
    out = bn(conv(out, params["w2"], params["b2"], 1, 1),
             params["g2"], params["be2"])
    if "ws" in params:
        sc = bn(conv(x, params["ws"], params["bs"], stride, 0),
                params["gs"], params["bes"])
    else:
        sc = x
    return jax.nn.relu(out + sc)


# ----------------------------------------------------------------------------
if __name__ == "__main__":
    key = jax.random.PRNGKey(0)
    kx, kp1, kp2 = jax.random.split(key, 3)

    x = jax.random.normal(kx, (2, 4, 16, 16), dtype=jnp.float32)

    # bf16 MXU operands + bf16 pre-BN intermediates vs. a pure-f32 reference.
    TOL = 5e-2

    # Case 1: projection shortcut (stride=2, 4 -> 8 channels).
    params1 = init_residual_block_params(kp1, 4, 8, 2)
    prep1 = prepare_params(params1, 4, 8, 2)
    out1 = jax.block_until_ready(residual_block_pallas(x, prep1, stride=2))
    ref1 = residual_block_ref(x, params1, 2)
    assert out1.shape == (2, 8, 8, 8), out1.shape
    err1 = float(jnp.max(jnp.abs(out1 - ref1)))
    assert err1 < TOL, f"projection-case max abs err {err1}"

    # Case 2: identity shortcut (stride=1, 4 -> 4 channels).
    params2 = init_residual_block_params(kp2, 4, 4, 1)
    prep2 = prepare_params(params2, 4, 4, 1)
    out2 = jax.block_until_ready(residual_block_pallas(x, prep2, stride=1))
    ref2 = residual_block_ref(x, params2, 1)
    assert out2.shape == (2, 4, 16, 16), out2.shape
    err2 = float(jnp.max(jnp.abs(out2 - ref2)))
    assert err2 < TOL, f"identity-case max abs err {err2}"

    print("KERNEL_OK")
</pallas_src>

<mosaic_0001>
module attributes {stable_mosaic.version = 11 : i64} {
  func.func @kernel(%arg0: i32, %arg1: memref<1x8x8x4xbf16, #tpu.memory_space<vmem>>, %arg2: memref<4x8xbf16, #tpu.memory_space<vmem>>, %arg3: memref<1x1x8xf32, #tpu.memory_space<vmem>>, %arg4: memref<1x1x8xf32, #tpu.memory_space<vmem>>) attributes {dimension_semantics = [#tpu.dimension_semantics<parallel>], iteration_bounds = array<i64: 2>, scalar_prefetch = 0 : i64, scratch_operands = 0 : i64, tpu.core_type = #tpu.core_type<tc>, window_params = [{transform_indices = @transform_0, window_bounds = array<i64: 1, 8, 8, 4>}, {pipeline_mode = #tpu.pipeline_mode<synchronous>, transform_indices = @transform_1, window_bounds = array<i64: 4, 8>}, {transform_indices = @transform_2, window_bounds = array<i64: 1, 1, 8>}, {transform_indices = @transform_3, window_bounds = array<i64: 1, 1, 8>}]} {
    %c0 = arith.constant 0 : index
    %c0_0 = arith.constant 0 : index
    %c0_1 = arith.constant 0 : index
    %c0_2 = arith.constant 0 : index
    %0 = vector.load %arg1[%c0, %c0_0, %c0_1, %c0_2] : memref<1x8x8x4xbf16, #tpu.memory_space<vmem>>, vector<1x8x8x4xbf16>
    %1 = vector.shape_cast %0 : vector<1x8x8x4xbf16> to vector<8x8x4xbf16>
    %2 = vector.shape_cast %1 : vector<8x8x4xbf16> to vector<64x4xbf16>
    %c0_3 = arith.constant 0 : index
    %c0_4 = arith.constant 0 : index
    %3 = vector.load %arg2[%c0_3, %c0_4] : memref<4x8xbf16, #tpu.memory_space<vmem>>, vector<4x8xbf16>
    %cst = arith.constant dense<0.000000e+00> : vector<64x8xf32>
    %4 = tpu.matmul %2, %3, %cst {dimension_numbers = #tpu.dot_dimension_numbers<[1], [0], [0], [1], [0, 0, 1, 1], [], []>} : vector<64x4xbf16>, vector<4x8xbf16>, vector<64x8xf32> -> vector<64x8xf32>
    %cst_5 = arith.constant dense<0.000000e+00> : vector<8xf32>
    %5 = vector.multi_reduction <add>, %4, %cst_5 [0] : vector<64x8xf32> to vector<8xf32>
    %6 = vector.shape_cast %5 : vector<8xf32> to vector<1x8xf32>
    %c0_6 = arith.constant 0 : index
    %c0_7 = arith.constant 0 : index
    %c0_8 = arith.constant 0 : index
    %7 = vector.load %arg3[%c0_6, %c0_7, %c0_8] : memref<1x1x8xf32, #tpu.memory_space<vmem>>, vector<1x1x8xf32>
    %8 = vector.shape_cast %7 : vector<1x1x8xf32> to vector<1x8xf32>
    %9 = vector.shape_cast %6 : vector<1x8xf32> to vector<1x1x8xf32>
    tpu.vector_store %arg3[%c0_6, %c0_7, %c0_8], %9 {strides = array<i32>} : memref<1x1x8xf32, #tpu.memory_space<vmem>>, vector<1x1x8xf32>,
    %10 = arith.mulf %4, %4 : vector<64x8xf32>
    %cst_9 = arith.constant dense<0.000000e+00> : vector<8xf32>
    %11 = vector.multi_reduction <add>, %10, %cst_9 [0] : vector<64x8xf32> to vector<8xf32>
    %12 = vector.shape_cast %11 : vector<8xf32> to vector<1x8xf32>
    %c0_10 = arith.constant 0 : index
    %c0_11 = arith.constant 0 : index
    %c0_12 = arith.constant 0 : index
    %13 = vector.load %arg4[%c0_10, %c0_11, %c0_12] : memref<1x1x8xf32, #tpu.memory_space<vmem>>, vector<1x1x8xf32>
    %14 = vector.shape_cast %13 : vector<1x1x8xf32> to vector<1x8xf32>
    %15 = vector.shape_cast %12 : vector<1x8xf32> to vector<1x1x8xf32>
    tpu.vector_store %arg4[%c0_10, %c0_11, %c0_12], %15 {strides = array<i32>} : memref<1x1x8xf32, #tpu.memory_space<vmem>>, vector<1x1x8xf32>,
    return
  }
  func.func @transform_0(%arg0: i32) -> (i32, i32, i32, i32) {
    %c0_i32 = arith.constant 0 : i32
    %c0_i32_0 = arith.constant 0 : i32
    %c0_i32_1 = arith.constant 0 : i32
    %c0_i32_2 = arith.constant 0 : i32
    return %arg0, %c0_i32, %c0_i32_0, %c0_i32_1 : i32, i32, i32, i32
  }
  func.func @transform_1(%arg0: i32) -> (i32, i32) {
    %c0_i32 = arith.constant 0 : i32
    %c0_i32_0 = arith.constant 0 : i32
    %c0_i32_1 = arith.constant 0 : i32
    return %c0_i32, %c0_i32_0 : i32, i32
  }
  func.func @transform_2(%arg0: i32) -> (i32, i32, i32) {
    %c0_i32 = arith.constant 0 : i32
    %c0_i32_0 = arith.constant 0 : i32
    %c0_i32_1 = arith.constant 0 : i32
    return %arg0, %c0_i32, %c0_i32_0 : i32, i32, i32
  }
  func.func @transform_3(%arg0: i32) -> (i32, i32, i32) {
    %c0_i32 = arith.constant 0 : i32
    %c0_i32_0 = arith.constant 0 : i32
    %c0_i32_1 = arith.constant 0 : i32
    return %arg0, %c0_i32, %c0_i32_0 : i32, i32, i32
  }
}

module attributes {stable_mosaic.version = 11 : i64} {
  func.func @kernel(%arg0: i32, %arg1: memref<1x17x17x4xbf16, #tpu.memory_space<vmem>>, %arg2: memref<9x4x8xbf16, #tpu.memory_space<vmem>>, %arg3: memref<1x8x8x8xbf16, #tpu.memory_space<vmem>>, %arg4: memref<1x1x8xf32, #tpu.memory_space<vmem>>, %arg5: memref<1x1x8xf32, #tpu.memory_space<vmem>>) attributes {dimension_semantics = [#tpu.dimension_semantics<parallel>], iteration_bounds = array<i64: 2>, scalar_prefetch = 0 : i64, scratch_operands = 0 : i64, tpu.core_type = #tpu.core_type<tc>, window_params = [{transform_indices = @transform_0, window_bounds = array<i64: 1, 17, 17, 4>}, {pipeline_mode = #tpu.pipeline_mode<synchronous>, transform_indices = @transform_1, window_bounds = array<i64: 9, 4, 8>}, {transform_indices = @transform_2, window_bounds = array<i64: 1, 8, 8, 8>}, {transform_indices = @transform_3, window_bounds = array<i64: 1, 1, 8>}, {transform_indices = @transform_4, window_bounds = array<i64: 1, 1, 8>}]} {
    %c0 = arith.constant 0 : index
    %c0_0 = arith.constant 0 : index
    %c0_1 = arith.constant 0 : index
    %c0_2 = arith.constant 0 : index
    %0 = vector.load %arg1[%c0, %c0_0, %c0_1, %c0_2] : memref<1x17x17x4xbf16, #tpu.memory_space<vmem>>, vector<1x17x17x4xbf16>
    %1 = vector.shape_cast %0 : vector<1x17x17x4xbf16> to vector<17x17x4xbf16>
    %cst = arith.constant 0.000000e+00 : f32
    %2 = vector.broadcast %cst : f32 to vector<64x8xf32>
    %3 = vector.extract_strided_slice %1 {offsets = [0, 0, 0], sizes = [8, 8, 4], strides = [1, 1, 1]} : vector<17x17x4xbf16> to vector<8x8x4xbf16>
    %4 = vector.shape_cast %3 : vector<8x8x4xbf16> to vector<64x4xbf16>
    %c0_3 = arith.constant 0 : index
    %c0_4 = arith.constant 0 : index
    %c0_5 = arith.constant 0 : index
    %5 = vector.load %arg2[%c0_3, %c0_4, %c0_5] : memref<9x4x8xbf16, #tpu.memory_space<vmem>>, vector<1x4x8xbf16>
    %6 = vector.shape_cast %5 : vector<1x4x8xbf16> to vector<4x8xbf16>
    %cst_6 = arith.constant dense<0.000000e+00> : vector<64x8xf32>
    %7 = tpu.matmul %4, %6, %cst_6 {dimension_numbers = #tpu.dot_dimension_numbers<[1], [0], [0], [1], [0, 0, 1, 1], [], []>} : vector<64x4xbf16>, vector<4x8xbf16>, vector<64x8xf32> -> vector<64x8xf32>
    %8 = arith.addf %2, %7 : vector<64x8xf32>
    %9 = vector.extract_strided_slice %1 {offsets = [0, 9, 0], sizes = [8, 8, 4], strides = [1, 1, 1]} : vector<17x17x4xbf16> to vector<8x8x4xbf16>
    %10 = vector.shape_cast %9 : vector<8x8x4xbf16> to vector<64x4xbf16>
    %c1 = arith.constant 1 : index
    %c0_7 = arith.constant 0 : index
    %c0_8 = arith.constant 0 : index
    %11 = vector.load %arg2[%c1, %c0_7, %c0_8] : memref<9x4x8xbf16, #tpu.memory_space<vmem>>, vector<1x4x8xbf16>
    %12 = vector.shape_cast %11 : vector<1x4x8xbf16> to vector<4x8xbf16>
    %cst_9 = arith.constant dense<0.000000e+00> : vector<64x8xf32>
    %13 = tpu.matmul %10, %12, %cst_9 {dimension_numbers = #tpu.dot_dimension_numbers<[1], [0], [0], [1], [0, 0, 1, 1], [], []>} : vector<64x4xbf16>, vector<4x8xbf16>, vector<64x8xf32> -> vector<64x8xf32>
    %14 = arith.addf %8, %13 : vector<64x8xf32>
    %15 = vector.extract_strided_slice %1 {offsets = [0, 1, 0], sizes = [8, 8, 4], strides = [1, 1, 1]} : vector<17x17x4xbf16> to vector<8x8x4xbf16>
    %16 = vector.shape_cast %15 : vector<8x8x4xbf16> to vector<64x4xbf16>
    %c2 = arith.constant 2 : index
    %c0_10 = arith.constant 0 : index
    %c0_11 = arith.constant 0 : index
    %17 = vector.load %arg2[%c2, %c0_10, %c0_11] : memref<9x4x8xbf16, #tpu.memory_space<vmem>>, vector<1x4x8xbf16>
    %18 = vector.shape_cast %17 : vector<1x4x8xbf16> to vector<4x8xbf16>
    %cst_12 = arith.constant dense<0.000000e+00> : vector<64x8xf32>
    %19 = tpu.matmul %16, %18, %cst_12 {dimension_numbers = #tpu.dot_dimension_numbers<[1], [0], [0], [1], [0, 0, 1, 1], [], []>} : vector<64x4xbf16>, vector<4x8xbf16>, vector<64x8xf32> -> vector<64x8xf32>
    %20 = arith.addf %14, %19 : vector<64x8xf32>
    %21 = vector.extract_strided_slice %1 {offsets = [9, 0, 0], sizes = [8, 8, 4], strides = [1, 1, 1]} : vector<17x17x4xbf16> to vector<8x8x4xbf16>
    %22 = vector.shape_cast %21 : vector<8x8x4xbf16> to vector<64x4xbf16>
    %c3 = arith.constant 3 : index
    %c0_13 = arith.constant 0 : index
    %c0_14 = arith.constant 0 : index
    %23 = vector.load %arg2[%c3, %c0_13, %c0_14] : memref<9x4x8xbf16, #tpu.memory_space<vmem>>, vector<1x4x8xbf16>
    %24 = vector.shape_cast %23 : vector<1x4x8xbf16> to vector<4x8xbf16>
    %cst_15 = arith.constant dense<0.000000e+00> : vector<64x8xf32>
    %25 = tpu.matmul %22, %24, %cst_15 {dimension_numbers = #tpu.dot_dimension_numbers<[1], [0], [0], [1], [0, 0, 1, 1], [], []>} : vector<64x4xbf16>, vector<4x8xbf16>, vector<64x8xf32> -> vector<64x8xf32>
    %26 = arith.addf %20, %25 : vector<64x8xf32>
    %27 = vector.extract_strided_slice %1 {offsets = [9, 9, 0], sizes = [8, 8, 4], strides = [1, 1, 1]} : vector<17x17x4xbf16> to vector<8x8x4xbf16>
    %28 = vector.shape_cast %27 : vector<8x8x4xbf16> to vector<64x4xbf16>
    %c4 = arith.constant 4 : index
    %c0_16 = arith.constant 0 : index
    %c0_17 = arith.constant 0 : index
    %29 = vector.load %arg2[%c4, %c0_16, %c0_17] : memref<9x4x8xbf16, #tpu.memory_space<vmem>>, vector<1x4x8xbf16>
    %30 = vector.shape_cast %29 : vector<1x4x8xbf16> to vector<4x8xbf16>
    %cst_18 = arith.constant dense<0.000000e+00> : vector<64x8xf32>
    %31 = tpu.matmul %28, %30, %cst_18 {dimension_numbers = #tpu.dot_dimension_numbers<[1], [0], [0], [1], [0, 0, 1, 1], [], []>} : vector<64x4xbf16>, vector<4x8xbf16>, vector<64x8xf32> -> vector<64x8xf32>
    %32 = arith.addf %26, %31 : vector<64x8xf32>
    %33 = vector.extract_strided_slice %1 {offsets = [9, 1, 0], sizes = [8, 8, 4], strides = [1, 1, 1]} : vector<17x17x4xbf16> to vector<8x8x4xbf16>
    %34 = vector.shape_cast %33 : vector<8x8x4xbf16> to vector<64x4xbf16>
    %c5 = arith.constant 5 : index
    %c0_19 = arith.constant 0 : index
    %c0_20 = arith.constant 0 : index
    %35 = vector.load %arg2[%c5, %c0_19, %c0_20] : memref<9x4x8xbf16, #tpu.memory_space<vmem>>, vector<1x4x8xbf16>
    %36 = vector.shape_cast %35 : vector<1x4x8xbf16> to vector<4x8xbf16>
    %cst_21 = arith.constant dense<0.000000e+00> : vector<64x8xf32>
    %37 = tpu.matmul %34, %36, %cst_21 {dimension_numbers = #tpu.dot_dimension_numbers<[1], [0], [0], [1], [0, 0, 1, 1], [], []>} : vector<64x4xbf16>, vector<4x8xbf16>, vector<64x8xf32> -> vector<64x8xf32>
    %38 = arith.addf %32, %37 : vector<64x8xf32>
    %39 = vector.extract_strided_slice %1 {offsets = [1, 0, 0], sizes = [8, 8, 4], strides = [1, 1, 1]} : vector<17x17x4xbf16> to vector<8x8x4xbf16>
    %40 = vector.shape_cast %39 : vector<8x8x4xbf16> to vector<64x4xbf16>
    %c6 = arith.constant 6 : index
    %c0_22 = arith.constant 0 : index
    %c0_23 = arith.constant 0 : index
    %41 = vector.load %arg2[%c6, %c0_22, %c0_23] : memref<9x4x8xbf16, #tpu.memory_space<vmem>>, vector<1x4x8xbf16>
    %42 = vector.shape_cast %41 : vector<1x4x8xbf16> to vector<4x8xbf16>
    %cst_24 = arith.constant dense<0.000000e+00> : vector<64x8xf32>
    %43 = tpu.matmul %40, %42, %cst_24 {dimension_numbers = #tpu.dot_dimension_numbers<[1], [0], [0], [1], [0, 0, 1, 1], [], []>} : vector<64x4xbf16>, vector<4x8xbf16>, vector<64x8xf32> -> vector<64x8xf32>
    %44 = arith.addf %38, %43 : vector<64x8xf32>
    %45 = vector.extract_strided_slice %1 {offsets = [1, 9, 0], sizes = [8, 8, 4], strides = [1, 1, 1]} : vector<17x17x4xbf16> to vector<8x8x4xbf16>
    %46 = vector.shape_cast %45 : vector<8x8x4xbf16> to vector<64x4xbf16>
    %c7 = arith.constant 7 : index
    %c0_25 = arith.constant 0 : index
    %c0_26 = arith.constant 0 : index
    %47 = vector.load %arg2[%c7, %c0_25, %c0_26] : memref<9x4x8xbf16, #tpu.memory_space<vmem>>, vector<1x4x8xbf16>
    %48 = vector.shape_cast %47 : vector<1x4x8xbf16> to vector<4x8xbf16>
    %cst_27 = arith.constant dense<0.000000e+00> : vector<64x8xf32>
    %49 = tpu.matmul %46, %48, %cst_27 {dimension_numbers = #tpu.dot_dimension_numbers<[1], [0], [0], [1], [0, 0, 1, 1], [], []>} : vector<64x4xbf16>, vector<4x8xbf16>, vector<64x8xf32> -> vector<64x8xf32>
    %50 = arith.addf %44, %49 : vector<64x8xf32>
    %51 = vector.extract_strided_slice %1 {offsets = [1, 1, 0], sizes = [8, 8, 4], strides = [1, 1, 1]} : vector<17x17x4xbf16> to vector<8x8x4xbf16>
    %52 = vector.shape_cast %51 : vector<8x8x4xbf16> to vector<64x4xbf16>
    %c8 = arith.constant 8 : index
    %c0_28 = arith.constant 0 : index
    %c0_29 = arith.constant 0 : index
    %53 = vector.load %arg2[%c8, %c0_28, %c0_29] : memref<9x4x8xbf16, #tpu.memory_space<vmem>>, vector<1x4x8xbf16>
    %54 = vector.shape_cast %53 : vector<1x4x8xbf16> to vector<4x8xbf16>
    %cst_30 = arith.constant dense<0.000000e+00> : vector<64x8xf32>
    %55 = tpu.matmul %52, %54, %cst_30 {dimension_numbers = #tpu.dot_dimension_numbers<[1], [0], [0], [1], [0, 0, 1, 1], [], []>} : vector<64x4xbf16>, vector<4x8xbf16>, vector<64x8xf32> -> vector<64x8xf32>
    %56 = arith.addf %50, %55 : vector<64x8xf32>
    %57 = vector.shape_cast %56 : vector<64x8xf32> to vector<8x8x8xf32>
    %58 = arith.truncf %57 : vector<8x8x8xf32> to vector<8x8x8xbf16>
    %c0_31 = arith.constant 0 : index
    %c0_32 = arith.constant 0 : index
    %c0_33 = arith.constant 0 : index
    %c0_34 = arith.constant 0 : index
    %59 = vector.load %arg3[%c0_31, %c0_32, %c0_33, %c0_34] : memref<1x8x8x8xbf16, #tpu.memory_space<vmem>>, vector<1x8x8x8xbf16>
    %60 = vector.shape_cast %59 : vector<1x8x8x8xbf16> to vector<8x8x8xbf16>
    %61 = vector.shape_cast %58 : vector<8x8x8xbf16> to vector<1x8x8x8xbf16>
    tpu.vector_store %arg3[%c0_31, %c0_32, %c0_33, %c0_34], %61 {strides = array<i32>} : memref<1x8x8x8xbf16, #tpu.memory_space<vmem>>, vector<1x8x8x8xbf16>,
    %cst_35 = arith.constant dense<0.000000e+00> : vector<8xf32>
    %62 = vector.multi_reduction <add>, %56, %cst_35 [0] : vector<64x8xf32> to vector<8xf32>
    %63 = vector.shape_cast %62 : vector<8xf32> to vector<1x8xf32>
    %c0_36 = arith.constant 0 : index
    %c0_37 = arith.constant 0 : index
    %c0_38 = arith.constant 0 : index
    %64 = vector.load %arg4[%c0_36, %c0_37, %c0_38] : memref<1x1x8xf32, #tpu.memory_space<vmem>>, vector<1x1x8xf32>
    %65 = vector.shape_cast %64 : vector<1x1x8xf32> to vector<1x8xf32>
    %66 = vector.shape_cast %63 : vector<1x8xf32> to vector<1x1x8xf32>
    tpu.vector_store %arg4[%c0_36, %c0_37, %c0_38], %66 {strides = array<i32>} : memref<1x1x8xf32, #tpu.memory_space<vmem>>, vector<1x1x8xf32>,
    %67 = arith.mulf %56, %56 : vector<64x8xf32>
    %cst_39 = arith.constant dense<0.000000e+00> : vector<8xf32>
    %68 = vector.multi_reduction <add>, %67, %cst_39 [0] : vector<64x8xf32> to vector<8xf32>
    %69 = vector.shape_cast %68 : vector<8xf32> to vector<1x8xf32>
    %c0_40 = arith.constant 0 : index
    %c0_41 = arith.constant 0 : index
    %c0_42 = arith.constant 0 : index
    %70 = vector.load %arg5[%c0_40, %c0_41, %c0_42] : memref<1x1x8xf32, #tpu.memory_space<vmem>>, vector<1x1x8xf32>
    %71 = vector.shape_cast %70 : vector<1x1x8xf32> to vector<1x8xf32>
    %72 = vector.shape_cast %69 : vector<1x8xf32> to vector<1x1x8xf32>
    tpu.vector_store %arg5[%c0_40, %c0_41, %c0_42], %72 {strides = array<i32>} : memref<1x1x8xf32, #tpu.memory_space<vmem>>, vector<1x1x8xf32>,
    return
  }
  func.func @transform_0(%arg0: i32) -> (i32, i32, i32, i32) {
    %c0_i32 = arith.constant 0 : i32
    %c0_i32_0 = arith.constant 0 : i32
    %c0_i32_1 = arith.constant 0 : i32
    %c0_i32_2 = arith.constant 0 : i32
    return %arg0, %c0_i32, %c0_i32_0, %c0_i32_1 : i32, i32, i32, i32
  }
  func.func @transform_1(%arg0: i32) -> (i32, i32, i32) {
    %c0_i32 = arith.constant 0 : i32
    %c0_i32_0 = arith.constant 0 : i32
    %c0_i32_1 = arith.constant 0 : i32
    %c0_i32_2 = arith.constant 0 : i32
    return %c0_i32, %c0_i32_0, %c0_i32_1 : i32, i32, i32
  }
  func.func @transform_2(%arg0: i32) -> (i32, i32, i32, i32) {
    %c0_i32 = arith.constant 0 : i32
    %c0_i32_0 = arith.constant 0 : i32
    %c0_i32_1 = arith.constant 0 : i32
    %c0_i32_2 = arith.constant 0 : i32
    return %arg0, %c0_i32, %c0_i32_0, %c0_i32_1 : i32, i32, i32, i32
  }
  func.func @transform_3(%arg0: i32) -> (i32, i32, i32) {
    %c0_i32 = arith.constant 0 : i32
    %c0_i32_0 = arith.constant 0 : i32
    %c0_i32_1 = arith.constant 0 : i32
    return %arg0, %c0_i32, %c0_i32_0 : i32, i32, i32
  }
  func.func @transform_4(%arg0: i32) -> (i32, i32, i32) {
    %c0_i32 = arith.constant 0 : i32
    %c0_i32_0 = arith.constant 0 : i32
    %c0_i32_1 = arith.constant 0 : i32
    return %arg0, %c0_i32, %c0_i32_0 : i32, i32, i32
  }
}

module attributes {stable_mosaic.version = 11 : i64} {
  func.func @kernel(%arg0: i32, %arg1: memref<1x8x8x8xbf16, #tpu.memory_space<vmem>>, %arg2: memref<1x8xf32, #tpu.memory_space<vmem>>, %arg3: memref<1x8xf32, #tpu.memory_space<vmem>>, %arg4: memref<9x8x8xbf16, #tpu.memory_space<vmem>>, %arg5: memref<1x8x8x8xbf16, #tpu.memory_space<vmem>>, %arg6: memref<1x1x8xf32, #tpu.memory_space<vmem>>, %arg7: memref<1x1x8xf32, #tpu.memory_space<vmem>>) attributes {dimension_semantics = [#tpu.dimension_semantics<parallel>], iteration_bounds = array<i64: 2>, scalar_prefetch = 0 : i64, scratch_operands = 0 : i64, tpu.core_type = #tpu.core_type<tc>, window_params = [{transform_indices = @transform_0, window_bounds = array<i64: 1, 8, 8, 8>}, {pipeline_mode = #tpu.pipeline_mode<synchronous>, transform_indices = @transform_1, window_bounds = array<i64: 1, 8>}, {pipeline_mode = #tpu.pipeline_mode<synchronous>, transform_indices = @transform_2, window_bounds = array<i64: 1, 8>}, {pipeline_mode = #tpu.pipeline_mode<synchronous>, transform_indices = @transform_3, window_bounds = array<i64: 9, 8, 8>}, {transform_indices = @transform_4, window_bounds = array<i64: 1, 8, 8, 8>}, {transform_indices = @transform_5, window_bounds = array<i64: 1, 1, 8>}, {transform_indices = @transform_6, window_bounds = array<i64: 1, 1, 8>}]} {
    %c0 = arith.constant 0 : index
    %c0_0 = arith.constant 0 : index
    %c0_1 = arith.constant 0 : index
    %c0_2 = arith.constant 0 : index
    %0 = vector.load %arg1[%c0, %c0_0, %c0_1, %c0_2] : memref<1x8x8x8xbf16, #tpu.memory_space<vmem>>, vector<1x8x8x8xbf16>
    %1 = vector.shape_cast %0 : vector<1x8x8x8xbf16> to vector<8x8x8xbf16>
    %2 = arith.extf %1 : vector<8x8x8xbf16> to vector<8x8x8xf32>
    %c0_3 = arith.constant 0 : index
    %c0_4 = arith.constant 0 : index
    %3 = vector.load %arg2[%c0_3, %c0_4] : memref<1x8xf32, #tpu.memory_space<vmem>>, vector<1x8xf32>
    %4 = vector.shape_cast %3 : vector<1x8xf32> to vector<1x1x8xf32>
    %5 = vector.broadcast %4 : vector<1x1x8xf32> to vector<8x8x8xf32>
    %6 = arith.mulf %2, %5 : vector<8x8x8xf32>
    %c0_5 = arith.constant 0 : index
    %c0_6 = arith.constant 0 : index
    %7 = vector.load %arg3[%c0_5, %c0_6] : memref<1x8xf32, #tpu.memory_space<vmem>>, vector<1x8xf32>
    %8 = vector.shape_cast %7 : vector<1x8xf32> to vector<1x1x8xf32>
    %9 = vector.broadcast %8 : vector<1x1x8xf32> to vector<8x8x8xf32>
    %10 = arith.addf %6, %9 : vector<8x8x8xf32>
    %cst = arith.constant 0.000000e+00 : f32
    %11 = vector.broadcast %cst : f32 to vector<8x8x8xf32>
    %12 = arith.maximumf %10, %11 : vector<8x8x8xf32>
    %13 = arith.truncf %12 : vector<8x8x8xf32> to vector<8x8x8xbf16>
    %cst_7 = arith.constant 0.000000e+00 : bf16
    %14 = vector.broadcast %cst_7 : bf16 to vector<8x1x8xbf16>
    %15 = tpu.concatenate %14, %13, %14 in 1 : vector<8x1x8xbf16>, vector<8x8x8xbf16>, vector<8x1x8xbf16> -> vector<8x10x8xbf16>
    %cst_8 = arith.constant 0.000000e+00 : bf16
    %16 = vector.broadcast %cst_8 : bf16 to vector<1x10x8xbf16>
    %17 = tpu.concatenate %16, %15, %16 in 0 : vector<1x10x8xbf16>, vector<8x10x8xbf16>, vector<1x10x8xbf16> -> vector<10x10x8xbf16>
    %cst_9 = arith.constant 0.000000e+00 : f32
    %18 = vector.broadcast %cst_9 : f32 to vector<64x8xf32>
    %19 = vector.extract_strided_slice %17 {offsets = [0, 0, 0], sizes = [8, 8, 8], strides = [1, 1, 1]} : vector<10x10x8xbf16> to vector<8x8x8xbf16>
    %20 = vector.shape_cast %19 : vector<8x8x8xbf16> to vector<64x8xbf16>
    %c0_10 = arith.constant 0 : index
    %c0_11 = arith.constant 0 : index
    %c0_12 = arith.constant 0 : index
    %21 = vector.load %arg4[%c0_10, %c0_11, %c0_12] : memref<9x8x8xbf16, #tpu.memory_space<vmem>>, vector<1x8x8xbf16>
    %22 = vector.shape_cast %21 : vector<1x8x8xbf16> to vector<8x8xbf16>
    %cst_13 = arith.constant dense<0.000000e+00> : vector<64x8xf32>
    %23 = tpu.matmul %20, %22, %cst_13 {dimension_numbers = #tpu.dot_dimension_numbers<[1], [0], [0], [1], [0, 0, 1, 1], [], []>} : vector<64x8xbf16>, vector<8x8xbf16>, vector<64x8xf32> -> vector<64x8xf32>
    %24 = arith.addf %18, %23 : vector<64x8xf32>
    %25 = vector.extract_strided_slice %17 {offsets = [0, 1, 0], sizes = [8, 8, 8], strides = [1, 1, 1]} : vector<10x10x8xbf16> to vector<8x8x8xbf16>
    %26 = vector.shape_cast %25 : vector<8x8x8xbf16> to vector<64x8xbf16>
    %c1 = arith.constant 1 : index
    %c0_14 = arith.constant 0 : index
    %c0_15 = arith.constant 0 : index
    %27 = vector.load %arg4[%c1, %c0_14, %c0_15] : memref<9x8x8xbf16, #tpu.memory_space<vmem>>, vector<1x8x8xbf16>
    %28 = vector.shape_cast %27 : vector<1x8x8xbf16> to vector<8x8xbf16>
    %cst_16 = arith.constant dense<0.000000e+00> : vector<64x8xf32>
    %29 = tpu.matmul %26, %28, %cst_16 {dimension_numbers = #tpu.dot_dimension_numbers<[1], [0], [0], [1], [0, 0, 1, 1], [], []>} : vector<64x8xbf16>, vector<8x8xbf16>, vector<64x8xf32> -> vector<64x8xf32>
    %30 = arith.addf %24, %29 : vector<64x8xf32>
    %31 = vector.extract_strided_slice %17 {offsets = [0, 2, 0], sizes = [8, 8, 8], strides = [1, 1, 1]} : vector<10x10x8xbf16> to vector<8x8x8xbf16>
    %32 = vector.shape_cast %31 : vector<8x8x8xbf16> to vector<64x8xbf16>
    %c2 = arith.constant 2 : index
    %c0_17 = arith.constant 0 : index
    %c0_18 = arith.constant 0 : index
    %33 = vector.load %arg4[%c2, %c0_17, %c0_18] : memref<9x8x8xbf16, #tpu.memory_space<vmem>>, vector<1x8x8xbf16>
    %34 = vector.shape_cast %33 : vector<1x8x8xbf16> to vector<8x8xbf16>
    %cst_19 = arith.constant dense<0.000000e+00> : vector<64x8xf32>
    %35 = tpu.matmul %32, %34, %cst_19 {dimension_numbers = #tpu.dot_dimension_numbers<[1], [0], [0], [1], [0, 0, 1, 1], [], []>} : vector<64x8xbf16>, vector<8x8xbf16>, vector<64x8xf32> -> vector<64x8xf32>
    %36 = arith.addf %30, %35 : vector<64x8xf32>
    %37 = vector.extract_strided_slice %17 {offsets = [1, 0, 0], sizes = [8, 8, 8], strides = [1, 1, 1]} : vector<10x10x8xbf16> to vector<8x8x8xbf16>
    %38 = vector.shape_cast %37 : vector<8x8x8xbf16> to vector<64x8xbf16>
    %c3 = arith.constant 3 : index
    %c0_20 = arith.constant 0 : index
    %c0_21 = arith.constant 0 : index
    %39 = vector.load %arg4[%c3, %c0_20, %c0_21] : memref<9x8x8xbf16, #tpu.memory_space<vmem>>, vector<1x8x8xbf16>
    %40 = vector.shape_cast %39 : vector<1x8x8xbf16> to vector<8x8xbf16>
    %cst_22 = arith.constant dense<0.000000e+00> : vector<64x8xf32>
    %41 = tpu.matmul %38, %40, %cst_22 {dimension_numbers = #tpu.dot_dimension_numbers<[1], [0], [0], [1], [0, 0, 1, 1], [], []>} : vector<64x8xbf16>, vector<8x8xbf16>, vector<64x8xf32> -> vector<64x8xf32>
    %42 = arith.addf %36, %41 : vector<64x8xf32>
    %43 = vector.extract_strided_slice %17 {offsets = [1, 1, 0], sizes = [8, 8, 8], strides = [1, 1, 1]} : vector<10x10x8xbf16> to vector<8x8x8xbf16>
    %44 = vector.shape_cast %43 : vector<8x8x8xbf16> to vector<64x8xbf16>
    %c4 = arith.constant 4 : index
    %c0_23 = arith.constant 0 : index
    %c0_24 = arith.constant 0 : index
    %45 = vector.load %arg4[%c4, %c0_23, %c0_24] : memref<9x8x8xbf16, #tpu.memory_space<vmem>>, vector<1x8x8xbf16>
    %46 = vector.shape_cast %45 : vector<1x8x8xbf16> to vector<8x8xbf16>
    %cst_25 = arith.constant dense<0.000000e+00> : vector<64x8xf32>
    %47 = tpu.matmul %44, %46, %cst_25 {dimension_numbers = #tpu.dot_dimension_numbers<[1], [0], [0], [1], [0, 0, 1, 1], [], []>} : vector<64x8xbf16>, vector<8x8xbf16>, vector<64x8xf32> -> vector<64x8xf32>
    %48 = arith.addf %42, %47 : vector<64x8xf32>
    %49 = vector.extract_strided_slice %17 {offsets = [1, 2, 0], sizes = [8, 8, 8], strides = [1, 1, 1]} : vector<10x10x8xbf16> to vector<8x8x8xbf16>
    %50 = vector.shape_cast %49 : vector<8x8x8xbf16> to vector<64x8xbf16>
    %c5 = arith.constant 5 : index
    %c0_26 = arith.constant 0 : index
    %c0_27 = arith.constant 0 : index
    %51 = vector.load %arg4[%c5, %c0_26, %c0_27] : memref<9x8x8xbf16, #tpu.memory_space<vmem>>, vector<1x8x8xbf16>
    %52 = vector.shape_cast %51 : vector<1x8x8xbf16> to vector<8x8xbf16>
    %cst_28 = arith.constant dense<0.000000e+00> : vector<64x8xf32>
    %53 = tpu.matmul %50, %52, %cst_28 {dimension_numbers = #tpu.dot_dimension_numbers<[1], [0], [0], [1], [0, 0, 1, 1], [], []>} : vector<64x8xbf16>, vector<8x8xbf16>, vector<64x8xf32> -> vector<64x8xf32>
    %54 = arith.addf %48, %53 : vector<64x8xf32>
    %55 = vector.extract_strided_slice %17 {offsets = [2, 0, 0], sizes = [8, 8, 8], strides = [1, 1, 1]} : vector<10x10x8xbf16> to vector<8x8x8xbf16>
    %56 = vector.shape_cast %55 : vector<8x8x8xbf16> to vector<64x8xbf16>
    %c6 = arith.constant 6 : index
    %c0_29 = arith.constant 0 : index
    %c0_30 = arith.constant 0 : index
    %57 = vector.load %arg4[%c6, %c0_29, %c0_30] : memref<9x8x8xbf16, #tpu.memory_space<vmem>>, vector<1x8x8xbf16>
    %58 = vector.shape_cast %57 : vector<1x8x8xbf16> to vector<8x8xbf16>
    %cst_31 = arith.constant dense<0.000000e+00> : vector<64x8xf32>
    %59 = tpu.matmul %56, %58, %cst_31 {dimension_numbers = #tpu.dot_dimension_numbers<[1], [0], [0], [1], [0, 0, 1, 1], [], []>} : vector<64x8xbf16>, vector<8x8xbf16>, vector<64x8xf32> -> vector<64x8xf32>
    %60 = arith.addf %54, %59 : vector<64x8xf32>
    %61 = vector.extract_strided_slice %17 {offsets = [2, 1, 0], sizes = [8, 8, 8], strides = [1, 1, 1]} : vector<10x10x8xbf16> to vector<8x8x8xbf16>
    %62 = vector.shape_cast %61 : vector<8x8x8xbf16> to vector<64x8xbf16>
    %c7 = arith.constant 7 : index
    %c0_32 = arith.constant 0 : index
    %c0_33 = arith.constant 0 : index
    %63 = vector.load %arg4[%c7, %c0_32, %c0_33] : memref<9x8x8xbf16, #tpu.memory_space<vmem>>, vector<1x8x8xbf16>
    %64 = vector.shape_cast %63 : vector<1x8x8xbf16> to vector<8x8xbf16>
    %cst_34 = arith.constant dense<0.000000e+00> : vector<64x8xf32>
    %65 = tpu.matmul %62, %64, %cst_34 {dimension_numbers = #tpu.dot_dimension_numbers<[1], [0], [0], [1], [0, 0, 1, 1], [], []>} : vector<64x8xbf16>, vector<8x8xbf16>, vector<64x8xf32> -> vector<64x8xf32>
    %66 = arith.addf %60, %65 : vector<64x8xf32>
    %67 = vector.extract_strided_slice %17 {offsets = [2, 2, 0], sizes = [8, 8, 8], strides = [1, 1, 1]} : vector<10x10x8xbf16> to vector<8x8x8xbf16>
    %68 = vector.shape_cast %67 : vector<8x8x8xbf16> to vector<64x8xbf16>
    %c8 = arith.constant 8 : index
    %c0_35 = arith.constant 0 : index
    %c0_36 = arith.constant 0 : index
    %69 = vector.load %arg4[%c8, %c0_35, %c0_36] : memref<9x8x8xbf16, #tpu.memory_space<vmem>>, vector<1x8x8xbf16>
    %70 = vector.shape_cast %69 : vector<1x8x8xbf16> to vector<8x8xbf16>
    %cst_37 = arith.constant dense<0.000000e+00> : vector<64x8xf32>
    %71 = tpu.matmul %68, %70, %cst_37 {dimension_numbers = #tpu.dot_dimension_numbers<[1], [0], [0], [1], [0, 0, 1, 1], [], []>} : vector<64x8xbf16>, vector<8x8xbf16>, vector<64x8xf32> -> vector<64x8xf32>
    %72 = arith.addf %66, %71 : vector<64x8xf32>
    %73 = vector.shape_cast %72 : vector<64x8xf32> to vector<8x8x8xf32>
    %74 = arith.truncf %73 : vector<8x8x8xf32> to vector<8x8x8xbf16>
    %c0_38 = arith.constant 0 : index
    %c0_39 = arith.constant 0 : index
    %c0_40 = arith.constant 0 : index
    %c0_41 = arith.constant 0 : index
    %75 = vector.load %arg5[%c0_38, %c0_39, %c0_40, %c0_41] : memref<1x8x8x8xbf16, #tpu.memory_space<vmem>>, vector<1x8x8x8xbf16>
    %76 = vector.shape_cast %75 : vector<1x8x8x8xbf16> to vector<8x8x8xbf16>
    %77 = vector.shape_cast %74 : vector<8x8x8xbf16> to vector<1x8x8x8xbf16>
    tpu.vector_store %arg5[%c0_38, %c0_39, %c0_40, %c0_41], %77 {strides = array<i32>} : memref<1x8x8x8xbf16, #tpu.memory_space<vmem>>, vector<1x8x8x8xbf16>,
    %cst_42 = arith.constant dense<0.000000e+00> : vector<8xf32>
    %78 = vector.multi_reduction <add>, %72, %cst_42 [0] : vector<64x8xf32> to vector<8xf32>
    %79 = vector.shape_cast %78 : vector<8xf32> to vector<1x8xf32>
    %c0_43 = arith.constant 0 : index
    %c0_44 = arith.constant 0 : index
    %c0_45 = arith.constant 0 : index
    %80 = vector.load %arg6[%c0_43, %c0_44, %c0_45] : memref<1x1x8xf32, #tpu.memory_space<vmem>>, vector<1x1x8xf32>
    %81 = vector.shape_cast %80 : vector<1x1x8xf32> to vector<1x8xf32>
    %82 = vector.shape_cast %79 : vector<1x8xf32> to vector<1x1x8xf32>
    tpu.vector_store %arg6[%c0_43, %c0_44, %c0_45], %82 {strides = array<i32>} : memref<1x1x8xf32, #tpu.memory_space<vmem>>, vector<1x1x8xf32>,
    %83 = arith.mulf %72, %72 : vector<64x8xf32>
    %cst_46 = arith.constant dense<0.000000e+00> : vector<8xf32>
    %84 = vector.multi_reduction <add>, %83, %cst_46 [0] : vector<64x8xf32> to vector<8xf32>
    %85 = vector.shape_cast %84 : vector<8xf32> to vector<1x8xf32>
    %c0_47 = arith.constant 0 : index
    %c0_48 = arith.constant 0 : index
    %c0_49 = arith.constant 0 : index
    %86 = vector.load %arg7[%c0_47, %c0_48, %c0_49] : memref<1x1x8xf32, #tpu.memory_space<vmem>>, vector<1x1x8xf32>
    %87 = vector.shape_cast %86 : vector<1x1x8xf32> to vector<1x8xf32>
    %88 = vector.shape_cast %85 : vector<1x8xf32> to vector<1x1x8xf32>
    tpu.vector_store %arg7[%c0_47, %c0_48, %c0_49], %88 {strides = array<i32>} : memref<1x1x8xf32, #tpu.memory_space<vmem>>, vector<1x1x8xf32>,
    return
  }
  func.func @transform_0(%arg0: i32) -> (i32, i32, i32, i32) {
    %c0_i32 = arith.constant 0 : i32
    %c0_i32_0 = arith.constant 0 : i32
    %c0_i32_1 = arith.constant 0 : i32
    %c0_i32_2 = arith.constant 0 : i32
    return %arg0, %c0_i32, %c0_i32_0, %c0_i32_1 : i32, i32, i32, i32
  }
  func.func @transform_1(%arg0: i32) -> (i32, i32) {
    %c0_i32 = arith.constant 0 : i32
    %c0_i32_0 = arith.constant 0 : i32
    %c0_i32_1 = arith.constant 0 : i32
    return %c0_i32, %c0_i32_0 : i32, i32
  }
  func.func @transform_2(%arg0: i32) -> (i32, i32) {
    %c0_i32 = arith.constant 0 : i32
    %c0_i32_0 = arith.constant 0 : i32
    %c0_i32_1 = arith.constant 0 : i32
    return %c0_i32, %c0_i32_0 : i32, i32
  }
  func.func @transform_3(%arg0: i32) -> (i32, i32, i32) {
    %c0_i32 = arith.constant 0 : i32
    %c0_i32_0 = arith.constant 0 : i32
    %c0_i32_1 = arith.constant 0 : i32
    %c0_i32_2 = arith.constant 0 : i32
    return %c0_i32, %c0_i32_0, %c0_i32_1 : i32, i32, i32
  }
  func.func @transform_4(%arg0: i32) -> (i32, i32, i32, i32) {
    %c0_i32 = arith.constant 0 : i32
    %c0_i32_0 = arith.constant 0 : i32
    %c0_i32_1 = arith.constant 0 : i32
    %c0_i32_2 = arith.constant 0 : i32
    return %arg0, %c0_i32, %c0_i32_0, %c0_i32_1 : i32, i32, i32, i32
  }
  func.func @transform_5(%arg0: i32) -> (i32, i32, i32) {
    %c0_i32 = arith.constant 0 : i32
    %c0_i32_0 = arith.constant 0 : i32
    %c0_i32_1 = arith.constant 0 : i32
    return %arg0, %c0_i32, %c0_i32_0 : i32, i32, i32
  }
  func.func @transform_6(%arg0: i32) -> (i32, i32, i32) {
    %c0_i32 = arith.constant 0 : i32
    %c0_i32_0 = arith.constant 0 : i32
    %c0_i32_1 = arith.constant 0 : i32
    return %arg0, %c0_i32, %c0_i32_0 : i32, i32, i32
  }
}

module attributes {stable_mosaic.version = 11 : i64} {
  func.func @kernel(%arg0: i32, %arg1: memref<1x8x8x8xbf16, #tpu.memory_space<vmem>>, %arg2: memref<1x8xf32, #tpu.memory_space<vmem>>, %arg3: memref<1x8xf32, #tpu.memory_space<vmem>>, %arg4: memref<1x8x8x4xbf16, #tpu.memory_space<vmem>>, %arg5: memref<4x8xbf16, #tpu.memory_space<vmem>>, %arg6: memref<1x8xf32, #tpu.memory_space<vmem>>, %arg7: memref<1x8xf32, #tpu.memory_space<vmem>>, %arg8: memref<1x8x8x8xf32, #tpu.memory_space<vmem>>) attributes {dimension_semantics = [#tpu.dimension_semantics<parallel>], iteration_bounds = array<i64: 2>, scalar_prefetch = 0 : i64, scratch_operands = 0 : i64, tpu.core_type = #tpu.core_type<tc>, window_params = [{transform_indices = @transform_0, window_bounds = array<i64: 1, 8, 8, 8>}, {pipeline_mode = #tpu.pipeline_mode<synchronous>, transform_indices = @transform_1, window_bounds = array<i64: 1, 8>}, {pipeline_mode = #tpu.pipeline_mode<synchronous>, transform_indices = @transform_2, window_bounds = array<i64: 1, 8>}, {transform_indices = @transform_3, window_bounds = array<i64: 1, 8, 8, 4>}, {pipeline_mode = #tpu.pipeline_mode<synchronous>, transform_indices = @transform_4, window_bounds = array<i64: 4, 8>}, {pipeline_mode = #tpu.pipeline_mode<synchronous>, transform_indices = @transform_5, window_bounds = array<i64: 1, 8>}, {pipeline_mode = #tpu.pipeline_mode<synchronous>, transform_indices = @transform_6, window_bounds = array<i64: 1, 8>}, {transform_indices = @transform_7, window_bounds = array<i64: 1, 8, 8, 8>}]} {
    %c0 = arith.constant 0 : index
    %c0_0 = arith.constant 0 : index
    %c0_1 = arith.constant 0 : index
    %c0_2 = arith.constant 0 : index
    %0 = vector.load %arg1[%c0, %c0_0, %c0_1, %c0_2] : memref<1x8x8x8xbf16, #tpu.memory_space<vmem>>, vector<1x8x8x8xbf16>
    %1 = vector.shape_cast %0 : vector<1x8x8x8xbf16> to vector<8x8x8xbf16>
    %2 = arith.extf %1 : vector<8x8x8xbf16> to vector<8x8x8xf32>
    %c0_3 = arith.constant 0 : index
    %c0_4 = arith.constant 0 : index
    %3 = vector.load %arg2[%c0_3, %c0_4] : memref<1x8xf32, #tpu.memory_space<vmem>>, vector<1x8xf32>
    %4 = vector.shape_cast %3 : vector<1x8xf32> to vector<1x1x8xf32>
    %5 = vector.broadcast %4 : vector<1x1x8xf32> to vector<8x8x8xf32>
    %6 = arith.mulf %2, %5 : vector<8x8x8xf32>
    %c0_5 = arith.constant 0 : index
    %c0_6 = arith.constant 0 : index
    %7 = vector.load %arg3[%c0_5, %c0_6] : memref<1x8xf32, #tpu.memory_space<vmem>>, vector<1x8xf32>
    %8 = vector.shape_cast %7 : vector<1x8xf32> to vector<1x1x8xf32>
    %9 = vector.broadcast %8 : vector<1x1x8xf32> to vector<8x8x8xf32>
    %10 = arith.addf %6, %9 : vector<8x8x8xf32>
    %c0_7 = arith.constant 0 : index
    %c0_8 = arith.constant 0 : index
    %c0_9 = arith.constant 0 : index
    %c0_10 = arith.constant 0 : index
    %11 = vector.load %arg4[%c0_7, %c0_8, %c0_9, %c0_10] : memref<1x8x8x4xbf16, #tpu.memory_space<vmem>>, vector<1x8x8x4xbf16>
    %12 = vector.shape_cast %11 : vector<1x8x8x4xbf16> to vector<8x8x4xbf16>
    %13 = vector.shape_cast %12 : vector<8x8x4xbf16> to vector<64x4xbf16>
    %c0_11 = arith.constant 0 : index
    %c0_12 = arith.constant 0 : index
    %14 = vector.load %arg5[%c0_11, %c0_12] : memref<4x8xbf16, #tpu.memory_space<vmem>>, vector<4x8xbf16>
    %cst = arith.constant dense<0.000000e+00> : vector<64x8xf32>
    %15 = tpu.matmul %13, %14, %cst {dimension_numbers = #tpu.dot_dimension_numbers<[1], [0], [0], [1], [0, 0, 1, 1], [], []>} : vector<64x4xbf16>, vector<4x8xbf16>, vector<64x8xf32> -> vector<64x8xf32>
    %16 = vector.shape_cast %15 : vector<64x8xf32> to vector<8x8x8xf32>
    %c0_13 = arith.constant 0 : index
    %c0_14 = arith.constant 0 : index
    %17 = vector.load %arg6[%c0_13, %c0_14] : memref<1x8xf32, #tpu.memory_space<vmem>>, vector<1x8xf32>
    %18 = vector.shape_cast %17 : vector<1x8xf32> to vector<1x1x8xf32>
    %19 = vector.broadcast %18 : vector<1x1x8xf32> to vector<8x8x8xf32>
    %20 = arith.mulf %16, %19 : vector<8x8x8xf32>
    %c0_15 = arith.constant 0 : index
    %c0_16 = arith.constant 0 : index
    %21 = vector.load %arg7[%c0_15, %c0_16] : memref<1x8xf32, #tpu.memory_space<vmem>>, vector<1x8xf32>
    %22 = vector.shape_cast %21 : vector<1x8xf32> to vector<1x1x8xf32>
    %23 = vector.broadcast %22 : vector<1x1x8xf32> to vector<8x8x8xf32>
    %24 = arith.addf %20, %23 : vector<8x8x8xf32>
    %25 = arith.addf %10, %24 : vector<8x8x8xf32>
    %cst_17 = arith.constant 0.000000e+00 : f32
    %26 = vector.broadcast %cst_17 : f32 to vector<8x8x8xf32>
    %27 = arith.maximumf %25, %26 : vector<8x8x8xf32>
    %c0_18 = arith.constant 0 : index
    %c0_19 = arith.constant 0 : index
    %c0_20 = arith.constant 0 : index
    %c0_21 = arith.constant 0 : index
    %28 = vector.load %arg8[%c0_18, %c0_19, %c0_20, %c0_21] : memref<1x8x8x8xf32, #tpu.memory_space<vmem>>, vector<1x8x8x8xf32>
    %29 = vector.shape_cast %28 : vector<1x8x8x8xf32> to vector<8x8x8xf32>
    %30 = vector.shape_cast %27 : vector<8x8x8xf32> to vector<1x8x8x8xf32>
    tpu.vector_store %arg8[%c0_18, %c0_19, %c0_20, %c0_21], %30 {strides = array<i32>} : memref<1x8x8x8xf32, #tpu.memory_space<vmem>>, vector<1x8x8x8xf32>,
    return
  }
  func.func @transform_0(%arg0: i32) -> (i32, i32, i32, i32) {
    %c0_i32 = arith.constant 0 : i32
    %c0_i32_0 = arith.constant 0 : i32
    %c0_i32_1 = arith.constant 0 : i32
    %c0_i32_2 = arith.constant 0 : i32
    return %arg0, %c0_i32, %c0_i32_0, %c0_i32_1 : i32, i32, i32, i32
  }
  func.func @transform_1(%arg0: i32) -> (i32, i32) {
    %c0_i32 = arith.constant 0 : i32
    %c0_i32_0 = arith.constant 0 : i32
    %c0_i32_1 = arith.constant 0 : i32
    return %c0_i32, %c0_i32_0 : i32, i32
  }
  func.func @transform_2(%arg0: i32) -> (i32, i32) {
    %c0_i32 = arith.constant 0 : i32
    %c0_i32_0 = arith.constant 0 : i32
    %c0_i32_1 = arith.constant 0 : i32
    return %c0_i32, %c0_i32_0 : i32, i32
  }
  func.func @transform_3(%arg0: i32) -> (i32, i32, i32, i32) {
    %c0_i32 = arith.constant 0 : i32
    %c0_i32_0 = arith.constant 0 : i32
    %c0_i32_1 = arith.constant 0 : i32
    %c0_i32_2 = arith.constant 0 : i32
    return %arg0, %c0_i32, %c0_i32_0, %c0_i32_1 : i32, i32, i32, i32
  }
  func.func @transform_4(%arg0: i32) -> (i32, i32) {
    %c0_i32 = arith.constant 0 : i32
    %c0_i32_0 = arith.constant 0 : i32
    %c0_i32_1 = arith.constant 0 : i32
    return %c0_i32, %c0_i32_0 : i32, i32
  }
  func.func @transform_5(%arg0: i32) -> (i32, i32) {
    %c0_i32 = arith.constant 0 : i32
    %c0_i32_0 = arith.constant 0 : i32
    %c0_i32_1 = arith.constant 0 : i32
    return %c0_i32, %c0_i32_0 : i32, i32
  }
  func.func @transform_6(%arg0: i32) -> (i32, i32) {
    %c0_i32 = arith.constant 0 : i32
    %c0_i32_0 = arith.constant 0 : i32
    %c0_i32_1 = arith.constant 0 : i32
    return %c0_i32, %c0_i32_0 : i32, i32
  }
  func.func @transform_7(%arg0: i32) -> (i32, i32, i32, i32) {
    %c0_i32 = arith.constant 0 : i32
    %c0_i32_0 = arith.constant 0 : i32
    %c0_i32_1 = arith.constant 0 : i32
    %c0_i32_2 = arith.constant 0 : i32
    return %arg0, %c0_i32, %c0_i32_0, %c0_i32_1 : i32, i32, i32, i32
  }
}

</mosaic_0001>

<llo_original>
// kernel: residual_block_pallas.6
$region0: #{residual_block_pallas.6}
  #allocation0 [shape = 'u32[]', space=smem, size = 0x4, offset = 0x4, fixed_abs, tag = 'smem constant byte address 0x4 - core index']
  #allocation1 [shape = 'u32[144,128]{1,0:T(1,128)}', space=vmem, size = 0x12000, scoped, tag = 'internal scratch']
  %s0 = inlined_call_operand.vmem [shape: bf16[2,8,8,4], index: 0, kind: input, shape index: {}]
  %s1 = inlined_call_operand.vmem [shape: bf16[4,8], index: 1, kind: input, shape index: {}]
  %s2 = inlined_call_operand.vmem [shape: f32[2,1,8], index: 2, kind: output, shape index: {0}]
  %s3 = inlined_call_operand.vmem [shape: f32[2,1,8], index: 3, kind: output, shape index: {1}]
  %4 = xla_tuple %s2, %s3
  %s5 = sld [smem:[#allocation0]]
  $region49: #{residual_block_pallas.6} parent=0
    _
  %s7 = ssub.s32 1, %s5
  %s8 = scalar_select 0, %s7, %s5
  loop: start=0, step=1, limit=4
  $region2: #{residual_block_pallas.6} parent=0 // loop_pre_header
    _
  $region3: #{residual_block_pallas.6} parent=0 // loop_header
    %s10 = sphi 0, %s14
    %p11 = scmp.ge.s32.totalorder %s10, 4
    %s20 = sphi 0, %s22
    %s23 = sphi 0, %s20
    %s24 = sphi 0, %s23
    %s40 = sphi 0, %s24
    %s44 = sphi 0, %s44
    %s46 = sphi 0, %s44
    %s47 = sphi 0, %s46
    %s61 = sphi 0, %s47
    %s67 = sphi 0, %s69
    %s70 = sphi 0, %s67
    %s71 = sphi 0, %s70
    %s87 = sphi 0, %s71
    %s93 = sphi 0, %s95
    %s96 = sphi 0, %s93
    %s97 = sphi 0, %s96
    %s113 = sphi 0, %s97
  $region4: #{residual_block_pallas.6} parent=0 // loop_header_branch
    %13 = sbr.rel (%p11) target = $region8
  $region5: #{residual_block_pallas.6} parent=0 // loop_body
    %s15 = ssub.s32 %s10, 1
    %s16 = ssub.s32 %s10, 2
    %s17 = sadd.s32 %s10, 1
    %s18 = ssub.s32 %s10, %s17
    %p19 = scmp.eq.s32.totalorder %s18, 0
    %s21 = sadd.s32 %s20, 1
    %s22 = scalar_select %p19, %s20, %s21
    %p25 = pneg %p19
    %p26 = scmp.eq.s32.totalorder %s10, 1
    %p27 = por %p25, %p26
    %p28 = scmp.ne.s32.totalorder %s20, %s23
    %p29 = scmp.eq.s32.totalorder %s10, 0
    %p30 = por %p28, %p29
    %p31 = scmp.ne.s32.totalorder %s20, %s23
    %p32 = scmp.eq.s32.totalorder %s15, 1
    %p33 = por %p31, %p32
    %p34 = scmp.ne.s32.totalorder %s23, %s24
    %p35 = scmp.eq.s32.totalorder %s15, 0
    %p36 = por %p34, %p35
    %p37 = scmp.ne.s32.totalorder %s23, %s24
    %p38 = scmp.eq.s32.totalorder %s16, 1
    %p39 = por %p37, %p38
    %p41 = scmp.ne.s32.totalorder %s24, %s40
    %p42 = scmp.eq.s32.totalorder %s16, 0
    %p43 = por %p41, %p42
    %s45 = sadd.s32 %s44, 1
    %p48 = scmp.eq.s32.totalorder %s10, 1
    %p49 = scmp.ne.s32.totalorder %s44, %s46
    %p50 = scmp.eq.s32.totalorder %s10, 0
    %p51 = por %p49, %p50
    %p52 = scmp.ne.s32.totalorder %s44, %s46
    %p53 = scmp.eq.s32.totalorder %s15, 1
    %p54 = por %p52, %p53
    %p55 = scmp.ne.s32.totalorder %s46, %s47
    %p56 = scmp.eq.s32.totalorder %s15, 0
    %p57 = por %p55, %p56
    %p58 = scmp.ne.s32.totalorder %s46, %s47
    %p59 = scmp.eq.s32.totalorder %s16, 1
    %p60 = por %p58, %p59
    %p62 = scmp.ne.s32.totalorder %s47, %s61
    %p63 = scmp.eq.s32.totalorder %s16, 0
    %p64 = por %p62, %p63
    %s65 = ssub.s32 %s10, %s17
    %p66 = scmp.eq.s32.totalorder %s65, 0
    %s68 = sadd.s32 %s67, 1
    %s69 = scalar_select %p66, %s67, %s68
    %p72 = pneg %p66
    %p73 = scmp.eq.s32.totalorder %s10, 1
    %p74 = por %p72, %p73
    %p75 = scmp.ne.s32.totalorder %s67, %s70
    %p76 = scmp.eq.s32.totalorder %s10, 0
    %p77 = por %p75, %p76
    %p78 = scmp.ne.s32.totalorder %s67, %s70
    %p79 = scmp.eq.s32.totalorder %s15, 1
    %p80 = por %p78, %p79
    %p81 = scmp.ne.s32.totalorder %s70, %s71
    %p82 = scmp.eq.s32.totalorder %s15, 0
    %p83 = por %p81, %p82
    %p84 = scmp.ne.s32.totalorder %s70, %s71
    %p85 = scmp.eq.s32.totalorder %s16, 1
    %p86 = por %p84, %p85
    %p88 = scmp.ne.s32.totalorder %s71, %s87
    %p89 = scmp.eq.s32.totalorder %s16, 0
    %p90 = por %p88, %p89
    %s91 = ssub.s32 %s10, %s17
    %p92 = scmp.eq.s32.totalorder %s91, 0
    %s94 = sadd.s32 %s93, 1
    %s95 = scalar_select %p92, %s93, %s94
    %p98 = pneg %p92
    %p99 = scmp.eq.s32.totalorder %s10, 1
    %p100 = por %p98, %p99
    %p101 = scmp.ne.s32.totalorder %s93, %s96
    %p102 = scmp.eq.s32.totalorder %s10, 0
    %p103 = por %p101, %p102
    %p104 = scmp.ne.s32.totalorder %s93, %s96
    %p105 = scmp.eq.s32.totalorder %s15, 1
    %p106 = por %p104, %p105
    %p107 = scmp.ne.s32.totalorder %s96, %s97
    %p108 = scmp.eq.s32.totalorder %s15, 0
    %p109 = por %p107, %p108
    %p110 = scmp.ne.s32.totalorder %s96, %s97
    %p111 = scmp.eq.s32.totalorder %s16, 1
    %p112 = por %p110, %p111
    %p114 = scmp.ne.s32.totalorder %s97, %s113
    %p115 = scmp.eq.s32.totalorder %s16, 0
    %p116 = por %p114, %p115
    %p117 = scmp.le.s32.totalorder 1, %s10
    %p118 = scmp.lt.s32.totalorder %s10, 3
    %p119 = pnand %p117, %p118
    %p120 = pneg %p119
    // Predicated region
    $region9: #{residual_block_pallas.6} parent=5 // pred_check
      _
    $region10: #{residual_block_pallas.6} parent=5 // pred_check_branch
      %122 = sbr.rel (%p119) target = $region12
    $region11: #{residual_block_pallas.6} parent=5 // pred_region
      %s123 = ssub.s32 %s10, 1
      // Predicated region
      $region13: #{residual_block_pallas.6} parent=11 // pred_check
        %p124 = pneg %p57
      $region14: #{residual_block_pallas.6} parent=11 // pred_check_branch
        %126 = sbr.rel (%p124) target = $region16
      $region15: #{residual_block_pallas.6} parent=11 // pred_region
        _
      $region16: #{residual_block_pallas.6} parent=11 // pred_fallthru
        _
    $region12: #{residual_block_pallas.6} parent=5 // pred_fallthru
      _
    %p127 = scmp.lt.s32.totalorder %s10, 2
    // Predicated region
    $region17: #{residual_block_pallas.6} parent=5 // pred_check
      %p128 = pneg %p127
    $region18: #{residual_block_pallas.6} parent=5 // pred_check_branch
      %130 = sbr.rel (%p128) target = $region20
    $region19: #{residual_block_pallas.6} parent=5 // pred_region
      // Predicated region
      $region21: #{residual_block_pallas.6} parent=19 // pred_check
        %p131 = pneg %p30
      $region22: #{residual_block_pallas.6} parent=19 // pred_check_branch
        %133 = sbr.rel (%p131) target = $region24
      $region23: #{residual_block_pallas.6} parent=19 // pred_region
        %p134 = scmp.lt.s32.totalorder %s10, 1
        %s135 = scalar_select %p134, %s10, 1
        %s136 = smul.addr %s135, 8
        %s137 = smul.addr %s136, 4
        %s138 = scalar_lea.vmem %s0, %s137
      $region24: #{residual_block_pallas.6} parent=19 // pred_fallthru
        _
    $region20: #{residual_block_pallas.6} parent=5 // pred_fallthru
      _
    %p139 = scmp.le.s32.totalorder 1, %s10
    %p140 = scmp.lt.s32.totalorder %s10, 3
    %p141 = pnand %p139, %p140
    %p142 = pneg %p141
    // Predicated region
    $region25: #{residual_block_pallas.6} parent=5 // pred_check
      _
    $region26: #{residual_block_pallas.6} parent=5 // pred_check_branch
      %144 = sbr.rel (%p141) target = $region28
    $region27: #{residual_block_pallas.6} parent=5 // pred_region
      %s145 = ssub.s32 %s10, 1
      %p146 = scmp.lt.s32.totalorder %s15, 1
      %s147 = scalar_select %p146, %s15, 1
      %s148 = smul.addr %s147, 8
      %s149 = smul.addr %s148, 4
      %s150 = scalar_lea.vmem %s0, %s149
      %p151 = pneg %p36
      %p152 = pneg %p33
      %p153 = pneg %p57
      %p154 = pneg %p54
      %p155 = pneg %p83
      %p156 = pneg %p80
      %p157 = scmp.lt.s32.totalorder %s15, 1
      %s158 = scalar_select %p157, %s15, 1
      %s159 = scalar_lea.vmem %s2, %s158
      %p160 = pneg %p109
      %p161 = pneg %p106
      %p162 = scmp.lt.s32.totalorder %s15, 1
      %s163 = scalar_select %p162, %s15, 1
      %s164 = scalar_lea.vmem %s3, %s163
      %p165 = scmp.lt.s32.totalorder %s15, 1
      %s166 = scalar_select %p165, %s15, 1
      %s167 = smul.addr %s166, 8
      %s168 = smul.addr %s167, 4
      %s169 = scalar_lea.vmem %s0, %s168
      %p170 = scmp.lt.s32.totalorder %s15, 1
      %s171 = scalar_select %p170, %s15, 1
      %s172 = scalar_lea.vmem %s2, %s171
      %p173 = scmp.lt.s32.totalorder %s15, 1
      %s174 = scalar_select %p173, %s15, 1
      %s175 = scalar_lea.vmem %s3, %s174
      %v177 = vld [vmem:[%s169] sm:$0xf]
      %v178 = vld [vmem:[%s169 + $0x4] sm:$0xf]
      %v179 = vld [vmem:[%s169 + $0x8] sm:$0xf]
      %v180 = vld [vmem:[%s169 + $0xc] sm:$0xf]
      %v181 = vld [vmem:[%s169 + $0x10] sm:$0xf]
      %v182 = vld [vmem:[%s169 + $0x14] sm:$0xf]
      %v183 = vld [vmem:[%s169 + $0x18] sm:$0xf]
      %v184 = vld [vmem:[%s169 + $0x1c] sm:$0xf]
      %v185 = vld [vmem:[%s1] sm:$0x3]
      %v194 = vunpack.c.l.b16 %v177
      %v195 = vunpack.c.l.b16 %v178
      %v196 = vunpack.c.l.b16 %v179
      %v197 = vunpack.c.l.b16 %v180
      %v198 = vunpack.c.l.b16 %v181
      %v199 = vunpack.c.l.b16 %v182
      %v200 = vunpack.c.l.b16 %v183
      %v201 = vunpack.c.l.b16 %v184
      %v202 = vpack.c.b16 %v195, %v194
      %v203 = vpack.c.b16 %v197, %v196
      %v204 = vpack.c.b16 %v199, %v198
      %v205 = vpack.c.b16 %v201, %v200
      %vm206 = vcmask 31744
      %v208 = vsel %vm206, %v202, 0
      %v211 = vsel %vm206, %v203, 0
      %v214 = vsel %vm206, %v204, 0
      %v217 = vsel %vm206, %v205, 0
      %vm219 = vcmask 1041408
      %v221 = vsel %vm219, %v185, 0
      %223 = vmatprep.subr.bf16.mxu0 0
      %224 = vmatpush1.bf16.msra.mxu0 %v221
      %225 = vmatprep.subr.bf16.mxu0 0
      %226 = vmatpush1.bf16.msra.mxu0 0
      %227 = vmatprep.subr.bf16.mxu0 0
      %228 = vmatpush1.bf16.msra.mxu0 0
      %229 = vmatprep.subr.bf16.mxu0 0
      %230 = vmatpush1.bf16.msra.mxu0 0
      %231 = vmatprep.subr.bf16.mxu0 0
      %232 = vmatpush1.bf16.msra.mxu0 0
      %233 = vmatprep.subr.bf16.mxu0 0
      %234 = vmatpush1.bf16.msra.mxu0 0
      %235 = vmatprep.subr.bf16.mxu0 0
      %236 = vmatpush1.bf16.msra.mxu0 0
      %237 = vmatprep.subr.bf16.mxu0 0
      %238 = vmatpush1.bf16.msra.mxu0 0
      %239 = vmatprep.subr.bf16.mxu0 0
      %240 = vmatpush1.bf16.msra.mxu0 0
      %241 = vmatprep.subr.bf16.mxu0 0
      %242 = vmatpush1.bf16.msra.mxu0 0
      %243 = vmatprep.subr.bf16.mxu0 0
      %244 = vmatpush1.bf16.msra.mxu0 0
      %245 = vmatprep.subr.bf16.mxu0 0
      %246 = vmatpush1.bf16.msra.mxu0 0
      %247 = vmatprep.subr.bf16.mxu0 0
      %248 = vmatpush1.bf16.msra.mxu0 0
      %249 = vmatprep.subr.bf16.mxu0 0
      %250 = vmatpush1.bf16.msra.mxu0 0
      %251 = vmatprep.subr.bf16.mxu0 0
      %252 = vmatpush1.bf16.msra.mxu0 0
      %253 = vmatprep.subr.bf16.mxu0 0
      %254 = vmatpush1.bf16.msra.mxu0 0
      %255 = vmatprep.mubr.bf16.mxu0 0
      %256 = vmatmul.mubr.bf16.gmra.mrb[0].mxu0 %v208
      %v257 = vpop.f32.mrb[0].mxu0
      %v258 = vadd.f32 0.0, %v257
      %v259 = vpop.f32.mrb[0].mxu0
      %v260 = vpop.f32.mrb[0].mxu0
      %v261 = vadd.f32 0.0, %v260
      %v262 = vpop.f32.mrb[0].mxu0
      %263 = vmatprep.mubr.bf16.mxu0 0
      %264 = vmatmul.mubr.bf16.gmra.mrb[0].mxu0 %v211
      %v265 = vpop.f32.mrb[0].mxu0
      %v266 = vadd.f32 0.0, %v265
      %v267 = vpop.f32.mrb[0].mxu0
      %v268 = vpop.f32.mrb[0].mxu0
      %v269 = vadd.f32 0.0, %v268
      %v270 = vpop.f32.mrb[0].mxu0
      %271 = vmatprep.mubr.bf16.mxu0 0
      %272 = vmatmul.mubr.bf16.gmra.mrb[0].mxu0 %v214
      %v273 = vpop.f32.mrb[0].mxu0
      %v274 = vadd.f32 0.0, %v273
      %v275 = vpop.f32.mrb[0].mxu0
      %v276 = vpop.f32.mrb[0].mxu0
      %v277 = vadd.f32 0.0, %v276
      %v278 = vpop.f32.mrb[0].mxu0
      %279 = vmatprep.mubr.bf16.mxu0 0
      %280 = vmatmul.mubr.bf16.gmra.mrb[0].mxu0 %v217
      %v281 = vpop.f32.mrb[0].mxu0
      %v282 = vadd.f32 0.0, %v281
      %v283 = vpop.f32.mrb[0].mxu0
      %v284 = vpop.f32.mrb[0].mxu0
      %v285 = vadd.f32 0.0, %v284
      %v286 = vpop.f32.mrb[0].mxu0
      %287 = vdwg.mxu0
      %vm288 = vcmask 64512
      %v289 = vsel %vm288, %v258, 0.0
      %v290 = vsel %vm288, %v261, 0.0
      %v291 = vadd.f32 %v289, %v290
      %v292 = vsel %vm288, %v266, 0.0
      %v293 = vadd.f32 %v291, %v292
      %v294 = vsel %vm288, %v269, 0.0
      %v295 = vadd.f32 %v293, %v294
      %v296 = vsel %vm288, %v274, 0.0
      %v297 = vadd.f32 %v295, %v296
      %v298 = vsel %vm288, %v277, 0.0
      %v299 = vadd.f32 %v297, %v298
      %v300 = vsel %vm288, %v282, 0.0
      %v301 = vadd.f32 %v299, %v300
      %v302 = vsel %vm288, %v285, 0.0
      %v303 = vadd.f32 %v301, %v302
      %v304 = vrot.slane %v303, 4
      %v305 = vadd.f32 %v303, %v304
      %v306 = vrot.slane %v305, 2
      %v307 = vadd.f32 %v305, %v306
      %v308 = vrot.slane %v307, 1
      %v309 = vadd.f32 %v307, %v308
      %vm310 = vcmask 57344
      %311 = vst.msk [vmem:[%s172] sm:$0x1] %vm310, %v309
      %v312 = vmul.f32 %v258, %v258
      %v313 = vmul.f32 %v261, %v261
      %v314 = vmul.f32 %v266, %v266
      %v315 = vmul.f32 %v269, %v269
      %v316 = vmul.f32 %v274, %v274
      %v317 = vmul.f32 %v277, %v277
      %v318 = vmul.f32 %v282, %v282
      %v319 = vmul.f32 %v285, %v285
      %v320 = vsel %vm288, %v312, 0.0
      %v321 = vsel %vm288, %v313, 0.0
      %v322 = vadd.f32 %v320, %v321
      %v323 = vsel %vm288, %v314, 0.0
      %v324 = vadd.f32 %v322, %v323
      %v325 = vsel %vm288, %v315, 0.0
      %v326 = vadd.f32 %v324, %v325
      %v327 = vsel %vm288, %v316, 0.0
      %v328 = vadd.f32 %v326, %v327
      %v329 = vsel %vm288, %v317, 0.0
      %v330 = vadd.f32 %v328, %v329
      %v331 = vsel %vm288, %v318, 0.0
      %v332 = vadd.f32 %v330, %v331
      %v333 = vsel %vm288, %v319, 0.0
      %v334 = vadd.f32 %v332, %v333
      %v335 = vrot.slane %v334, 4
      %v336 = vadd.f32 %v334, %v335
      %v337 = vrot.slane %v336, 2
      %v338 = vadd.f32 %v336, %v337
      %v339 = vrot.slane %v338, 1
      %v340 = vadd.f32 %v338, %v339
      %341 = vst.msk [vmem:[%s175] sm:$0x1] %vm310, %v340
      %p342 = scmp.lt.s32.totalorder %s15, 1
      %s343 = scalar_select %p342, %s15, 1
      %s344 = scalar_lea.vmem %s2, %s343
      %p345 = scmp.lt.s32.totalorder %s15, 1
      %s346 = scalar_select %p345, %s15, 1
      %s347 = scalar_lea.vmem %s3, %s346
      // Predicated region
      $region29: #{residual_block_pallas.6} parent=27 // pred_check
        %p348 = pneg %p80
      $region30: #{residual_block_pallas.6} parent=27 // pred_check_branch
        %350 = sbr.rel (%p348) target = $region32
      $region31: #{residual_block_pallas.6} parent=27 // pred_region
        _
      $region32: #{residual_block_pallas.6} parent=27 // pred_fallthru
        _
      // Predicated region
      $region33: #{residual_block_pallas.6} parent=27 // pred_check
        %p351 = pneg %p106
      $region34: #{residual_block_pallas.6} parent=27 // pred_check_branch
        %353 = sbr.rel (%p351) target = $region36
      $region35: #{residual_block_pallas.6} parent=27 // pred_region
        _
      $region36: #{residual_block_pallas.6} parent=27 // pred_fallthru
        _
    $region28: #{residual_block_pallas.6} parent=5 // pred_fallthru
      _
    %p354 = scmp.le.s32.totalorder 2, %s10
    // Predicated region
    $region37: #{residual_block_pallas.6} parent=5 // pred_check
      %p355 = pneg %p354
    $region38: #{residual_block_pallas.6} parent=5 // pred_check_branch
      %357 = sbr.rel (%p355) target = $region40
    $region39: #{residual_block_pallas.6} parent=5 // pred_region
      %s358 = ssub.s32 %s10, 2
      // Predicated region
      $region41: #{residual_block_pallas.6} parent=39 // pred_check
        %p359 = pneg %p86
      $region42: #{residual_block_pallas.6} parent=39 // pred_check_branch
        %361 = sbr.rel (%p359) target = $region44
      $region43: #{residual_block_pallas.6} parent=39 // pred_region
        %p362 = scmp.lt.s32.totalorder %s16, 1
        %s363 = scalar_select %p362, %s16, 1
        %s364 = scalar_lea.vmem %s2, %s363
      $region44: #{residual_block_pallas.6} parent=39 // pred_fallthru
        _
      // Predicated region
      $region45: #{residual_block_pallas.6} parent=39 // pred_check
        %p365 = pneg %p112
      $region46: #{residual_block_pallas.6} parent=39 // pred_check_branch
        %367 = sbr.rel (%p365) target = $region48
      $region47: #{residual_block_pallas.6} parent=39 // pred_region
        %p368 = scmp.lt.s32.totalorder %s16, 1
        %s369 = scalar_select %p368, %s16, 1
        %s370 = scalar_lea.vmem %s3, %s369
      $region48: #{residual_block_pallas.6} parent=39 // pred_fallthru
        _
    $region40: #{residual_block_pallas.6} parent=5 // pred_fallthru
      _
  $region6: #{residual_block_pallas.6} parent=0 // loop_footer
    %s14 = sadd.s32 1, %s10
  $region7: #{residual_block_pallas.6} parent=0 // loop_footer_branch
    %9 = sbr.rel target = $region3
  $region8: #{residual_block_pallas.6} parent=0 // loop_exit
    _

// kernel: residual_block_pallas.7
$region0: #{residual_block_pallas.7}
  #allocation0 [shape = 'u32[]', space=smem, size = 0x4, offset = 0x4, fixed_abs, tag = 'smem constant byte address 0x4 - core index']
  #allocation1 [shape = 'u32[144,128]{1,0:T(1,128)}', space=vmem, size = 0x12000, scoped, tag = 'internal scratch']
  %s0 = inlined_call_operand.vmem [shape: bf16[2,8,8,8], index: 0, kind: input, shape index: {}]
  %s1 = inlined_call_operand.vmem [shape: f32[1,8], index: 1, kind: input, shape index: {}]
  %s2 = inlined_call_operand.vmem [shape: f32[1,8], index: 2, kind: input, shape index: {}]
  %s3 = inlined_call_operand.vmem [shape: bf16[2,8,8,4], index: 3, kind: input, shape index: {}]
  %s4 = inlined_call_operand.vmem [shape: bf16[4,8], index: 4, kind: input, shape index: {}]
  %s5 = inlined_call_operand.vmem [shape: f32[1,8], index: 5, kind: input, shape index: {}]
  %s6 = inlined_call_operand.vmem [shape: f32[1,8], index: 6, kind: input, shape index: {}]
  %s7 = inlined_call_operand.vmem [shape: f32[2,8,8,8], index: 7, kind: output, shape index: {}]
  %s8 = sld [smem:[#allocation0]]
  $region61: #{residual_block_pallas.7} parent=0
    _
  %s10 = ssub.s32 1, %s8
  %s11 = scalar_select 0, %s10, %s8
  loop: start=0, step=1, limit=4
  $region2: #{residual_block_pallas.7} parent=0 // loop_pre_header
    _
  $region3: #{residual_block_pallas.7} parent=0 // loop_header
    %s13 = sphi 0, %s17
    %p14 = scmp.ge.s32.totalorder %s13, 4
    %s23 = sphi 0, %s25
    %s26 = sphi 0, %s23
    %s27 = sphi 0, %s26
    %s43 = sphi 0, %s27
    %s47 = sphi 0, %s47
    %s49 = sphi 0, %s47
    %s50 = sphi 0, %s49
    %s64 = sphi 0, %s50
    %s68 = sphi 0, %s68
    %s70 = sphi 0, %s68
    %s71 = sphi 0, %s70
    %s85 = sphi 0, %s71
    %s91 = sphi 0, %s93
    %s94 = sphi 0, %s91
    %s95 = sphi 0, %s94
    %s111 = sphi 0, %s95
    %s115 = sphi 0, %s115
    %s117 = sphi 0, %s115
    %s118 = sphi 0, %s117
    %s132 = sphi 0, %s118
    %s136 = sphi 0, %s136
    %s138 = sphi 0, %s136
    %s139 = sphi 0, %s138
    %s153 = sphi 0, %s139
    %s157 = sphi 0, %s157
    %s159 = sphi 0, %s157
    %s160 = sphi 0, %s159
    %s174 = sphi 0, %s160
    %s180 = sphi 0, %s182
    %s183 = sphi 0, %s180
    %s184 = sphi 0, %s183
    %s200 = sphi 0, %s184
  $region4: #{residual_block_pallas.7} parent=0 // loop_header_branch
    %16 = sbr.rel (%p14) target = $region8
  $region5: #{residual_block_pallas.7} parent=0 // loop_body
    %s18 = ssub.s32 %s13, 1
    %s19 = ssub.s32 %s13, 2
    %s20 = sadd.s32 %s13, 1
    %s21 = ssub.s32 %s13, %s20
    %p22 = scmp.eq.s32.totalorder %s21, 0
    %s24 = sadd.s32 %s23, 1
    %s25 = scalar_select %p22, %s23, %s24
    %p28 = pneg %p22
    %p29 = scmp.eq.s32.totalorder %s13, 1
    %p30 = por %p28, %p29
    %p31 = scmp.ne.s32.totalorder %s23, %s26
    %p32 = scmp.eq.s32.totalorder %s13, 0
    %p33 = por %p31, %p32
    %p34 = scmp.ne.s32.totalorder %s23, %s26
    %p35 = scmp.eq.s32.totalorder %s18, 1
    %p36 = por %p34, %p35
    %p37 = scmp.ne.s32.totalorder %s26, %s27
    %p38 = scmp.eq.s32.totalorder %s18, 0
    %p39 = por %p37, %p38
    %p40 = scmp.ne.s32.totalorder %s26, %s27
    %p41 = scmp.eq.s32.totalorder %s19, 1
    %p42 = por %p40, %p41
    %p44 = scmp.ne.s32.totalorder %s27, %s43
    %p45 = scmp.eq.s32.totalorder %s19, 0
    %p46 = por %p44, %p45
    %s48 = sadd.s32 %s47, 1
    %p51 = scmp.eq.s32.totalorder %s13, 1
    %p52 = scmp.ne.s32.totalorder %s47, %s49
    %p53 = scmp.eq.s32.totalorder %s13, 0
    %p54 = por %p52, %p53
    %p55 = scmp.ne.s32.totalorder %s47, %s49
    %p56 = scmp.eq.s32.totalorder %s18, 1
    %p57 = por %p55, %p56
    %p58 = scmp.ne.s32.totalorder %s49, %s50
    %p59 = scmp.eq.s32.totalorder %s18, 0
    %p60 = por %p58, %p59
    %p61 = scmp.ne.s32.totalorder %s49, %s50
    %p62 = scmp.eq.s32.totalorder %s19, 1
    %p63 = por %p61, %p62
    %p65 = scmp.ne.s32.totalorder %s50, %s64
    %p66 = scmp.eq.s32.totalorder %s19, 0
    %p67 = por %p65, %p66
    %s69 = sadd.s32 %s68, 1
    %p72 = scmp.eq.s32.totalorder %s13, 1
    %p73 = scmp.ne.s32.totalorder %s68, %s70
    %p74 = scmp.eq.s32.totalorder %s13, 0
    %p75 = por %p73, %p74
    %p76 = scmp.ne.s32.totalorder %s68, %s70
    %p77 = scmp.eq.s32.totalorder %s18, 1
    %p78 = por %p76, %p77
    %p79 = scmp.ne.s32.totalorder %s70, %s71
    %p80 = scmp.eq.s32.totalorder %s18, 0
    %p81 = por %p79, %p80
    %p82 = scmp.ne.s32.totalorder %s70, %s71
    %p83 = scmp.eq.s32.totalorder %s19, 1
    %p84 = por %p82, %p83
    %p86 = scmp.ne.s32.totalorder %s71, %s85
    %p87 = scmp.eq.s32.totalorder %s19, 0
    %p88 = por %p86, %p87
    %s89 = ssub.s32 %s13, %s20
    %p90 = scmp.eq.s32.totalorder %s89, 0
    %s92 = sadd.s32 %s91, 1
    %s93 = scalar_select %p90, %s91, %s92
    %p96 = pneg %p90
    %p97 = scmp.eq.s32.totalorder %s13, 1
    %p98 = por %p96, %p97
    %p99 = scmp.ne.s32.totalorder %s91, %s94
    %p100 = scmp.eq.s32.totalorder %s13, 0
    %p101 = por %p99, %p100
    %p102 = scmp.ne.s32.totalorder %s91, %s94
    %p103 = scmp.eq.s32.totalorder %s18, 1
    %p104 = por %p102, %p103
    %p105 = scmp.ne.s32.totalorder %s94, %s95
    %p106 = scmp.eq.s32.totalorder %s18, 0
    %p107 = por %p105, %p106
    %p108 = scmp.ne.s32.totalorder %s94, %s95
    %p109 = scmp.eq.s32.totalorder %s19, 1
    %p110 = por %p108, %p109
    %p112 = scmp.ne.s32.totalorder %s95, %s111
    %p113 = scmp.eq.s32.totalorder %s19, 0
    %p114 = por %p112, %p113
    %s116 = sadd.s32 %s115, 1
    %p119 = scmp.eq.s32.totalorder %s13, 1
    %p120 = scmp.ne.s32.totalorder %s115, %s117
    %p121 = scmp.eq.s32.totalorder %s13, 0
    %p122 = por %p120, %p121
    %p123 = scmp.ne.s32.totalorder %s115, %s117
    %p124 = scmp.eq.s32.totalorder %s18, 1
    %p125 = por %p123, %p124
    %p126 = scmp.ne.s32.totalorder %s117, %s118
    %p127 = scmp.eq.s32.totalorder %s18, 0
    %p128 = por %p126, %p127
    %p129 = scmp.ne.s32.totalorder %s117, %s118
    %p130 = scmp.eq.s32.totalorder %s19, 1
    %p131 = por %p129, %p130
    %p133 = scmp.ne.s32.totalorder %s118, %s132
    %p134 = scmp.eq.s32.totalorder %s19, 0
    %p135 = por %p133, %p134
    %s137 = sadd.s32 %s136, 1
    %p140 = scmp.eq.s32.totalorder %s13, 1
    %p141 = scmp.ne.s32.totalorder %s136, %s138
    %p142 = scmp.eq.s32.totalorder %s13, 0
    %p143 = por %p141, %p142
    %p144 = scmp.ne.s32.totalorder %s136, %s138
    %p145 = scmp.eq.s32.totalorder %s18, 1
    %p146 = por %p144, %p145
    %p147 = scmp.ne.s32.totalorder %s138, %s139
    %p148 = scmp.eq.s32.totalorder %s18, 0
    %p149 = por %p147, %p148
    %p150 = scmp.ne.s32.totalorder %s138, %s139
    %p151 = scmp.eq.s32.totalorder %s19, 1
    %p152 = por %p150, %p151
    %p154 = scmp.ne.s32.totalorder %s139, %s153
    %p155 = scmp.eq.s32.totalorder %s19, 0
    %p156 = por %p154, %p155
    %s158 = sadd.s32 %s157, 1
    %p161 = scmp.eq.s32.totalorder %s13, 1
    %p162 = scmp.ne.s32.totalorder %s157, %s159
    %p163 = scmp.eq.s32.totalorder %s13, 0
    %p164 = por %p162, %p163
    %p165 = scmp.ne.s32.totalorder %s157, %s159
    %p166 = scmp.eq.s32.totalorder %s18, 1
    %p167 = por %p165, %p166
    %p168 = scmp.ne.s32.totalorder %s159, %s160
    %p169 = scmp.eq.s32.totalorder %s18, 0
    %p170 = por %p168, %p169
    %p171 = scmp.ne.s32.totalorder %s159, %s160
    %p172 = scmp.eq.s32.totalorder %s19, 1
    %p173 = por %p171, %p172
    %p175 = scmp.ne.s32.totalorder %s160, %s174
    %p176 = scmp.eq.s32.totalorder %s19, 0
    %p177 = por %p175, %p176
    %s178 = ssub.s32 %s13, %s20
    %p179 = scmp.eq.s32.totalorder %s178, 0
    %s181 = sadd.s32 %s180, 1
    %s182 = scalar_select %p179, %s180, %s181
    %p185 = pneg %p179
    %p186 = scmp.eq.s32.totalorder %s13, 1
    %p187 = por %p185, %p186
    %p188 = scmp.ne.s32.totalorder %s180, %s183
    %p189 = scmp.eq.s32.totalorder %s13, 0
    %p190 = por %p188, %p189
    %p191 = scmp.ne.s32.totalorder %s180, %s183
    %p192 = scmp.eq.s32.totalorder %s18, 1
    %p193 = por %p191, %p192
    %p194 = scmp.ne.s32.totalorder %s183, %s184
    %p195 = scmp.eq.s32.totalorder %s18, 0
    %p196 = por %p194, %p195
    %p197 = scmp.ne.s32.totalorder %s183, %s184
    %p198 = scmp.eq.s32.totalorder %s19, 1
    %p199 = por %p197, %p198
    %p201 = scmp.ne.s32.totalorder %s184, %s200
    %p202 = scmp.eq.s32.totalorder %s19, 0
    %p203 = por %p201, %p202
    %p204 = scmp.le.s32.totalorder 1, %s13
    %p205 = scmp.lt.s32.totalorder %s13, 3
    %p206 = pnand %p204, %p205
    %p207 = pneg %p206
    // Predicated region
    $region9: #{residual_block_pallas.7} parent=5 // pred_check
      _
    $region10: #{residual_block_pallas.7} parent=5 // pred_check_branch
      %209 = sbr.rel (%p206) target = $region12
    $region11: #{residual_block_pallas.7} parent=5 // pred_region
      %s210 = ssub.s32 %s13, 1
      // Predicated region
      $region13: #{residual_block_pallas.7} parent=11 // pred_check
        %p211 = pneg %p60
      $region14: #{residual_block_pallas.7} parent=11 // pred_check_branch
        %213 = sbr.rel (%p211) target = $region16
      $region15: #{residual_block_pallas.7} parent=11 // pred_region
        _
      $region16: #{residual_block_pallas.7} parent=11 // pred_fallthru
        _
      // Predicated region
      $region17: #{residual_block_pallas.7} parent=11 // pred_check
        %p214 = pneg %p81
      $region18: #{residual_block_pallas.7} parent=11 // pred_check_branch
        %216 = sbr.rel (%p214) target = $region20
      $region19: #{residual_block_pallas.7} parent=11 // pred_region
        _
      $region20: #{residual_block_pallas.7} parent=11 // pred_fallthru
        _
      // Predicated region
      $region21: #{residual_block_pallas.7} parent=11 // pred_check
        %p217 = pneg %p128
      $region22: #{residual_block_pallas.7} parent=11 // pred_check_branch
        %219 = sbr.rel (%p217) target = $region24
      $region23: #{residual_block_pallas.7} parent=11 // pred_region
        _
      $region24: #{residual_block_pallas.7} parent=11 // pred_fallthru
        _
      // Predicated region
      $region25: #{residual_block_pallas.7} parent=11 // pred_check
        %p220 = pneg %p149
      $region26: #{residual_block_pallas.7} parent=11 // pred_check_branch
        %222 = sbr.rel (%p220) target = $region28
      $region27: #{residual_block_pallas.7} parent=11 // pred_region
        _
      $region28: #{residual_block_pallas.7} parent=11 // pred_fallthru
        _
      // Predicated region
      $region29: #{residual_block_pallas.7} parent=11 // pred_check
        %p223 = pneg %p170
      $region30: #{residual_block_pallas.7} parent=11 // pred_check_branch
        %225 = sbr.rel (%p223) target = $region32
      $region31: #{residual_block_pallas.7} parent=11 // pred_region
        _
      $region32: #{residual_block_pallas.7} parent=11 // pred_fallthru
        _
    $region12: #{residual_block_pallas.7} parent=5 // pred_fallthru
      _
    %p226 = scmp.lt.s32.totalorder %s13, 2
    // Predicated region
    $region33: #{residual_block_pallas.7} parent=5 // pred_check
      %p227 = pneg %p226
    $region34: #{residual_block_pallas.7} parent=5 // pred_check_branch
      %229 = sbr.rel (%p227) target = $region36
    $region35: #{residual_block_pallas.7} parent=5 // pred_region
      // Predicated region
      $region37: #{residual_block_pallas.7} parent=35 // pred_check
        %p230 = pneg %p33
      $region38: #{residual_block_pallas.7} parent=35 // pred_check_branch
        %232 = sbr.rel (%p230) target = $region40
      $region39: #{residual_block_pallas.7} parent=35 // pred_region
        %p233 = scmp.lt.s32.totalorder %s13, 1
        %s234 = scalar_select %p233, %s13, 1
        %s235 = smul.addr %s234, 8
        %s236 = smul.addr %s235, 4
        %s237 = scalar_lea.vmem %s0, %s236
      $region40: #{residual_block_pallas.7} parent=35 // pred_fallthru
        _
      // Predicated region
      $region41: #{residual_block_pallas.7} parent=35 // pred_check
        %p238 = pneg %p101
      $region42: #{residual_block_pallas.7} parent=35 // pred_check_branch
        %240 = sbr.rel (%p238) target = $region44
      $region43: #{residual_block_pallas.7} parent=35 // pred_region
        %p241 = scmp.lt.s32.totalorder %s13, 1
        %s242 = scalar_select %p241, %s13, 1
        %s243 = smul.addr %s242, 8
        %s244 = smul.addr %s243, 4
        %s245 = scalar_lea.vmem %s3, %s244
      $region44: #{residual_block_pallas.7} parent=35 // pred_fallthru
        _
    $region36: #{residual_block_pallas.7} parent=5 // pred_fallthru
      _
    %p246 = scmp.le.s32.totalorder 1, %s13
    %p247 = scmp.lt.s32.totalorder %s13, 3
    %p248 = pnand %p246, %p247
    %p249 = pneg %p248
    // Predicated region
    $region45: #{residual_block_pallas.7} parent=5 // pred_check
      _
    $region46: #{residual_block_pallas.7} parent=5 // pred_check_branch
      %251 = sbr.rel (%p248) target = $region48
    $region47: #{residual_block_pallas.7} parent=5 // pred_region
      %s252 = ssub.s32 %s13, 1
      %p253 = scmp.lt.s32.totalorder %s18, 1
      %s254 = scalar_select %p253, %s18, 1
      %s255 = smul.addr %s254, 8
      %s256 = smul.addr %s255, 4
      %s257 = scalar_lea.vmem %s0, %s256
      %p258 = pneg %p39
      %p259 = pneg %p36
      %p260 = pneg %p60
      %p261 = pneg %p57
      %p262 = pneg %p81
      %p263 = pneg %p78
      %p264 = scmp.lt.s32.totalorder %s18, 1
      %s265 = scalar_select %p264, %s18, 1
      %s266 = smul.addr %s265, 8
      %s267 = smul.addr %s266, 4
      %s268 = scalar_lea.vmem %s3, %s267
      %p269 = pneg %p107
      %p270 = pneg %p104
      %p271 = pneg %p128
      %p272 = pneg %p125
      %p273 = pneg %p149
      %p274 = pneg %p146
      %p275 = pneg %p170
      %p276 = pneg %p167
      %p277 = pneg %p196
      %p278 = pneg %p193
      %p279 = scmp.lt.s32.totalorder %s18, 1
      %s280 = scalar_select %p279, %s18, 1
      %s281 = smul.addr %s280, 8
      %s282 = smul.addr %s281, 8
      %s283 = scalar_lea.vmem %s7, %s282
      %p284 = scmp.lt.s32.totalorder %s18, 1
      %s285 = scalar_select %p284, %s18, 1
      %s286 = smul.addr %s285, 8
      %s287 = smul.addr %s286, 4
      %s288 = scalar_lea.vmem %s0, %s287
      %p289 = scmp.lt.s32.totalorder %s18, 1
      %s290 = scalar_select %p289, %s18, 1
      %s291 = smul.addr %s290, 8
      %s292 = smul.addr %s291, 4
      %s293 = scalar_lea.vmem %s3, %s292
      %p294 = scmp.lt.s32.totalorder %s18, 1
      %s295 = scalar_select %p294, %s18, 1
      %s296 = smul.addr %s295, 8
      %s297 = smul.addr %s296, 8
      %s298 = scalar_lea.vmem %s7, %s297
      %v300 = vld [vmem:[%s288] sm:$0xf]
      %v301 = vld [vmem:[%s288 + $0x4] sm:$0xf]
      %v302 = vld [vmem:[%s288 + $0x8] sm:$0xf]
      %v303 = vld [vmem:[%s288 + $0xc] sm:$0xf]
      %v304 = vld [vmem:[%s288 + $0x10] sm:$0xf]
      %v305 = vld [vmem:[%s288 + $0x14] sm:$0xf]
      %v306 = vld [vmem:[%s288 + $0x18] sm:$0xf]
      %v307 = vld [vmem:[%s288 + $0x1c] sm:$0xf]
      %v308 = vunpack.c.l.bf16 %v300
      %v309 = vunpack.c.l.bf16 %v301
      %v310 = vunpack.c.l.bf16 %v302
      %v311 = vunpack.c.l.bf16 %v303
      %v312 = vunpack.c.l.bf16 %v304
      %v313 = vunpack.c.l.bf16 %v305
      %v314 = vunpack.c.l.bf16 %v306
      %v315 = vunpack.c.l.bf16 %v307
      %v316 = vld [vmem:[%s1] sm:$0x1]
      %v318 = vlaneseq
      %v319 = vshrl.u32 %v318, 7
      %v320 = vsub.s32 0, %v319
      %v321 = vrot.slane %v316, %v320
      %v323 = vmul.f32 %v308, %v321
      %v324 = vmul.f32 %v309, %v321
      %v325 = vmul.f32 %v310, %v321
      %v326 = vmul.f32 %v311, %v321
      %v327 = vmul.f32 %v312, %v321
      %v328 = vmul.f32 %v313, %v321
      %v329 = vmul.f32 %v314, %v321
      %v330 = vmul.f32 %v315, %v321
      %v331 = vld [vmem:[%s2] sm:$0x1]
      %v333 = vlaneseq
      %v334 = vshrl.u32 %v333, 7
      %v335 = vsub.s32 0, %v334
      %v336 = vrot.slane %v331, %v335
      %v338 = vadd.f32 %v323, %v336
      %v339 = vadd.f32 %v324, %v336
      %v340 = vadd.f32 %v325, %v336
      %v341 = vadd.f32 %v326, %v336
      %v342 = vadd.f32 %v327, %v336
      %v343 = vadd.f32 %v328, %v336
      %v344 = vadd.f32 %v329, %v336
      %v345 = vadd.f32 %v330, %v336
      %v346 = vld [vmem:[%s293] sm:$0xf]
      %v347 = vld [vmem:[%s293 + $0x4] sm:$0xf]
      %v348 = vld [vmem:[%s293 + $0x8] sm:$0xf]
      %v349 = vld [vmem:[%s293 + $0xc] sm:$0xf]
      %v350 = vld [vmem:[%s293 + $0x10] sm:$0xf]
      %v351 = vld [vmem:[%s293 + $0x14] sm:$0xf]
      %v352 = vld [vmem:[%s293 + $0x18] sm:$0xf]
      %v353 = vld [vmem:[%s293 + $0x1c] sm:$0xf]
      %v354 = vld [vmem:[%s4] sm:$0x3]
      %v363 = vunpack.c.l.b16 %v346
      %v364 = vunpack.c.l.b16 %v347
      %v365 = vunpack.c.l.b16 %v348
      %v366 = vunpack.c.l.b16 %v349
      %v367 = vunpack.c.l.b16 %v350
      %v368 = vunpack.c.l.b16 %v351
      %v369 = vunpack.c.l.b16 %v352
      %v370 = vunpack.c.l.b16 %v353
      %v371 = vpack.c.b16 %v364, %v363
      %v372 = vpack.c.b16 %v366, %v365
      %v373 = vpack.c.b16 %v368, %v367
      %v374 = vpack.c.b16 %v370, %v369
      %vm375 = vcmask 31744
      %v377 = vsel %vm375, %v371, 0
      %v380 = vsel %vm375, %v372, 0
      %v383 = vsel %vm375, %v373, 0
      %v386 = vsel %vm375, %v374, 0
      %vm388 = vcmask 1041408
      %v390 = vsel %vm388, %v354, 0
      %392 = vmatprep.subr.bf16.mxu0 0
      %393 = vmatpush1.bf16.msra.mxu0 %v390
      %394 = vmatprep.subr.bf16.mxu0 0
      %395 = vmatpush1.bf16.msra.mxu0 0
      %396 = vmatprep.subr.bf16.mxu0 0
      %397 = vmatpush1.bf16.msra.mxu0 0
      %398 = vmatprep.subr.bf16.mxu0 0
      %399 = vmatpush1.bf16.msra.mxu0 0
      %400 = vmatprep.subr.bf16.mxu0 0
      %401 = vmatpush1.bf16.msra.mxu0 0
      %402 = vmatprep.subr.bf16.mxu0 0
      %403 = vmatpush1.bf16.msra.mxu0 0
      %404 = vmatprep.subr.bf16.mxu0 0
      %405 = vmatpush1.bf16.msra.mxu0 0
      %406 = vmatprep.subr.bf16.mxu0 0
      %407 = vmatpush1.bf16.msra.mxu0 0
      %408 = vmatprep.subr.bf16.mxu0 0
      %409 = vmatpush1.bf16.msra.mxu0 0
      %410 = vmatprep.subr.bf16.mxu0 0
      %411 = vmatpush1.bf16.msra.mxu0 0
      %412 = vmatprep.subr.bf16.mxu0 0
      %413 = vmatpush1.bf16.msra.mxu0 0
      %414 = vmatprep.subr.bf16.mxu0 0
      %415 = vmatpush1.bf16.msra.mxu0 0
      %416 = vmatprep.subr.bf16.mxu0 0
      %417 = vmatpush1.bf16.msra.mxu0 0
      %418 = vmatprep.subr.bf16.mxu0 0
      %419 = vmatpush1.bf16.msra.mxu0 0
      %420 = vmatprep.subr.bf16.mxu0 0
      %421 = vmatpush1.bf16.msra.mxu0 0
      %422 = vmatprep.subr.bf16.mxu0 0
      %423 = vmatpush1.bf16.msra.mxu0 0
      %424 = vmatprep.mubr.bf16.mxu0 0
      %425 = vmatmul.mubr.bf16.gmra.mrb[0].mxu0 %v377
      %v426 = vpop.f32.mrb[0].mxu0
      %v427 = vadd.f32 0.0, %v426
      %v428 = vpop.f32.mrb[0].mxu0
      %v429 = vpop.f32.mrb[0].mxu0
      %v430 = vadd.f32 0.0, %v429
      %v431 = vpop.f32.mrb[0].mxu0
      %432 = vmatprep.mubr.bf16.mxu0 0
      %433 = vmatmul.mubr.bf16.gmra.mrb[0].mxu0 %v380
      %v434 = vpop.f32.mrb[0].mxu0
      %v435 = vadd.f32 0.0, %v434
      %v436 = vpop.f32.mrb[0].mxu0
      %v437 = vpop.f32.mrb[0].mxu0
      %v438 = vadd.f32 0.0, %v437
      %v439 = vpop.f32.mrb[0].mxu0
      %440 = vmatprep.mubr.bf16.mxu0 0
      %441 = vmatmul.mubr.bf16.gmra.mrb[0].mxu0 %v383
      %v442 = vpop.f32.mrb[0].mxu0
      %v443 = vadd.f32 0.0, %v442
      %v444 = vpop.f32.mrb[0].mxu0
      %v445 = vpop.f32.mrb[0].mxu0
      %v446 = vadd.f32 0.0, %v445
      %v447 = vpop.f32.mrb[0].mxu0
      %448 = vmatprep.mubr.bf16.mxu0 0
      %449 = vmatmul.mubr.bf16.gmra.mrb[0].mxu0 %v386
      %v450 = vpop.f32.mrb[0].mxu0
      %v451 = vadd.f32 0.0, %v450
      %v452 = vpop.f32.mrb[0].mxu0
      %v453 = vpop.f32.mrb[0].mxu0
      %v454 = vadd.f32 0.0, %v453
      %v455 = vpop.f32.mrb[0].mxu0
      %456 = vdwg.mxu0
      %v457 = vld [vmem:[%s5] sm:$0x1]
      %v459 = vlaneseq
      %v460 = vshrl.u32 %v459, 7
      %v461 = vsub.s32 0, %v460
      %v462 = vrot.slane %v457, %v461
      %v464 = vmul.f32 %v427, %v462
      %v465 = vmul.f32 %v430, %v462
      %v466 = vmul.f32 %v435, %v462
      %v467 = vmul.f32 %v438, %v462
      %v468 = vmul.f32 %v443, %v462
      %v469 = vmul.f32 %v446, %v462
      %v470 = vmul.f32 %v451, %v462
      %v471 = vmul.f32 %v454, %v462
      %v472 = vld [vmem:[%s6] sm:$0x1]
      %v474 = vlaneseq
      %v475 = vshrl.u32 %v474, 7
      %v476 = vsub.s32 0, %v475
      %v477 = vrot.slane %v472, %v476
      %v479 = vadd.f32 %v464, %v477
      %v480 = vadd.f32 %v465, %v477
      %v481 = vadd.f32 %v466, %v477
      %v482 = vadd.f32 %v467, %v477
      %v483 = vadd.f32 %v468, %v477
      %v484 = vadd.f32 %v469, %v477
      %v485 = vadd.f32 %v470, %v477
      %v486 = vadd.f32 %v471, %v477
      %v487 = vadd.f32 %v338, %v479
      %v488 = vadd.f32 %v339, %v480
      %v489 = vadd.f32 %v340, %v481
      %v490 = vadd.f32 %v341, %v482
      %v491 = vadd.f32 %v342, %v483
      %v492 = vadd.f32 %v343, %v484
      %v493 = vadd.f32 %v344, %v485
      %v494 = vadd.f32 %v345, %v486
      %v495 = vmax.f32 %v487, 0.0
      %v496 = vmax.f32 %v488, 0.0
      %v497 = vmax.f32 %v489, 0.0
      %v498 = vmax.f32 %v490, 0.0
      %v499 = vmax.f32 %v491, 0.0
      %v500 = vmax.f32 %v492, 0.0
      %v501 = vmax.f32 %v493, 0.0
      %v502 = vmax.f32 %v494, 0.0
      %vm503 = vcmask 64512
      %504 = vst.msk [vmem:[%s298] sm:$0xff] %vm503, %v495
      %505 = vst.msk [vmem:[%s298 + $0x8] sm:$0xff] %vm503, %v496
      %506 = vst.msk [vmem:[%s298 + $0x10] sm:$0xff] %vm503, %v497
      %507 = vst.msk [vmem:[%s298 + $0x18] sm:$0xff] %vm503, %v498
      %508 = vst.msk [vmem:[%s298 + $0x20] sm:$0xff] %vm503, %v499
      %509 = vst.msk [vmem:[%s298 + $0x28] sm:$0xff] %vm503, %v500
      %510 = vst.msk [vmem:[%s298 + $0x30] sm:$0xff] %vm503, %v501
      %511 = vst.msk [vmem:[%s298 + $0x38] sm:$0xff] %vm503, %v502
      %p512 = scmp.lt.s32.totalorder %s18, 1
      %s513 = scalar_select %p512, %s18, 1
      %s514 = smul.addr %s513, 8
      %s515 = smul.addr %s514, 8
      %s516 = scalar_lea.vmem %s7, %s515
      // Predicated region
      $region49: #{residual_block_pallas.7} parent=47 // pred_check
        %p517 = pneg %p193
      $region50: #{residual_block_pallas.7} parent=47 // pred_check_branch
        %519 = sbr.rel (%p517) target = $region52
      $region51: #{residual_block_pallas.7} parent=47 // pred_region
        _
      $region52: #{residual_block_pallas.7} parent=47 // pred_fallthru
        _
    $region48: #{residual_block_pallas.7} parent=5 // pred_fallthru
      _
    %p520 = scmp.le.s32.totalorder 2, %s13
    // Predicated region
    $region53: #{residual_block_pallas.7} parent=5 // pred_check
      %p521 = pneg %p520
    $region54: #{residual_block_pallas.7} parent=5 // pred_check_branch
      %523 = sbr.rel (%p521) target = $region56
    $region55: #{residual_block_pallas.7} parent=5 // pred_region
      %s524 = ssub.s32 %s13, 2
      // Predicated region
      $region57: #{residual_block_pallas.7} parent=55 // pred_check
        %p525 = pneg %p199
      $region58: #{residual_block_pallas.7} parent=55 // pred_check_branch
        %527 = sbr.rel (%p525) target = $region60
      $region59: #{residual_block_pallas.7} parent=55 // pred_region
        %p528 = scmp.lt.s32.totalorder %s19, 1
        %s529 = scalar_select %p528, %s19, 1
        %s530 = smul.addr %s529, 8
        %s531 = smul.addr %s530, 8
        %s532 = scalar_lea.vmem %s7, %s531
      $region60: #{residual_block_pallas.7} parent=55 // pred_fallthru
        _
    $region56: #{residual_block_pallas.7} parent=5 // pred_fallthru
      _
  $region6: #{residual_block_pallas.7} parent=0 // loop_footer
    %s17 = sadd.s32 1, %s13
  $region7: #{residual_block_pallas.7} parent=0 // loop_footer_branch
    %12 = sbr.rel target = $region3
  $region8: #{residual_block_pallas.7} parent=0 // loop_exit
    _

// kernel: residual_block_pallas.4
$region0: #{residual_block_pallas.4}
  #allocation0 [shape = 'u32[]', space=smem, size = 0x4, offset = 0x4, fixed_abs, tag = 'smem constant byte address 0x4 - core index']
  #allocation1 [shape = 'u32[144,128]{1,0:T(1,128)}', space=vmem, size = 0x12000, scoped, tag = 'internal scratch']
  %s0 = inlined_call_operand.vmem [shape: bf16[2,17,17,4], index: 0, kind: input, shape index: {}]
  %s1 = inlined_call_operand.vmem [shape: bf16[9,4,8], index: 1, kind: input, shape index: {}]
  %s2 = inlined_call_operand.vmem [shape: bf16[2,8,8,8], index: 2, kind: output, shape index: {0}]
  %s3 = inlined_call_operand.vmem [shape: f32[2,1,8], index: 3, kind: output, shape index: {1}]
  %s4 = inlined_call_operand.vmem [shape: f32[2,1,8], index: 4, kind: output, shape index: {2}]
  %5 = xla_tuple %s2, %s3, %s4
  %s6 = sld [smem:[#allocation0]]
  $region57: #{residual_block_pallas.4} parent=0
    _
  %s8 = ssub.s32 1, %s6
  %s9 = scalar_select 0, %s8, %s6
  loop: start=0, step=1, limit=4
  $region2: #{residual_block_pallas.4} parent=0 // loop_pre_header
    _
  $region3: #{residual_block_pallas.4} parent=0 // loop_header
    %s11 = sphi 0, %s15
    %p12 = scmp.ge.s32.totalorder %s11, 4
    %s21 = sphi 0, %s23
    %s24 = sphi 0, %s21
    %s25 = sphi 0, %s24
    %s41 = sphi 0, %s25
    %s45 = sphi 0, %s45
    %s47 = sphi 0, %s45
    %s48 = sphi 0, %s47
    %s62 = sphi 0, %s48
    %s68 = sphi 0, %s70
    %s71 = sphi 0, %s68
    %s72 = sphi 0, %s71
    %s88 = sphi 0, %s72
    %s94 = sphi 0, %s96
    %s97 = sphi 0, %s94
    %s98 = sphi 0, %s97
    %s114 = sphi 0, %s98
    %s120 = sphi 0, %s122
    %s123 = sphi 0, %s120
    %s124 = sphi 0, %s123
    %s140 = sphi 0, %s124
  $region4: #{residual_block_pallas.4} parent=0 // loop_header_branch
    %14 = sbr.rel (%p12) target = $region8
  $region5: #{residual_block_pallas.4} parent=0 // loop_body
    %s16 = ssub.s32 %s11, 1
    %s17 = ssub.s32 %s11, 2
    %s18 = sadd.s32 %s11, 1
    %s19 = ssub.s32 %s11, %s18
    %p20 = scmp.eq.s32.totalorder %s19, 0
    %s22 = sadd.s32 %s21, 1
    %s23 = scalar_select %p20, %s21, %s22
    %p26 = pneg %p20
    %p27 = scmp.eq.s32.totalorder %s11, 1
    %p28 = por %p26, %p27
    %p29 = scmp.ne.s32.totalorder %s21, %s24
    %p30 = scmp.eq.s32.totalorder %s11, 0
    %p31 = por %p29, %p30
    %p32 = scmp.ne.s32.totalorder %s21, %s24
    %p33 = scmp.eq.s32.totalorder %s16, 1
    %p34 = por %p32, %p33
    %p35 = scmp.ne.s32.totalorder %s24, %s25
    %p36 = scmp.eq.s32.totalorder %s16, 0
    %p37 = por %p35, %p36
    %p38 = scmp.ne.s32.totalorder %s24, %s25
    %p39 = scmp.eq.s32.totalorder %s17, 1
    %p40 = por %p38, %p39
    %p42 = scmp.ne.s32.totalorder %s25, %s41
    %p43 = scmp.eq.s32.totalorder %s17, 0
    %p44 = por %p42, %p43
    %s46 = sadd.s32 %s45, 1
    %p49 = scmp.eq.s32.totalorder %s11, 1
    %p50 = scmp.ne.s32.totalorder %s45, %s47
    %p51 = scmp.eq.s32.totalorder %s11, 0
    %p52 = por %p50, %p51
    %p53 = scmp.ne.s32.totalorder %s45, %s47
    %p54 = scmp.eq.s32.totalorder %s16, 1
    %p55 = por %p53, %p54
    %p56 = scmp.ne.s32.totalorder %s47, %s48
    %p57 = scmp.eq.s32.totalorder %s16, 0
    %p58 = por %p56, %p57
    %p59 = scmp.ne.s32.totalorder %s47, %s48
    %p60 = scmp.eq.s32.totalorder %s17, 1
    %p61 = por %p59, %p60
    %p63 = scmp.ne.s32.totalorder %s48, %s62
    %p64 = scmp.eq.s32.totalorder %s17, 0
    %p65 = por %p63, %p64
    %s66 = ssub.s32 %s11, %s18
    %p67 = scmp.eq.s32.totalorder %s66, 0
    %s69 = sadd.s32 %s68, 1
    %s70 = scalar_select %p67, %s68, %s69
    %p73 = pneg %p67
    %p74 = scmp.eq.s32.totalorder %s11, 1
    %p75 = por %p73, %p74
    %p76 = scmp.ne.s32.totalorder %s68, %s71
    %p77 = scmp.eq.s32.totalorder %s11, 0
    %p78 = por %p76, %p77
    %p79 = scmp.ne.s32.totalorder %s68, %s71
    %p80 = scmp.eq.s32.totalorder %s16, 1
    %p81 = por %p79, %p80
    %p82 = scmp.ne.s32.totalorder %s71, %s72
    %p83 = scmp.eq.s32.totalorder %s16, 0
    %p84 = por %p82, %p83
    %p85 = scmp.ne.s32.totalorder %s71, %s72
    %p86 = scmp.eq.s32.totalorder %s17, 1
    %p87 = por %p85, %p86
    %p89 = scmp.ne.s32.totalorder %s72, %s88
    %p90 = scmp.eq.s32.totalorder %s17, 0
    %p91 = por %p89, %p90
    %s92 = ssub.s32 %s11, %s18
    %p93 = scmp.eq.s32.totalorder %s92, 0
    %s95 = sadd.s32 %s94, 1
    %s96 = scalar_select %p93, %s94, %s95
    %p99 = pneg %p93
    %p100 = scmp.eq.s32.totalorder %s11, 1
    %p101 = por %p99, %p100
    %p102 = scmp.ne.s32.totalorder %s94, %s97
    %p103 = scmp.eq.s32.totalorder %s11, 0
    %p104 = por %p102, %p103
    %p105 = scmp.ne.s32.totalorder %s94, %s97
    %p106 = scmp.eq.s32.totalorder %s16, 1
    %p107 = por %p105, %p106
    %p108 = scmp.ne.s32.totalorder %s97, %s98
    %p109 = scmp.eq.s32.totalorder %s16, 0
    %p110 = por %p108, %p109
    %p111 = scmp.ne.s32.totalorder %s97, %s98
    %p112 = scmp.eq.s32.totalorder %s17, 1
    %p113 = por %p111, %p112
    %p115 = scmp.ne.s32.totalorder %s98, %s114
    %p116 = scmp.eq.s32.totalorder %s17, 0
    %p117 = por %p115, %p116
    %s118 = ssub.s32 %s11, %s18
    %p119 = scmp.eq.s32.totalorder %s118, 0
    %s121 = sadd.s32 %s120, 1
    %s122 = scalar_select %p119, %s120, %s121
    %p125 = pneg %p119
    %p126 = scmp.eq.s32.totalorder %s11, 1
    %p127 = por %p125, %p126
    %p128 = scmp.ne.s32.totalorder %s120, %s123
    %p129 = scmp.eq.s32.totalorder %s11, 0
    %p130 = por %p128, %p129
    %p131 = scmp.ne.s32.totalorder %s120, %s123
    %p132 = scmp.eq.s32.totalorder %s16, 1
    %p133 = por %p131, %p132
    %p134 = scmp.ne.s32.totalorder %s123, %s124
    %p135 = scmp.eq.s32.totalorder %s16, 0
    %p136 = por %p134, %p135
    %p137 = scmp.ne.s32.totalorder %s123, %s124
    %p138 = scmp.eq.s32.totalorder %s17, 1
    %p139 = por %p137, %p138
    %p141 = scmp.ne.s32.totalorder %s124, %s140
    %p142 = scmp.eq.s32.totalorder %s17, 0
    %p143 = por %p141, %p142
    %p144 = scmp.le.s32.totalorder 1, %s11
    %p145 = scmp.lt.s32.totalorder %s11, 3
    %p146 = pnand %p144, %p145
    %p147 = pneg %p146
    // Predicated region
    $region9: #{residual_block_pallas.4} parent=5 // pred_check
      _
    $region10: #{residual_block_pallas.4} parent=5 // pred_check_branch
      %149 = sbr.rel (%p146) target = $region12
    $region11: #{residual_block_pallas.4} parent=5 // pred_region
      %s150 = ssub.s32 %s11, 1
      // Predicated region
      $region13: #{residual_block_pallas.4} parent=11 // pred_check
        %p151 = pneg %p58
      $region14: #{residual_block_pallas.4} parent=11 // pred_check_branch
        %153 = sbr.rel (%p151) target = $region16
      $region15: #{residual_block_pallas.4} parent=11 // pred_region
        _
      $region16: #{residual_block_pallas.4} parent=11 // pred_fallthru
        _
    $region12: #{residual_block_pallas.4} parent=5 // pred_fallthru
      _
    %p154 = scmp.lt.s32.totalorder %s11, 2
    // Predicated region
    $region17: #{residual_block_pallas.4} parent=5 // pred_check
      %p155 = pneg %p154
    $region18: #{residual_block_pallas.4} parent=5 // pred_check_branch
      %157 = sbr.rel (%p155) target = $region20
    $region19: #{residual_block_pallas.4} parent=5 // pred_region
      // Predicated region
      $region21: #{residual_block_pallas.4} parent=19 // pred_check
        %p158 = pneg %p31
      $region22: #{residual_block_pallas.4} parent=19 // pred_check_branch
        %160 = sbr.rel (%p158) target = $region24
      $region23: #{residual_block_pallas.4} parent=19 // pred_region
        %p161 = scmp.lt.s32.totalorder %s11, 1
        %s162 = scalar_select %p161, %s11, 1
        %s163 = smul.addr %s162, 51
        %s164 = smul.addr %s163, 4
        %s165 = scalar_lea.vmem %s0, %s164
      $region24: #{residual_block_pallas.4} parent=19 // pred_fallthru
        _
    $region20: #{residual_block_pallas.4} parent=5 // pred_fallthru
      _
    %p166 = scmp.le.s32.totalorder 1, %s11
    %p167 = scmp.lt.s32.totalorder %s11, 3
    %p168 = pnand %p166, %p167
    %p169 = pneg %p168
    // Predicated region
    $region25: #{residual_block_pallas.4} parent=5 // pred_check
      _
    $region26: #{residual_block_pallas.4} parent=5 // pred_check_branch
      %171 = sbr.rel (%p168) target = $region28
    $region27: #{residual_block_pallas.4} parent=5 // pred_region
      %s172 = ssub.s32 %s11, 1
      %p173 = scmp.lt.s32.totalorder %s16, 1
      %s174 = scalar_select %p173, %s16, 1
      %s175 = smul.addr %s174, 51
      %s176 = smul.addr %s175, 4
      %s177 = scalar_lea.vmem %s0, %s176
      %p178 = pneg %p37
      %p179 = pneg %p34
      %p180 = pneg %p58
      %p181 = pneg %p55
      %p182 = pneg %p84
      %p183 = pneg %p81
      %p184 = scmp.lt.s32.totalorder %s16, 1
      %s185 = scalar_select %p184, %s16, 1
      %s186 = smul.addr %s185, 8
      %s187 = smul.addr %s186, 4
      %s188 = scalar_lea.vmem %s2, %s187
      %p189 = pneg %p110
      %p190 = pneg %p107
      %p191 = scmp.lt.s32.totalorder %s16, 1
      %s192 = scalar_select %p191, %s16, 1
      %s193 = scalar_lea.vmem %s3, %s192
      %p194 = pneg %p136
      %p195 = pneg %p133
      %p196 = scmp.lt.s32.totalorder %s16, 1
      %s197 = scalar_select %p196, %s16, 1
      %s198 = scalar_lea.vmem %s4, %s197
      %p199 = scmp.lt.s32.totalorder %s16, 1
      %s200 = scalar_select %p199, %s16, 1
      %s201 = smul.addr %s200, 51
      %s202 = smul.addr %s201, 4
      %s203 = scalar_lea.vmem %s0, %s202
      %p204 = scmp.lt.s32.totalorder %s16, 1
      %s205 = scalar_select %p204, %s16, 1
      %s206 = smul.addr %s205, 8
      %s207 = smul.addr %s206, 4
      %s208 = scalar_lea.vmem %s2, %s207
      %p209 = scmp.lt.s32.totalorder %s16, 1
      %s210 = scalar_select %p209, %s16, 1
      %s211 = scalar_lea.vmem %s3, %s210
      %p212 = scmp.lt.s32.totalorder %s16, 1
      %s213 = scalar_select %p212, %s16, 1
      %s214 = scalar_lea.vmem %s4, %s213
      %v216 = vld [vmem:[%s203] sm:$0xf]
      %v217 = vld [vmem:[%s203 + $0x4] sm:$0xf]
      %v218 = vld [vmem:[%s203 + $0x8] sm:$0x1]
      %v219 = vld [vmem:[%s203 + $0xc] sm:$0xf]
      %v220 = vld [vmem:[%s203 + $0x10] sm:$0xf]
      %v221 = vld [vmem:[%s203 + $0x14] sm:$0x1]
      %v222 = vld [vmem:[%s203 + $0x18] sm:$0xf]
      %v223 = vld [vmem:[%s203 + $0x1c] sm:$0xf]
      %v224 = vld [vmem:[%s203 + $0x20] sm:$0x1]
      %v225 = vld [vmem:[%s203 + $0x24] sm:$0xf]
      %v226 = vld [vmem:[%s203 + $0x28] sm:$0xf]
      %v227 = vld [vmem:[%s203 + $0x2c] sm:$0x1]
      %v228 = vld [vmem:[%s203 + $0x30] sm:$0xf]
      %v229 = vld [vmem:[%s203 + $0x34] sm:$0xf]
      %v230 = vld [vmem:[%s203 + $0x38] sm:$0x1]
      %v231 = vld [vmem:[%s203 + $0x3c] sm:$0xf]
      %v232 = vld [vmem:[%s203 + $0x40] sm:$0xf]
      %v233 = vld [vmem:[%s203 + $0x44] sm:$0x1]
      %v234 = vld [vmem:[%s203 + $0x48] sm:$0xf]
      %v235 = vld [vmem:[%s203 + $0x4c] sm:$0xf]
      %v236 = vld [vmem:[%s203 + $0x50] sm:$0x1]
      %v237 = vld [vmem:[%s203 + $0x54] sm:$0xf]
      %v238 = vld [vmem:[%s203 + $0x58] sm:$0xf]
      %v239 = vld [vmem:[%s203 + $0x5c] sm:$0x1]
      %v240 = vld [vmem:[%s203 + $0x60] sm:$0xf]
      %v241 = vld [vmem:[%s203 + $0x64] sm:$0xf]
      %v242 = vld [vmem:[%s203 + $0x68] sm:$0x1]
      %v243 = vld [vmem:[%s203 + $0x6c] sm:$0xf]
      %v244 = vld [vmem:[%s203 + $0x70] sm:$0xf]
      %v245 = vld [vmem:[%s203 + $0x74] sm:$0x1]
      %v246 = vld [vmem:[%s203 + $0x78] sm:$0xf]
      %v247 = vld [vmem:[%s203 + $0x7c] sm:$0xf]
      %v248 = vld [vmem:[%s203 + $0x80] sm:$0x1]
      %v249 = vld [vmem:[%s203 + $0x84] sm:$0xf]
      %v250 = vld [vmem:[%s203 + $0x88] sm:$0xf]
      %v251 = vld [vmem:[%s203 + $0x8c] sm:$0x1]
      %v252 = vld [vmem:[%s203 + $0x90] sm:$0xf]
      %v253 = vld [vmem:[%s203 + $0x94] sm:$0xf]
      %v254 = vld [vmem:[%s203 + $0x98] sm:$0x1]
      %v255 = vld [vmem:[%s203 + $0x9c] sm:$0xf]
      %v256 = vld [vmem:[%s203 + $0xa0] sm:$0xf]
      %v257 = vld [vmem:[%s203 + $0xa4] sm:$0x1]
      %v258 = vld [vmem:[%s203 + $0xa8] sm:$0xf]
      %v259 = vld [vmem:[%s203 + $0xac] sm:$0xf]
      %v260 = vld [vmem:[%s203 + $0xb0] sm:$0x1]
      %v261 = vld [vmem:[%s203 + $0xb4] sm:$0xf]
      %v262 = vld [vmem:[%s203 + $0xb8] sm:$0xf]
      %v263 = vld [vmem:[%s203 + $0xbc] sm:$0x1]
      %v264 = vld [vmem:[%s203 + $0xc0] sm:$0xf]
      %v265 = vld [vmem:[%s203 + $0xc4] sm:$0xf]
      %v266 = vld [vmem:[%s203 + $0xc8] sm:$0x1]
      %v267 = vld [vmem:[%s1] sm:$0x3]
      %vm268 = vsmask.f32 3328
      %vm269 = vsmask.f32 7440
      %vm270 = vmor %vm268, %vm269
      %v272 = vshrl.u32 %v217, 16
      %v274 = vrot.slane %v272, 4
      %v275 = vshll.u32 %v217, 16
      %v277 = vrot.slane %v275, 5
      %v278 = vor.u32 %v274, %v277
      %v279 = vrot.slane %v278, 4
      %v281 = vshll.u32 %v218, 16
      %v283 = vrot.slane %v281, 5
      %v284 = vsel %vm270, %v279, %v283
      %v286 = vshrl.u32 %v220, 16
      %v288 = vrot.slane %v286, 4
      %v289 = vshll.u32 %v220, 16
      %v291 = vrot.slane %v289, 5
      %v292 = vor.u32 %v288, %v291
      %v293 = vrot.slane %v292, 4
      %v295 = vshll.u32 %v221, 16
      %v297 = vrot.slane %v295, 5
      %v298 = vsel %vm270, %v293, %v297
      %v300 = vshrl.u32 %v223, 16
      %v302 = vrot.slane %v300, 4
      %v303 = vshll.u32 %v223, 16
      %v305 = vrot.slane %v303, 5
      %v306 = vor.u32 %v302, %v305
      %v307 = vrot.slane %v306, 4
      %v309 = vshll.u32 %v224, 16
      %v311 = vrot.slane %v309, 5
      %v312 = vsel %vm270, %v307, %v311
      %v314 = vshrl.u32 %v226, 16
      %v316 = vrot.slane %v314, 4
      %v317 = vshll.u32 %v226, 16
      %v319 = vrot.slane %v317, 5
      %v320 = vor.u32 %v316, %v319
      %v321 = vrot.slane %v320, 4
      %v323 = vshll.u32 %v227, 16
      %v325 = vrot.slane %v323, 5
      %v326 = vsel %vm270, %v321, %v325
      %v328 = vshrl.u32 %v229, 16
      %v330 = vrot.slane %v328, 4
      %v331 = vshll.u32 %v229, 16
      %v333 = vrot.slane %v331, 5
      %v334 = vor.u32 %v330, %v333
      %v335 = vrot.slane %v334, 4
      %v337 = vshll.u32 %v230, 16
      %v339 = vrot.slane %v337, 5
      %v340 = vsel %vm270, %v335, %v339
      %v342 = vshrl.u32 %v232, 16
      %v344 = vrot.slane %v342, 4
      %v345 = vshll.u32 %v232, 16
      %v347 = vrot.slane %v345, 5
      %v348 = vor.u32 %v344, %v347
      %v349 = vrot.slane %v348, 4
      %v351 = vshll.u32 %v233, 16
      %v353 = vrot.slane %v351, 5
      %v354 = vsel %vm270, %v349, %v353
      %v356 = vshrl.u32 %v235, 16
      %v358 = vrot.slane %v356, 4
      %v359 = vshll.u32 %v235, 16
      %v361 = vrot.slane %v359, 5
      %v362 = vor.u32 %v358, %v361
      %v363 = vrot.slane %v362, 4
      %v365 = vshll.u32 %v236, 16
      %v367 = vrot.slane %v365, 5
      %v368 = vsel %vm270, %v363, %v367
      %v370 = vshrl.u32 %v238, 16
      %v372 = vrot.slane %v370, 4
      %v373 = vshll.u32 %v238, 16
      %v375 = vrot.slane %v373, 5
      %v376 = vor.u32 %v372, %v375
      %v377 = vrot.slane %v376, 4
      %v379 = vshll.u32 %v239, 16
      %v381 = vrot.slane %v379, 5
      %v382 = vsel %vm270, %v377, %v381
      %s383 = scalar_lea.vmem %s1, 2
      %v384 = vld [vmem:[%s383] sm:$0x3]
      %v385 = vunpack.c.l.b16 %v284
      %v386 = vunpack.c.l.b16 %v298
      %v387 = vunpack.c.l.b16 %v312
      %v388 = vunpack.c.l.b16 %v326
      %v389 = vunpack.c.l.b16 %v340
      %v390 = vunpack.c.l.b16 %v354
      %v391 = vunpack.c.l.b16 %v368
      %v392 = vunpack.c.l.b16 %v382
      %v393 = vpack.c.b16 %v386, %v385
      %v394 = vpack.c.b16 %v388, %v387
      %v395 = vpack.c.b16 %v390, %v389
      %v396 = vpack.c.b16 %v392, %v391
      %vm397 = vcmask 31744
      %v399 = vsel %vm397, %v393, 0
      %v402 = vsel %vm397, %v394, 0
      %v405 = vsel %vm397, %v395, 0
      %v408 = vsel %vm397, %v396, 0
      %vm410 = vcmask 1041408
      %v412 = vsel %vm410, %v384, 0
      %414 = vmatprep.subr.bf16.mxu0 0
      %415 = vmatpush1.bf16.msra.mxu0 %v412
      %416 = vmatprep.subr.bf16.mxu0 0
      %417 = vmatpush1.bf16.msra.mxu0 0
      %418 = vmatprep.subr.bf16.mxu0 0
      %419 = vmatpush1.bf16.msra.mxu0 0
      %420 = vmatprep.subr.bf16.mxu0 0
      %421 = vmatpush1.bf16.msra.mxu0 0
      %422 = vmatprep.subr.bf16.mxu0 0
      %423 = vmatpush1.bf16.msra.mxu0 0
      %424 = vmatprep.subr.bf16.mxu0 0
      %425 = vmatpush1.bf16.msra.mxu0 0
      %426 = vmatprep.subr.bf16.mxu0 0
      %427 = vmatpush1.bf16.msra.mxu0 0
      %428 = vmatprep.subr.bf16.mxu0 0
      %429 = vmatpush1.bf16.msra.mxu0 0
      %430 = vmatprep.subr.bf16.mxu0 0
      %431 = vmatpush1.bf16.msra.mxu0 0
      %432 = vmatprep.subr.bf16.mxu0 0
      %433 = vmatpush1.bf16.msra.mxu0 0
      %434 = vmatprep.subr.bf16.mxu0 0
      %435 = vmatpush1.bf16.msra.mxu0 0
      %436 = vmatprep.subr.bf16.mxu0 0
      %437 = vmatpush1.bf16.msra.mxu0 0
      %438 = vmatprep.subr.bf16.mxu0 0
      %439 = vmatpush1.bf16.msra.mxu0 0
      %440 = vmatprep.subr.bf16.mxu0 0
      %441 = vmatpush1.bf16.msra.mxu0 0
      %442 = vmatprep.subr.bf16.mxu0 0
      %443 = vmatpush1.bf16.msra.mxu0 0
      %444 = vmatprep.subr.bf16.mxu0 0
      %445 = vmatpush1.bf16.msra.mxu0 0
      %446 = vmatprep.mubr.bf16.mxu0 0
      %447 = vmatmul.mubr.bf16.gmra.mrb[0].mxu0 %v399
      %v448 = vpop.f32.mrb[0].mxu0
      %v449 = vadd.f32 0.0, %v448
      %v450 = vpop.f32.mrb[0].mxu0
      %v451 = vpop.f32.mrb[0].mxu0
      %v452 = vadd.f32 0.0, %v451
      %v453 = vpop.f32.mrb[0].mxu0
      %454 = vmatprep.mubr.bf16.mxu0 0
      %455 = vmatmul.mubr.bf16.gmra.mrb[0].mxu0 %v402
      %v456 = vpop.f32.mrb[0].mxu0
      %v457 = vadd.f32 0.0, %v456
      %v458 = vpop.f32.mrb[0].mxu0
      %v459 = vpop.f32.mrb[0].mxu0
      %v460 = vadd.f32 0.0, %v459
      %v461 = vpop.f32.mrb[0].mxu0
      %462 = vmatprep.mubr.bf16.mxu0 0
      %463 = vmatmul.mubr.bf16.gmra.mrb[0].mxu0 %v405
      %v464 = vpop.f32.mrb[0].mxu0
      %v465 = vadd.f32 0.0, %v464
      %v466 = vpop.f32.mrb[0].mxu0
      %v467 = vpop.f32.mrb[0].mxu0
      %v468 = vadd.f32 0.0, %v467
      %v469 = vpop.f32.mrb[0].mxu0
      %470 = vmatprep.mubr.bf16.mxu0 0
      %471 = vmatmul.mubr.bf16.gmra.mrb[0].mxu0 %v408
      %v472 = vpop.f32.mrb[0].mxu0
      %v473 = vadd.f32 0.0, %v472
      %v474 = vpop.f32.mrb[0].mxu0
      %v475 = vpop.f32.mrb[0].mxu0
      %v476 = vadd.f32 0.0, %v475
      %v477 = vpop.f32.mrb[0].mxu0
      %478 = vdwg.mxu0
      %v487 = vunpack.c.l.b16 %v216
      %v488 = vunpack.c.l.b16 %v219
      %v489 = vunpack.c.l.b16 %v222
      %v490 = vunpack.c.l.b16 %v225
      %v491 = vunpack.c.l.b16 %v228
      %v492 = vunpack.c.l.b16 %v231
      %v493 = vunpack.c.l.b16 %v234
      %v494 = vunpack.c.l.b16 %v237
      %v495 = vpack.c.b16 %v488, %v487
      %v496 = vpack.c.b16 %v490, %v489
      %v497 = vpack.c.b16 %v492, %v491
      %v498 = vpack.c.b16 %v494, %v493
      %v500 = vsel %vm397, %v495, 0
      %v503 = vsel %vm397, %v496, 0
      %v506 = vsel %vm397, %v497, 0
      %v509 = vsel %vm397, %v498, 0
      %v512 = vsel %vm410, %v267, 0
      %514 = vmatprep.subr.bf16.mxu0 0
      %515 = vmatpush1.bf16.msra.mxu0 %v512
      %516 = vmatprep.subr.bf16.mxu0 0
      %517 = vmatpush1.bf16.msra.mxu0 0
      %518 = vmatprep.subr.bf16.mxu0 0
      %519 = vmatpush1.bf16.msra.mxu0 0
      %520 = vmatprep.subr.bf16.mxu0 0
      %521 = vmatpush1.bf16.msra.mxu0 0
      %522 = vmatprep.subr.bf16.mxu0 0
      %523 = vmatpush1.bf16.msra.mxu0 0
      %524 = vmatprep.subr.bf16.mxu0 0
      %525 = vmatpush1.bf16.msra.mxu0 0
      %526 = vmatprep.subr.bf16.mxu0 0
      %527 = vmatpush1.bf16.msra.mxu0 0
      %528 = vmatprep.subr.bf16.mxu0 0
      %529 = vmatpush1.bf16.msra.mxu0 0
      %530 = vmatprep.subr.bf16.mxu0 0
      %531 = vmatpush1.bf16.msra.mxu0 0
      %532 = vmatprep.subr.bf16.mxu0 0
      %533 = vmatpush1.bf16.msra.mxu0 0
      %534 = vmatprep.subr.bf16.mxu0 0
      %535 = vmatpush1.bf16.msra.mxu0 0
      %536 = vmatprep.subr.bf16.mxu0 0
      %537 = vmatpush1.bf16.msra.mxu0 0
      %538 = vmatprep.subr.bf16.mxu0 0
      %539 = vmatpush1.bf16.msra.mxu0 0
      %540 = vmatprep.subr.bf16.mxu0 0
      %541 = vmatpush1.bf16.msra.mxu0 0
      %542 = vmatprep.subr.bf16.mxu0 0
      %543 = vmatpush1.bf16.msra.mxu0 0
      %544 = vmatprep.subr.bf16.mxu0 0
      %545 = vmatpush1.bf16.msra.mxu0 0
      %546 = vmatprep.mubr.bf16.mxu0 0
      %547 = vmatmul.mubr.bf16.gmra.mrb[0].mxu0 %v500
      %v548 = vpop.f32.mrb[0].mxu0
      %v549 = vadd.f32 %v449, %v548
      %v550 = vpop.f32.mrb[0].mxu0
      %v551 = vpop.f32.mrb[0].mxu0
      %v552 = vadd.f32 %v452, %v551
      %v553 = vpop.f32.mrb[0].mxu0
      %554 = vmatprep.mubr.bf16.mxu0 0
      %555 = vmatmul.mubr.bf16.gmra.mrb[0].mxu0 %v503
      %v556 = vpop.f32.mrb[0].mxu0
      %v557 = vadd.f32 %v457, %v556
      %v558 = vpop.f32.mrb[0].mxu0
      %v559 = vpop.f32.mrb[0].mxu0
      %v560 = vadd.f32 %v460, %v559
      %v561 = vpop.f32.mrb[0].mxu0
      %562 = vmatprep.mubr.bf16.mxu0 0
      %563 = vmatmul.mubr.bf16.gmra.mrb[0].mxu0 %v506
      %v564 = vpop.f32.mrb[0].mxu0
      %v565 = vadd.f32 %v465, %v564
      %v566 = vpop.f32.mrb[0].mxu0
      %v567 = vpop.f32.mrb[0].mxu0
      %v568 = vadd.f32 %v468, %v567
      %v569 = vpop.f32.mrb[0].mxu0
      %570 = vmatprep.mubr.bf16.mxu0 0
      %571 = vmatmul.mubr.bf16.gmra.mrb[0].mxu0 %v509
      %v572 = vpop.f32.mrb[0].mxu0
      %v573 = vadd.f32 %v473, %v572
      %v574 = vpop.f32.mrb[0].mxu0
      %v575 = vpop.f32.mrb[0].mxu0
      %v576 = vadd.f32 %v476, %v575
      %v577 = vpop.f32.mrb[0].mxu0
      %578 = vdwg.mxu0
      %v580 = vshrl.u32 %v216, 16
      %v582 = vrot.slane %v580, 4
      %v583 = vshll.u32 %v216, 16
      %v585 = vrot.slane %v583, 5
      %v586 = vor.u32 %v582, %v585
      %v587 = vrot.slane %v586, 4
      %v588 = vsel %vm270, %v587, %v277
      %v590 = vshrl.u32 %v219, 16
      %v592 = vrot.slane %v590, 4
      %v593 = vshll.u32 %v219, 16
      %v595 = vrot.slane %v593, 5
      %v596 = vor.u32 %v592, %v595
      %v597 = vrot.slane %v596, 4
      %v598 = vsel %vm270, %v597, %v291
      %v600 = vshrl.u32 %v222, 16
      %v602 = vrot.slane %v600, 4
      %v603 = vshll.u32 %v222, 16
      %v605 = vrot.slane %v603, 5
      %v606 = vor.u32 %v602, %v605
      %v607 = vrot.slane %v606, 4
      %v608 = vsel %vm270, %v607, %v305
      %v610 = vshrl.u32 %v225, 16
      %v612 = vrot.slane %v610, 4
      %v613 = vshll.u32 %v225, 16
      %v615 = vrot.slane %v613, 5
      %v616 = vor.u32 %v612, %v615
      %v617 = vrot.slane %v616, 4
      %v618 = vsel %vm270, %v617, %v319
      %v620 = vshrl.u32 %v228, 16
      %v622 = vrot.slane %v620, 4
      %v623 = vshll.u32 %v228, 16
      %v625 = vrot.slane %v623, 5
      %v626 = vor.u32 %v622, %v625
      %v627 = vrot.slane %v626, 4
      %v628 = vsel %vm270, %v627, %v333
      %v630 = vshrl.u32 %v231, 16
      %v632 = vrot.slane %v630, 4
      %v633 = vshll.u32 %v231, 16
      %v635 = vrot.slane %v633, 5
      %v636 = vor.u32 %v632, %v635
      %v637 = vrot.slane %v636, 4
      %v638 = vsel %vm270, %v637, %v347
      %v640 = vshrl.u32 %v234, 16
      %v642 = vrot.slane %v640, 4
      %v643 = vshll.u32 %v234, 16
      %v645 = vrot.slane %v643, 5
      %v646 = vor.u32 %v642, %v645
      %v647 = vrot.slane %v646, 4
      %v648 = vsel %vm270, %v647, %v361
      %v650 = vshrl.u32 %v237, 16
      %v652 = vrot.slane %v650, 4
      %v653 = vshll.u32 %v237, 16
      %v655 = vrot.slane %v653, 5
      %v656 = vor.u32 %v652, %v655
      %v657 = vrot.slane %v656, 4
      %v658 = vsel %vm270, %v657, %v375
      %s659 = scalar_lea.vmem %s1, 4
      %v660 = vld [vmem:[%s659] sm:$0x3]
      %v661 = vunpack.c.l.b16 %v588
      %v662 = vunpack.c.l.b16 %v598
      %v663 = vunpack.c.l.b16 %v608
      %v664 = vunpack.c.l.b16 %v618
      %v665 = vunpack.c.l.b16 %v628
      %v666 = vunpack.c.l.b16 %v638
      %v667 = vunpack.c.l.b16 %v648
      %v668 = vunpack.c.l.b16 %v658
      %v669 = vpack.c.b16 %v662, %v661
      %v670 = vpack.c.b16 %v664, %v663
      %v671 = vpack.c.b16 %v666, %v665
      %v672 = vpack.c.b16 %v668, %v667
      %v674 = vsel %vm397, %v669, 0
      %v677 = vsel %vm397, %v670, 0
      %v680 = vsel %vm397, %v671, 0
      %v683 = vsel %vm397, %v672, 0
      %v686 = vsel %vm410, %v660, 0
      %688 = vmatprep.subr.bf16.mxu0 0
      %689 = vmatpush1.bf16.msra.mxu0 %v686
      %690 = vmatprep.subr.bf16.mxu0 0
      %691 = vmatpush1.bf16.msra.mxu0 0
      %692 = vmatprep.subr.bf16.mxu0 0
      %693 = vmatpush1.bf16.msra.mxu0 0
      %694 = vmatprep.subr.bf16.mxu0 0
      %695 = vmatpush1.bf16.msra.mxu0 0
      %696 = vmatprep.subr.bf16.mxu0 0
      %697 = vmatpush1.bf16.msra.mxu0 0
      %698 = vmatprep.subr.bf16.mxu0 0
      %699 = vmatpush1.bf16.msra.mxu0 0
      %700 = vmatprep.subr.bf16.mxu0 0
      %701 = vmatpush1.bf16.msra.mxu0 0
      %702 = vmatprep.subr.bf16.mxu0 0
      %703 = vmatpush1.bf16.msra.mxu0 0
      %704 = vmatprep.subr.bf16.mxu0 0
      %705 = vmatpush1.bf16.msra.mxu0 0
      %706 = vmatprep.subr.bf16.mxu0 0
      %707 = vmatpush1.bf16.msra.mxu0 0
      %708 = vmatprep.subr.bf16.mxu0 0
      %709 = vmatpush1.bf16.msra.mxu0 0
      %710 = vmatprep.subr.bf16.mxu0 0
      %711 = vmatpush1.bf16.msra.mxu0 0
      %712 = vmatprep.subr.bf16.mxu0 0
      %713 = vmatpush1.bf16.msra.mxu0 0
      %714 = vmatprep.subr.bf16.mxu0 0
      %715 = vmatpush1.bf16.msra.mxu0 0
      %716 = vmatprep.subr.bf16.mxu0 0
      %717 = vmatpush1.bf16.msra.mxu0 0
      %718 = vmatprep.subr.bf16.mxu0 0
      %719 = vmatpush1.bf16.msra.mxu0 0
      %720 = vmatprep.mubr.bf16.mxu0 0
      %721 = vmatmul.mubr.bf16.gmra.mrb[0].mxu0 %v674
      %v722 = vpop.f32.mrb[0].mxu0
      %v723 = vadd.f32 0.0, %v722
      %v724 = vpop.f32.mrb[0].mxu0
      %v725 = vpop.f32.mrb[0].mxu0
      %v726 = vadd.f32 0.0, %v725
      %v727 = vpop.f32.mrb[0].mxu0
      %728 = vmatprep.mubr.bf16.mxu0 0
      %729 = vmatmul.mubr.bf16.gmra.mrb[0].mxu0 %v677
      %v730 = vpop.f32.mrb[0].mxu0
      %v731 = vadd.f32 0.0, %v730
      %v732 = vpop.f32.mrb[0].mxu0
      %v733 = vpop.f32.mrb[0].mxu0
      %v734 = vadd.f32 0.0, %v733
      %v735 = vpop.f32.mrb[0].mxu0
      %736 = vmatprep.mubr.bf16.mxu0 0
      %737 = vmatmul.mubr.bf16.gmra.mrb[0].mxu0 %v680
      %v738 = vpop.f32.mrb[0].mxu0
      %v739 = vadd.f32 0.0, %v738
      %v740 = vpop.f32.mrb[0].mxu0
      %v741 = vpop.f32.mrb[0].mxu0
      %v742 = vadd.f32 0.0, %v741
      %v743 = vpop.f32.mrb[0].mxu0
      %744 = vmatprep.mubr.bf16.mxu0 0
      %745 = vmatmul.mubr.bf16.gmra.mrb[0].mxu0 %v683
      %v746 = vpop.f32.mrb[0].mxu0
      %v747 = vadd.f32 0.0, %v746
      %v748 = vpop.f32.mrb[0].mxu0
      %v749 = vpop.f32.mrb[0].mxu0
      %v750 = vadd.f32 0.0, %v749
      %v751 = vpop.f32.mrb[0].mxu0
      %752 = vdwg.mxu0
      %v753 = vadd.f32 %v549, %v723
      %v754 = vadd.f32 %v552, %v726
      %v755 = vadd.f32 %v557, %v731
      %v756 = vadd.f32 %v560, %v734
      %v757 = vadd.f32 %v565, %v739
      %v758 = vadd.f32 %v568, %v742
      %v759 = vadd.f32 %v573, %v747
      %v760 = vadd.f32 %v576, %v750
      %s761 = scalar_lea.vmem %s1, 6
      %v762 = vld [vmem:[%s761] sm:$0x3]
      %v771 = vunpack.c.l.b16 %v243
      %v772 = vunpack.c.l.b16 %v246
      %v773 = vunpack.c.l.b16 %v249
      %v774 = vunpack.c.l.b16 %v252
      %v775 = vunpack.c.l.b16 %v255
      %v776 = vunpack.c.l.b16 %v258
      %v777 = vunpack.c.l.b16 %v261
      %v778 = vunpack.c.l.b16 %v264
      %v779 = vpack.c.b16 %v772, %v771
      %v780 = vpack.c.b16 %v774, %v773
      %v781 = vpack.c.b16 %v776, %v775
      %v782 = vpack.c.b16 %v778, %v777
      %v784 = vsel %vm397, %v779, 0
      %v787 = vsel %vm397, %v780, 0
      %v790 = vsel %vm397, %v781, 0
      %v793 = vsel %vm397, %v782, 0
      %v796 = vsel %vm410, %v762, 0
      %798 = vmatprep.subr.bf16.mxu0 0
      %799 = vmatpush1.bf16.msra.mxu0 %v796
      %800 = vmatprep.subr.bf16.mxu0 0
      %801 = vmatpush1.bf16.msra.mxu0 0
      %802 = vmatprep.subr.bf16.mxu0 0
      %803 = vmatpush1.bf16.msra.mxu0 0
      %804 = vmatprep.subr.bf16.mxu0 0
      %805 = vmatpush1.bf16.msra.mxu0 0
      %806 = vmatprep.subr.bf16.mxu0 0
      %807 = vmatpush1.bf16.msra.mxu0 0
      %808 = vmatprep.subr.bf16.mxu0 0
      %809 = vmatpush1.bf16.msra.mxu0 0
      %810 = vmatprep.subr.bf16.mxu0 0
      %811 = vmatpush1.bf16.msra.mxu0 0
      %812 = vmatprep.subr.bf16.mxu0 0
      %813 = vmatpush1.bf16.msra.mxu0 0
      %814 = vmatprep.subr.bf16.mxu0 0
      %815 = vmatpush1.bf16.msra.mxu0 0
      %816 = vmatprep.subr.bf16.mxu0 0
      %817 = vmatpush1.bf16.msra.mxu0 0
      %818 = vmatprep.subr.bf16.mxu0 0
      %819 = vmatpush1.bf16.msra.mxu0 0
      %820 = vmatprep.subr.bf16.mxu0 0
      %821 = vmatpush1.bf16.msra.mxu0 0
      %822 = vmatprep.subr.bf16.mxu0 0
      %823 = vmatpush1.bf16.msra.mxu0 0
      %824 = vmatprep.subr.bf16.mxu0 0
      %825 = vmatpush1.bf16.msra.mxu0 0
      %826 = vmatprep.subr.bf16.mxu0 0
      %827 = vmatpush1.bf16.msra.mxu0 0
      %828 = vmatprep.subr.bf16.mxu0 0
      %829 = vmatpush1.bf16.msra.mxu0 0
      %830 = vmatprep.mubr.bf16.mxu0 0
      %831 = vmatmul.mubr.bf16.gmra.mrb[0].mxu0 %v784
      %v832 = vpop.f32.mrb[0].mxu0
      %v833 = vadd.f32 0.0, %v832
      %v834 = vpop.f32.mrb[0].mxu0
      %v835 = vpop.f32.mrb[0].mxu0
      %v836 = vadd.f32 0.0, %v835
      %v837 = vpop.f32.mrb[0].mxu0
      %838 = vmatprep.mubr.bf16.mxu0 0
      %839 = vmatmul.mubr.bf16.gmra.mrb[0].mxu0 %v787
      %v840 = vpop.f32.mrb[0].mxu0
      %v841 = vadd.f32 0.0, %v840
      %v842 = vpop.f32.mrb[0].mxu0
      %v843 = vpop.f32.mrb[0].mxu0
      %v844 = vadd.f32 0.0, %v843
      %v845 = vpop.f32.mrb[0].mxu0
      %846 = vmatprep.mubr.bf16.mxu0 0
      %847 = vmatmul.mubr.bf16.gmra.mrb[0].mxu0 %v790
      %v848 = vpop.f32.mrb[0].mxu0
      %v849 = vadd.f32 0.0, %v848
      %v850 = vpop.f32.mrb[0].mxu0
      %v851 = vpop.f32.mrb[0].mxu0
      %v852 = vadd.f32 0.0, %v851
      %v853 = vpop.f32.mrb[0].mxu0
      %854 = vmatprep.mubr.bf16.mxu0 0
      %855 = vmatmul.mubr.bf16.gmra.mrb[0].mxu0 %v793
      %v856 = vpop.f32.mrb[0].mxu0
      %v857 = vadd.f32 0.0, %v856
      %v858 = vpop.f32.mrb[0].mxu0
      %v859 = vpop.f32.mrb[0].mxu0
      %v860 = vadd.f32 0.0, %v859
      %v861 = vpop.f32.mrb[0].mxu0
      %862 = vdwg.mxu0
      %v863 = vadd.f32 %v753, %v833
      %v864 = vadd.f32 %v754, %v836
      %v865 = vadd.f32 %v755, %v841
      %v866 = vadd.f32 %v756, %v844
      %v867 = vadd.f32 %v757, %v849
      %v868 = vadd.f32 %v758, %v852
      %v869 = vadd.f32 %v759, %v857
      %v870 = vadd.f32 %v760, %v860
      %v872 = vshrl.u32 %v244, 16
      %v874 = vrot.slane %v872, 4
      %v875 = vshll.u32 %v244, 16
      %v877 = vrot.slane %v875, 5
      %v878 = vor.u32 %v874, %v877
      %v879 = vrot.slane %v878, 4
      %v881 = vshll.u32 %v245, 16
      %v883 = vrot.slane %v881, 5
      %v884 = vsel %vm270, %v879, %v883
      %v886 = vshrl.u32 %v247, 16
      %v888 = vrot.slane %v886, 4
      %v889 = vshll.u32 %v247, 16
      %v891 = vrot.slane %v889, 5
      %v892 = vor.u32 %v888, %v891
      %v893 = vrot.slane %v892, 4
      %v895 = vshll.u32 %v248, 16
      %v897 = vrot.slane %v895, 5
      %v898 = vsel %vm270, %v893, %v897
      %v900 = vshrl.u32 %v250, 16
      %v902 = vrot.slane %v900, 4
      %v903 = vshll.u32 %v250, 16
      %v905 = vrot.slane %v903, 5
      %v906 = vor.u32 %v902, %v905
      %v907 = vrot.slane %v906, 4
      %v909 = vshll.u32 %v251, 16
      %v911 = vrot.slane %v909, 5
      %v912 = vsel %vm270, %v907, %v911
      %v914 = vshrl.u32 %v253, 16
      %v916 = vrot.slane %v914, 4
      %v917 = vshll.u32 %v253, 16
      %v919 = vrot.slane %v917, 5
      %v920 = vor.u32 %v916, %v919
      %v921 = vrot.slane %v920, 4
      %v923 = vshll.u32 %v254, 16
      %v925 = vrot.slane %v923, 5
      %v926 = vsel %vm270, %v921, %v925
      %v928 = vshrl.u32 %v256, 16
      %v930 = vrot.slane %v928, 4
      %v931 = vshll.u32 %v256, 16
      %v933 = vrot.slane %v931, 5
      %v934 = vor.u32 %v930, %v933
      %v935 = vrot.slane %v934, 4
      %v937 = vshll.u32 %v257, 16
      %v939 = vrot.slane %v937, 5
      %v940 = vsel %vm270, %v935, %v939
      %v942 = vshrl.u32 %v259, 16
      %v944 = vrot.slane %v942, 4
      %v945 = vshll.u32 %v259, 16
      %v947 = vrot.slane %v945, 5
      %v948 = vor.u32 %v944, %v947
      %v949 = vrot.slane %v948, 4
      %v951 = vshll.u32 %v260, 16
      %v953 = vrot.slane %v951, 5
      %v954 = vsel %vm270, %v949, %v953
      %v956 = vshrl.u32 %v262, 16
      %v958 = vrot.slane %v956, 4
      %v959 = vshll.u32 %v262, 16
      %v961 = vrot.slane %v959, 5
      %v962 = vor.u32 %v958, %v961
      %v963 = vrot.slane %v962, 4
      %v965 = vshll.u32 %v263, 16
      %v967 = vrot.slane %v965, 5
      %v968 = vsel %vm270, %v963, %v967
      %v970 = vshrl.u32 %v265, 16
      %v972 = vrot.slane %v970, 4
      %v973 = vshll.u32 %v265, 16
      %v975 = vrot.slane %v973, 5
      %v976 = vor.u32 %v972, %v975
      %v977 = vrot.slane %v976, 4
      %v979 = vshll.u32 %v266, 16
      %v981 = vrot.slane %v979, 5
      %v982 = vsel %vm270, %v977, %v981
      %s983 = scalar_lea.vmem %s1, 8
      %v984 = vld [vmem:[%s983] sm:$0x3]
      %v985 = vunpack.c.l.b16 %v884
      %v986 = vunpack.c.l.b16 %v898
      %v987 = vunpack.c.l.b16 %v912
      %v988 = vunpack.c.l.b16 %v926
      %v989 = vunpack.c.l.b16 %v940
      %v990 = vunpack.c.l.b16 %v954
      %v991 = vunpack.c.l.b16 %v968
      %v992 = vunpack.c.l.b16 %v982
      %v993 = vpack.c.b16 %v986, %v985
      %v994 = vpack.c.b16 %v988, %v987
      %v995 = vpack.c.b16 %v990, %v989
      %v996 = vpack.c.b16 %v992, %v991
      %v998 = vsel %vm397, %v993, 0
      %v1001 = vsel %vm397, %v994, 0
      %v1004 = vsel %vm397, %v995, 0
      %v1007 = vsel %vm397, %v996, 0
      %v1010 = vsel %vm410, %v984, 0
      %1012 = vmatprep.subr.bf16.mxu0 0
      %1013 = vmatpush1.bf16.msra.mxu0 %v1010
      %1014 = vmatprep.subr.bf16.mxu0 0
      %1015 = vmatpush1.bf16.msra.mxu0 0
      %1016 = vmatprep.subr.bf16.mxu0 0
      %1017 = vmatpush1.bf16.msra.mxu0 0
      %1018 = vmatprep.subr.bf16.mxu0 0
      %1019 = vmatpush1.bf16.msra.mxu0 0
      %1020 = vmatprep.subr.bf16.mxu0 0
      %1021 = vmatpush1.bf16.msra.mxu0 0
      %1022 = vmatprep.subr.bf16.mxu0 0
      %1023 = vmatpush1.bf16.msra.mxu0 0
      %1024 = vmatprep.subr.bf16.mxu0 0
      %1025 = vmatpush1.bf16.msra.mxu0 0
      %1026 = vmatprep.subr.bf16.mxu0 0
      %1027 = vmatpush1.bf16.msra.mxu0 0
      %1028 = vmatprep.subr.bf16.mxu0 0
      %1029 = vmatpush1.bf16.msra.mxu0 0
      %1030 = vmatprep.subr.bf16.mxu0 0
      %1031 = vmatpush1.bf16.msra.mxu0 0
      %1032 = vmatprep.subr.bf16.mxu0 0
      %1033 = vmatpush1.bf16.msra.mxu0 0
      %1034 = vmatprep.subr.bf16.mxu0 0
      %1035 = vmatpush1.bf16.msra.mxu0 0
      %1036 = vmatprep.subr.bf16.mxu0 0
      %1037 = vmatpush1.bf16.msra.mxu0 0
      %1038 = vmatprep.subr.bf16.mxu0 0
      %1039 = vmatpush1.bf16.msra.mxu0 0
      %1040 = vmatprep.subr.bf16.mxu0 0
      %1041 = vmatpush1.bf16.msra.mxu0 0
      %1042 = vmatprep.subr.bf16.mxu0 0
      %1043 = vmatpush1.bf16.msra.mxu0 0
      %1044 = vmatprep.mubr.bf16.mxu0 0
      %1045 = vmatmul.mubr.bf16.gmra.mrb[0].mxu0 %v998
      %v1046 = vpop.f32.mrb[0].mxu0
      %v1047 = vadd.f32 0.0, %v1046
      %v1048 = vpop.f32.mrb[0].mxu0
      %v1049 = vpop.f32.mrb[0].mxu0
      %v1050 = vadd.f32 0.0, %v1049
      %v1051 = vpop.f32.mrb[0].mxu0
      %1052 = vmatprep.mubr.bf16.mxu0 0
      %1053 = vmatmul.mubr.bf16.gmra.mrb[0].mxu0 %v1001
      %v1054 = vpop.f32.mrb[0].mxu0
      %v1055 = vadd.f32 0.0, %v1054
      %v1056 = vpop.f32.mrb[0].mxu0
      %v1057 = vpop.f32.mrb[0].mxu0
      %v1058 = vadd.f32 0.0, %v1057
      %v1059 = vpop.f32.mrb[0].mxu0
      %1060 = vmatprep.mubr.bf16.mxu0 0
      %1061 = vmatmul.mubr.bf16.gmra.mrb[0].mxu0 %v1004
      %v1062 = vpop.f32.mrb[0].mxu0
      %v1063 = vadd.f32 0.0, %v1062
      %v1064 = vpop.f32.mrb[0].mxu0
      %v1065 = vpop.f32.mrb[0].mxu0
      %v1066 = vadd.f32 0.0, %v1065
      %v1067 = vpop.f32.mrb[0].mxu0
      %1068 = vmatprep.mubr.bf16.mxu0 0
      %1069 = vmatmul.mubr.bf16.gmra.mrb[0].mxu0 %v1007
      %v1070 = vpop.f32.mrb[0].mxu0
      %v1071 = vadd.f32 0.0, %v1070
      %v1072 = vpop.f32.mrb[0].mxu0
      %v1073 = vpop.f32.mrb[0].mxu0
      %v1074 = vadd.f32 0.0, %v1073
      %v1075 = vpop.f32.mrb[0].mxu0
      %1076 = vdwg.mxu0
      %v1077 = vadd.f32 %v863, %v1047
      %v1078 = vadd.f32 %v864, %v1050
      %v1079 = vadd.f32 %v865, %v1055
      %v1080 = vadd.f32 %v866, %v1058
      %v1081 = vadd.f32 %v867, %v1063
      %v1082 = vadd.f32 %v868, %v1066
      %v1083 = vadd.f32 %v869, %v1071
      %v1084 = vadd.f32 %v870, %v1074
      %v1086 = vshrl.u32 %v243, 16
      %v1088 = vrot.slane %v1086, 4
      %v1089 = vshll.u32 %v243, 16
      %v1091 = vrot.slane %v1089, 5
      %v1092 = vor.u32 %v1088, %v1091
      %v1093 = vrot.slane %v1092, 4
      %v1094 = vsel %vm270, %v1093, %v877
      %v1096 = vshrl.u32 %v246, 16
      %v1098 = vrot.slane %v1096, 4
      %v1099 = vshll.u32 %v246, 16
      %v1101 = vrot.slane %v1099, 5
      %v1102 = vor.u32 %v1098, %v1101
      %v1103 = vrot.slane %v1102, 4
      %v1104 = vsel %vm270, %v1103, %v891
      %v1106 = vshrl.u32 %v249, 16
      %v1108 = vrot.slane %v1106, 4
      %v1109 = vshll.u32 %v249, 16
      %v1111 = vrot.slane %v1109, 5
      %v1112 = vor.u32 %v1108, %v1111
      %v1113 = vrot.slane %v1112, 4
      %v1114 = vsel %vm270, %v1113, %v905
      %v1116 = vshrl.u32 %v252, 16
      %v1118 = vrot.slane %v1116, 4
      %v1119 = vshll.u32 %v252, 16
      %v1121 = vrot.slane %v1119, 5
      %v1122 = vor.u32 %v1118, %v1121
      %v1123 = vrot.slane %v1122, 4
      %v1124 = vsel %vm270, %v1123, %v919
      %v1126 = vshrl.u32 %v255, 16
      %v1128 = vrot.slane %v1126, 4
      %v1129 = vshll.u32 %v255, 16
      %v1131 = vrot.slane %v1129, 5
      %v1132 = vor.u32 %v1128, %v1131
      %v1133 = vrot.slane %v1132, 4
      %v1134 = vsel %vm270, %v1133, %v933
      %v1136 = vshrl.u32 %v258, 16
      %v1138 = vrot.slane %v1136, 4
      %v1139 = vshll.u32 %v258, 16
      %v1141 = vrot.slane %v1139, 5
      %v1142 = vor.u32 %v1138, %v1141
      %v1143 = vrot.slane %v1142, 4
      %v1144 = vsel %vm270, %v1143, %v947
      %v1146 = vshrl.u32 %v261, 16
      %v1148 = vrot.slane %v1146, 4
      %v1149 = vshll.u32 %v261, 16
      %v1151 = vrot.slane %v1149, 5
      %v1152 = vor.u32 %v1148, %v1151
      %v1153 = vrot.slane %v1152, 4
      %v1154 = vsel %vm270, %v1153, %v961
      %v1156 = vshrl.u32 %v264, 16
      %v1158 = vrot.slane %v1156, 4
      %v1159 = vshll.u32 %v264, 16
      %v1161 = vrot.slane %v1159, 5
      %v1162 = vor.u32 %v1158, %v1161
      %v1163 = vrot.slane %v1162, 4
      %v1164 = vsel %vm270, %v1163, %v975
      %s1165 = scalar_lea.vmem %s1, 10
      %v1166 = vld [vmem:[%s1165] sm:$0x3]
      %v1167 = vunpack.c.l.b16 %v1094
      %v1168 = vunpack.c.l.b16 %v1104
      %v1169 = vunpack.c.l.b16 %v1114
      %v1170 = vunpack.c.l.b16 %v1124
      %v1171 = vunpack.c.l.b16 %v1134
      %v1172 = vunpack.c.l.b16 %v1144
      %v1173 = vunpack.c.l.b16 %v1154
      %v1174 = vunpack.c.l.b16 %v1164
      %v1175 = vpack.c.b16 %v1168, %v1167
      %v1176 = vpack.c.b16 %v1170, %v1169
      %v1177 = vpack.c.b16 %v1172, %v1171
      %v1178 = vpack.c.b16 %v1174, %v1173
      %v1180 = vsel %vm397, %v1175, 0
      %v1183 = vsel %vm397, %v1176, 0
      %v1186 = vsel %vm397, %v1177, 0
      %v1189 = vsel %vm397, %v1178, 0
      %v1192 = vsel %vm410, %v1166, 0
      %1194 = vmatprep.subr.bf16.mxu0 0
      %1195 = vmatpush1.bf16.msra.mxu0 %v1192
      %1196 = vmatprep.subr.bf16.mxu0 0
      %1197 = vmatpush1.bf16.msra.mxu0 0
      %1198 = vmatprep.subr.bf16.mxu0 0
      %1199 = vmatpush1.bf16.msra.mxu0 0
      %1200 = vmatprep.subr.bf16.mxu0 0
      %1201 = vmatpush1.bf16.msra.mxu0 0
      %1202 = vmatprep.subr.bf16.mxu0 0
      %1203 = vmatpush1.bf16.msra.mxu0 0
      %1204 = vmatprep.subr.bf16.mxu0 0
      %1205 = vmatpush1.bf16.msra.mxu0 0
      %1206 = vmatprep.subr.bf16.mxu0 0
      %1207 = vmatpush1.bf16.msra.mxu0 0
      %1208 = vmatprep.subr.bf16.mxu0 0
      %1209 = vmatpush1.bf16.msra.mxu0 0
      %1210 = vmatprep.subr.bf16.mxu0 0
      %1211 = vmatpush1.bf16.msra.mxu0 0
      %1212 = vmatprep.subr.bf16.mxu0 0
      %1213 = vmatpush1.bf16.msra.mxu0 0
      %1214 = vmatprep.subr.bf16.mxu0 0
      %1215 = vmatpush1.bf16.msra.mxu0 0
      %1216 = vmatprep.subr.bf16.mxu0 0
      %1217 = vmatpush1.bf16.msra.mxu0 0
      %1218 = vmatprep.subr.bf16.mxu0 0
      %1219 = vmatpush1.bf16.msra.mxu0 0
      %1220 = vmatprep.subr.bf16.mxu0 0
      %1221 = vmatpush1.bf16.msra.mxu0 0
      %1222 = vmatprep.subr.bf16.mxu0 0
      %1223 = vmatpush1.bf16.msra.mxu0 0
      %1224 = vmatprep.subr.bf16.mxu0 0
      %1225 = vmatpush1.bf16.msra.mxu0 0
      %1226 = vmatprep.mubr.bf16.mxu0 0
      %1227 = vmatmul.mubr.bf16.gmra.mrb[0].mxu0 %v1180
      %v1228 = vpop.f32.mrb[0].mxu0
      %v1229 = vadd.f32 0.0, %v1228
      %v1230 = vpop.f32.mrb[0].mxu0
      %v1231 = vpop.f32.mrb[0].mxu0
      %v1232 = vadd.f32 0.0, %v1231
      %v1233 = vpop.f32.mrb[0].mxu0
      %1234 = vmatprep.mubr.bf16.mxu0 0
      %1235 = vmatmul.mubr.bf16.gmra.mrb[0].mxu0 %v1183
      %v1236 = vpop.f32.mrb[0].mxu0
      %v1237 = vadd.f32 0.0, %v1236
      %v1238 = vpop.f32.mrb[0].mxu0
      %v1239 = vpop.f32.mrb[0].mxu0
      %v1240 = vadd.f32 0.0, %v1239
      %v1241 = vpop.f32.mrb[0].mxu0
      %1242 = vmatprep.mubr.bf16.mxu0 0
      %1243 = vmatmul.mubr.bf16.gmra.mrb[0].mxu0 %v1186
      %v1244 = vpop.f32.mrb[0].mxu0
      %v1245 = vadd.f32 0.0, %v1244
      %v1246 = vpop.f32.mrb[0].mxu0
      %v1247 = vpop.f32.mrb[0].mxu0
      %v1248 = vadd.f32 0.0, %v1247
      %v1249 = vpop.f32.mrb[0].mxu0
      %1250 = vmatprep.mubr.bf16.mxu0 0
      %1251 = vmatmul.mubr.bf16.gmra.mrb[0].mxu0 %v1189
      %v1252 = vpop.f32.mrb[0].mxu0
      %v1253 = vadd.f32 0.0, %v1252
      %v1254 = vpop.f32.mrb[0].mxu0
      %v1255 = vpop.f32.mrb[0].mxu0
      %v1256 = vadd.f32 0.0, %v1255
      %v1257 = vpop.f32.mrb[0].mxu0
      %1258 = vdwg.mxu0
      %v1259 = vadd.f32 %v1077, %v1229
      %v1260 = vadd.f32 %v1078, %v1232
      %v1261 = vadd.f32 %v1079, %v1237
      %v1262 = vadd.f32 %v1080, %v1240
      %v1263 = vadd.f32 %v1081, %v1245
      %v1264 = vadd.f32 %v1082, %v1248
      %v1265 = vadd.f32 %v1083, %v1253
      %v1266 = vadd.f32 %v1084, %v1256
      %s1267 = scalar_lea.vmem %s1, 12
      %v1268 = vld [vmem:[%s1267] sm:$0x3]
      %v1270 = vunpack.c.l.b16 %v240
      %v1271 = vpack.c.b16 %v489, %v488
      %v1272 = vpack.c.b16 %v491, %v490
      %v1273 = vpack.c.b16 %v493, %v492
      %v1274 = vpack.c.b16 %v1270, %v494
      %v1276 = vsel %vm397, %v1271, 0
      %v1279 = vsel %vm397, %v1272, 0
      %v1282 = vsel %vm397, %v1273, 0
      %v1285 = vsel %vm397, %v1274, 0
      %v1288 = vsel %vm410, %v1268, 0
      %1290 = vmatprep.subr.bf16.mxu0 0
      %1291 = vmatpush1.bf16.msra.mxu0 %v1288
      %1292 = vmatprep.subr.bf16.mxu0 0
      %1293 = vmatpush1.bf16.msra.mxu0 0
      %1294 = vmatprep.subr.bf16.mxu0 0
      %1295 = vmatpush1.bf16.msra.mxu0 0
      %1296 = vmatprep.subr.bf16.mxu0 0
      %1297 = vmatpush1.bf16.msra.mxu0 0
      %1298 = vmatprep.subr.bf16.mxu0 0
      %1299 = vmatpush1.bf16.msra.mxu0 0
      %1300 = vmatprep.subr.bf16.mxu0 0
      %1301 = vmatpush1.bf16.msra.mxu0 0
      %1302 = vmatprep.subr.bf16.mxu0 0
      %1303 = vmatpush1.bf16.msra.mxu0 0
      %1304 = vmatprep.subr.bf16.mxu0 0
      %1305 = vmatpush1.bf16.msra.mxu0 0
      %1306 = vmatprep.subr.bf16.mxu0 0
      %1307 = vmatpush1.bf16.msra.mxu0 0
      %1308 = vmatprep.subr.bf16.mxu0 0
      %1309 = vmatpush1.bf16.msra.mxu0 0
      %1310 = vmatprep.subr.bf16.mxu0 0
      %1311 = vmatpush1.bf16.msra.mxu0 0
      %1312 = vmatprep.subr.bf16.mxu0 0
      %1313 = vmatpush1.bf16.msra.mxu0 0
      %1314 = vmatprep.subr.bf16.mxu0 0
      %1315 = vmatpush1.bf16.msra.mxu0 0
      %1316 = vmatprep.subr.bf16.mxu0 0
      %1317 = vmatpush1.bf16.msra.mxu0 0
      %1318 = vmatprep.subr.bf16.mxu0 0
      %1319 = vmatpush1.bf16.msra.mxu0 0
      %1320 = vmatprep.subr.bf16.mxu0 0
      %1321 = vmatpush1.bf16.msra.mxu0 0
      %1322 = vmatprep.mubr.bf16.mxu0 0
      %1323 = vmatmul.mubr.bf16.gmra.mrb[0].mxu0 %v1276
      %v1324 = vpop.f32.mrb[0].mxu0
      %v1325 = vadd.f32 0.0, %v1324
      %v1326 = vpop.f32.mrb[0].mxu0
      %v1327 = vpop.f32.mrb[0].mxu0
      %v1328 = vadd.f32 0.0, %v1327
      %v1329 = vpop.f32.mrb[0].mxu0
      %1330 = vmatprep.mubr.bf16.mxu0 0
      %1331 = vmatmul.mubr.bf16.gmra.mrb[0].mxu0 %v1279
      %v1332 = vpop.f32.mrb[0].mxu0
      %v1333 = vadd.f32 0.0, %v1332
      %v1334 = vpop.f32.mrb[0].mxu0
      %v1335 = vpop.f32.mrb[0].mxu0
      %v1336 = vadd.f32 0.0, %v1335
      %v1337 = vpop.f32.mrb[0].mxu0
      %1338 = vmatprep.mubr.bf16.mxu0 0
      %1339 = vmatmul.mubr.bf16.gmra.mrb[0].mxu0 %v1282
      %v1340 = vpop.f32.mrb[0].mxu0
      %v1341 = vadd.f32 0.0, %v1340
      %v1342 = vpop.f32.mrb[0].mxu0
      %v1343 = vpop.f32.mrb[0].mxu0
      %v1344 = vadd.f32 0.0, %v1343
      %v1345 = vpop.f32.mrb[0].mxu0
      %1346 = vmatprep.mubr.bf16.mxu0 0
      %1347 = vmatmul.mubr.bf16.gmra.mrb[0].mxu0 %v1285
      %v1348 = vpop.f32.mrb[0].mxu0
      %v1349 = vadd.f32 0.0, %v1348
      %v1350 = vpop.f32.mrb[0].mxu0
      %v1351 = vpop.f32.mrb[0].mxu0
      %v1352 = vadd.f32 0.0, %v1351
      %v1353 = vpop.f32.mrb[0].mxu0
      %1354 = vdwg.mxu0
      %v1355 = vadd.f32 %v1259, %v1325
      %v1356 = vadd.f32 %v1260, %v1328
      %v1357 = vadd.f32 %v1261, %v1333
      %v1358 = vadd.f32 %v1262, %v1336
      %v1359 = vadd.f32 %v1263, %v1341
      %v1360 = vadd.f32 %v1264, %v1344
      %v1361 = vadd.f32 %v1265, %v1349
      %v1362 = vadd.f32 %v1266, %v1352
      %v1364 = vshrl.u32 %v241, 16
      %v1366 = vrot.slane %v1364, 4
      %v1367 = vshll.u32 %v241, 16
      %v1369 = vrot.slane %v1367, 5
      %v1370 = vor.u32 %v1366, %v1369
      %v1371 = vrot.slane %v1370, 4
      %v1373 = vshll.u32 %v242, 16
      %v1375 = vrot.slane %v1373, 5
      %v1376 = vsel %vm270, %v1371, %v1375
      %s1377 = scalar_lea.vmem %s1, 14
      %v1378 = vld [vmem:[%s1377] sm:$0x3]
      %v1379 = vunpack.c.l.b16 %v1376
      %v1380 = vpack.c.b16 %v387, %v386
      %v1381 = vpack.c.b16 %v389, %v388
      %v1382 = vpack.c.b16 %v391, %v390
      %v1383 = vpack.c.b16 %v1379, %v392
      %v1385 = vsel %vm397, %v1380, 0
      %v1388 = vsel %vm397, %v1381, 0
      %v1391 = vsel %vm397, %v1382, 0
      %v1394 = vsel %vm397, %v1383, 0
      %v1397 = vsel %vm410, %v1378, 0
      %1399 = vmatprep.subr.bf16.mxu0 0
      %1400 = vmatpush1.bf16.msra.mxu0 %v1397
      %1401 = vmatprep.subr.bf16.mxu0 0
      %1402 = vmatpush1.bf16.msra.mxu0 0
      %1403 = vmatprep.subr.bf16.mxu0 0
      %1404 = vmatpush1.bf16.msra.mxu0 0
      %1405 = vmatprep.subr.bf16.mxu0 0
      %1406 = vmatpush1.bf16.msra.mxu0 0
      %1407 = vmatprep.subr.bf16.mxu0 0
      %1408 = vmatpush1.bf16.msra.mxu0 0
      %1409 = vmatprep.subr.bf16.mxu0 0
      %1410 = vmatpush1.bf16.msra.mxu0 0
      %1411 = vmatprep.subr.bf16.mxu0 0
      %1412 = vmatpush1.bf16.msra.mxu0 0
      %1413 = vmatprep.subr.bf16.mxu0 0
      %1414 = vmatpush1.bf16.msra.mxu0 0
      %1415 = vmatprep.subr.bf16.mxu0 0
      %1416 = vmatpush1.bf16.msra.mxu0 0
      %1417 = vmatprep.subr.bf16.mxu0 0
      %1418 = vmatpush1.bf16.msra.mxu0 0
      %1419 = vmatprep.subr.bf16.mxu0 0
      %1420 = vmatpush1.bf16.msra.mxu0 0
      %1421 = vmatprep.subr.bf16.mxu0 0
      %1422 = vmatpush1.bf16.msra.mxu0 0
      %1423 = vmatprep.subr.bf16.mxu0 0
      %1424 = vmatpush1.bf16.msra.mxu0 0
      %1425 = vmatprep.subr.bf16.mxu0 0
      %1426 = vmatpush1.bf16.msra.mxu0 0
      %1427 = vmatprep.subr.bf16.mxu0 0
      %1428 = vmatpush1.bf16.msra.mxu0 0
      %1429 = vmatprep.subr.bf16.mxu0 0
      %1430 = vmatpush1.bf16.msra.mxu0 0
      %1431 = vmatprep.mubr.bf16.mxu0 0
      %1432 = vmatmul.mubr.bf16.gmra.mrb[0].mxu0 %v1385
      %v1433 = vpop.f32.mrb[0].mxu0
      %v1434 = vadd.f32 0.0, %v1433
      %v1435 = vpop.f32.mrb[0].mxu0
      %v1436 = vpop.f32.mrb[0].mxu0
      %v1437 = vadd.f32 0.0, %v1436
      %v1438 = vpop.f32.mrb[0].mxu0
      %1439 = vmatprep.mubr.bf16.mxu0 0
      %1440 = vmatmul.mubr.bf16.gmra.mrb[0].mxu0 %v1388
      %v1441 = vpop.f32.mrb[0].mxu0
      %v1442 = vadd.f32 0.0, %v1441
      %v1443 = vpop.f32.mrb[0].mxu0
      %v1444 = vpop.f32.mrb[0].mxu0
      %v1445 = vadd.f32 0.0, %v1444
      %v1446 = vpop.f32.mrb[0].mxu0
      %1447 = vmatprep.mubr.bf16.mxu0 0
      %1448 = vmatmul.mubr.bf16.gmra.mrb[0].mxu0 %v1391
      %v1449 = vpop.f32.mrb[0].mxu0
      %v1450 = vadd.f32 0.0, %v1449
      %v1451 = vpop.f32.mrb[0].mxu0
      %v1452 = vpop.f32.mrb[0].mxu0
      %v1453 = vadd.f32 0.0, %v1452
      %v1454 = vpop.f32.mrb[0].mxu0
      %1455 = vmatprep.mubr.bf16.mxu0 0
      %1456 = vmatmul.mubr.bf16.gmra.mrb[0].mxu0 %v1394
      %v1457 = vpop.f32.mrb[0].mxu0
      %v1458 = vadd.f32 0.0, %v1457
      %v1459 = vpop.f32.mrb[0].mxu0
      %v1460 = vpop.f32.mrb[0].mxu0
      %v1461 = vadd.f32 0.0, %v1460
      %v1462 = vpop.f32.mrb[0].mxu0
      %1463 = vdwg.mxu0
      %v1464 = vadd.f32 %v1355, %v1434
      %v1465 = vadd.f32 %v1356, %v1437
      %v1466 = vadd.f32 %v1357, %v1442
      %v1467 = vadd.f32 %v1358, %v1445
      %v1468 = vadd.f32 %v1359, %v1450
      %v1469 = vadd.f32 %v1360, %v1453
      %v1470 = vadd.f32 %v1361, %v1458
      %v1471 = vadd.f32 %v1362, %v1461
      %v1473 = vshrl.u32 %v240, 16
      %v1475 = vrot.slane %v1473, 4
      %v1476 = vshll.u32 %v240, 16
      %v1478 = vrot.slane %v1476, 5
      %v1479 = vor.u32 %v1475, %v1478
      %v1480 = vrot.slane %v1479, 4
      %v1481 = vsel %vm270, %v1480, %v1369
      %s1482 = scalar_lea.vmem %s1, 16
      %v1483 = vld [vmem:[%s1482] sm:$0x3]
      %v1484 = vunpack.c.l.b16 %v1481
      %v1485 = vpack.c.b16 %v663, %v662
      %v1486 = vpack.c.b16 %v665, %v664
      %v1487 = vpack.c.b16 %v667, %v666
      %v1488 = vpack.c.b16 %v1484, %v668
      %v1490 = vsel %vm397, %v1485, 0
      %v1493 = vsel %vm397, %v1486, 0
      %v1496 = vsel %vm397, %v1487, 0
      %v1499 = vsel %vm397, %v1488, 0
      %v1502 = vsel %vm410, %v1483, 0
      %1504 = vmatprep.subr.bf16.mxu0 0
      %1505 = vmatpush1.bf16.msra.mxu0 %v1502
      %1506 = vmatprep.subr.bf16.mxu0 0
      %1507 = vmatpush1.bf16.msra.mxu0 0
      %1508 = vmatprep.subr.bf16.mxu0 0
      %1509 = vmatpush1.bf16.msra.mxu0 0
      %1510 = vmatprep.subr.bf16.mxu0 0
      %1511 = vmatpush1.bf16.msra.mxu0 0
      %1512 = vmatprep.subr.bf16.mxu0 0
      %1513 = vmatpush1.bf16.msra.mxu0 0
      %1514 = vmatprep.subr.bf16.mxu0 0
      %1515 = vmatpush1.bf16.msra.mxu0 0
      %1516 = vmatprep.subr.bf16.mxu0 0
      %1517 = vmatpush1.bf16.msra.mxu0 0
      %1518 = vmatprep.subr.bf16.mxu0 0
      %1519 = vmatpush1.bf16.msra.mxu0 0
      %1520 = vmatprep.subr.bf16.mxu0 0
      %1521 = vmatpush1.bf16.msra.mxu0 0
      %1522 = vmatprep.subr.bf16.mxu0 0
      %1523 = vmatpush1.bf16.msra.mxu0 0
      %1524 = vmatprep.subr.bf16.mxu0 0
      %1525 = vmatpush1.bf16.msra.mxu0 0
      %1526 = vmatprep.subr.bf16.mxu0 0
      %1527 = vmatpush1.bf16.msra.mxu0 0
      %1528 = vmatprep.subr.bf16.mxu0 0
      %1529 = vmatpush1.bf16.msra.mxu0 0
      %1530 = vmatprep.subr.bf16.mxu0 0
      %1531 = vmatpush1.bf16.msra.mxu0 0
      %1532 = vmatprep.subr.bf16.mxu0 0
      %1533 = vmatpush1.bf16.msra.mxu0 0
      %1534 = vmatprep.subr.bf16.mxu0 0
      %1535 = vmatpush1.bf16.msra.mxu0 0
      %1536 = vmatprep.mubr.bf16.mxu0 0
      %1537 = vmatmul.mubr.bf16.gmra.mrb[0].mxu0 %v1490
      %v1538 = vpop.f32.mrb[0].mxu0
      %v1539 = vadd.f32 0.0, %v1538
      %v1540 = vpop.f32.mrb[0].mxu0
      %v1541 = vpop.f32.mrb[0].mxu0
      %v1542 = vadd.f32 0.0, %v1541
      %v1543 = vpop.f32.mrb[0].mxu0
      %1544 = vmatprep.mubr.bf16.mxu0 0
      %1545 = vmatmul.mubr.bf16.gmra.mrb[0].mxu0 %v1493
      %v1546 = vpop.f32.mrb[0].mxu0
      %v1547 = vadd.f32 0.0, %v1546
      %v1548 = vpop.f32.mrb[0].mxu0
      %v1549 = vpop.f32.mrb[0].mxu0
      %v1550 = vadd.f32 0.0, %v1549
      %v1551 = vpop.f32.mrb[0].mxu0
      %1552 = vmatprep.mubr.bf16.mxu0 0
      %1553 = vmatmul.mubr.bf16.gmra.mrb[0].mxu0 %v1496
      %v1554 = vpop.f32.mrb[0].mxu0
      %v1555 = vadd.f32 0.0, %v1554
      %v1556 = vpop.f32.mrb[0].mxu0
      %v1557 = vpop.f32.mrb[0].mxu0
      %v1558 = vadd.f32 0.0, %v1557
      %v1559 = vpop.f32.mrb[0].mxu0
      %1560 = vmatprep.mubr.bf16.mxu0 0
      %1561 = vmatmul.mubr.bf16.gmra.mrb[0].mxu0 %v1499
      %v1562 = vpop.f32.mrb[0].mxu0
      %v1563 = vadd.f32 0.0, %v1562
      %v1564 = vpop.f32.mrb[0].mxu0
      %v1565 = vpop.f32.mrb[0].mxu0
      %v1566 = vadd.f32 0.0, %v1565
      %v1567 = vpop.f32.mrb[0].mxu0
      %1568 = vdwg.mxu0
      %v1569 = vadd.f32 %v1464, %v1539
      %v1570 = vadd.f32 %v1465, %v1542
      %v1571 = vadd.f32 %v1466, %v1547
      %v1572 = vadd.f32 %v1467, %v1550
      %v1573 = vadd.f32 %v1468, %v1555
      %v1574 = vadd.f32 %v1469, %v1558
      %v1575 = vadd.f32 %v1470, %v1563
      %v1576 = vadd.f32 %v1471, %v1566
      %v1577 = vpack.c.bf16 %v1569, %v1569
      %v1578 = vpack.c.bf16 %v1570, %v1570
      %v1579 = vpack.c.bf16 %v1571, %v1571
      %v1580 = vpack.c.bf16 %v1572, %v1572
      %v1581 = vpack.c.bf16 %v1573, %v1573
      %v1582 = vpack.c.bf16 %v1574, %v1574
      %v1583 = vpack.c.bf16 %v1575, %v1575
      %v1584 = vpack.c.bf16 %v1576, %v1576
      %vm1585 = vcmask 60416
      %1586 = vst.msk [vmem:[%s208] sm:$0xf] %vm1585, %v1577
      %1587 = vst.msk [vmem:[%s208 + $0x4] sm:$0xf] %vm1585, %v1578
      %1588 = vst.msk [vmem:[%s208 + $0x8] sm:$0xf] %vm1585, %v1579
      %1589 = vst.msk [vmem:[%s208 + $0xc] sm:$0xf] %vm1585, %v1580
      %1590 = vst.msk [vmem:[%s208 + $0x10] sm:$0xf] %vm1585, %v1581
      %1591 = vst.msk [vmem:[%s208 + $0x14] sm:$0xf] %vm1585, %v1582
      %1592 = vst.msk [vmem:[%s208 + $0x18] sm:$0xf] %vm1585, %v1583
      %1593 = vst.msk [vmem:[%s208 + $0x1c] sm:$0xf] %vm1585, %v1584
      %vm1594 = vcmask 64512
      %v1595 = vsel %vm1594, %v1569, 0.0
      %v1596 = vsel %vm1594, %v1570, 0.0
      %v1597 = vadd.f32 %v1595, %v1596
      %v1598 = vsel %vm1594, %v1571, 0.0
      %v1599 = vadd.f32 %v1597, %v1598
      %v1600 = vsel %vm1594, %v1572, 0.0
      %v1601 = vadd.f32 %v1599, %v1600
      %v1602 = vsel %vm1594, %v1573, 0.0
      %v1603 = vadd.f32 %v1601, %v1602
      %v1604 = vsel %vm1594, %v1574, 0.0
      %v1605 = vadd.f32 %v1603, %v1604
      %v1606 = vsel %vm1594, %v1575, 0.0
      %v1607 = vadd.f32 %v1605, %v1606
      %v1608 = vsel %vm1594, %v1576, 0.0
      %v1609 = vadd.f32 %v1607, %v1608
      %v1610 = vrot.slane %v1609, 4
      %v1611 = vadd.f32 %v1609, %v1610
      %v1612 = vrot.slane %v1611, 2
      %v1613 = vadd.f32 %v1611, %v1612
      %v1614 = vrot.slane %v1613, 1
      %v1615 = vadd.f32 %v1613, %v1614
      %vm1616 = vcmask 57344
      %1617 = vst.msk [vmem:[%s211] sm:$0x1] %vm1616, %v1615
      %v1618 = vmul.f32 %v1569, %v1569
      %v1619 = vmul.f32 %v1570, %v1570
      %v1620 = vmul.f32 %v1571, %v1571
      %v1621 = vmul.f32 %v1572, %v1572
      %v1622 = vmul.f32 %v1573, %v1573
      %v1623 = vmul.f32 %v1574, %v1574
      %v1624 = vmul.f32 %v1575, %v1575
      %v1625 = vmul.f32 %v1576, %v1576
      %v1626 = vsel %vm1594, %v1618, 0.0
      %v1627 = vsel %vm1594, %v1619, 0.0
      %v1628 = vadd.f32 %v1626, %v1627
      %v1629 = vsel %vm1594, %v1620, 0.0
      %v1630 = vadd.f32 %v1628, %v1629
      %v1631 = vsel %vm1594, %v1621, 0.0
      %v1632 = vadd.f32 %v1630, %v1631
      %v1633 = vsel %vm1594, %v1622, 0.0
      %v1634 = vadd.f32 %v1632, %v1633
      %v1635 = vsel %vm1594, %v1623, 0.0
      %v1636 = vadd.f32 %v1634, %v1635
      %v1637 = vsel %vm1594, %v1624, 0.0
      %v1638 = vadd.f32 %v1636, %v1637
      %v1639 = vsel %vm1594, %v1625, 0.0
      %v1640 = vadd.f32 %v1638, %v1639
      %v1641 = vrot.slane %v1640, 4
      %v1642 = vadd.f32 %v1640, %v1641
      %v1643 = vrot.slane %v1642, 2
      %v1644 = vadd.f32 %v1642, %v1643
      %v1645 = vrot.slane %v1644, 1
      %v1646 = vadd.f32 %v1644, %v1645
      %1647 = vst.msk [vmem:[%s214] sm:$0x1] %vm1616, %v1646
      %p1648 = scmp.lt.s32.totalorder %s16, 1
      %s1649 = scalar_select %p1648, %s16, 1
      %s1650 = smul.addr %s1649, 8
      %s1651 = smul.addr %s1650, 4
      %s1652 = scalar_lea.vmem %s2, %s1651
      %p1653 = scmp.lt.s32.totalorder %s16, 1
      %s1654 = scalar_select %p1653, %s16, 1
      %s1655 = scalar_lea.vmem %s3, %s1654
      %p1656 = scmp.lt.s32.totalorder %s16, 1
      %s1657 = scalar_select %p1656, %s16, 1
      %s1658 = scalar_lea.vmem %s4, %s1657
      // Predicated region
      $region29: #{residual_block_pallas.4} parent=27 // pred_check
        %p1659 = pneg %p81
      $region30: #{residual_block_pallas.4} parent=27 // pred_check_branch
        %1661 = sbr.rel (%p1659) target = $region32
      $region31: #{residual_block_pallas.4} parent=27 // pred_region
        _
      $region32: #{residual_block_pallas.4} parent=27 // pred_fallthru
        _
      // Predicated region
      $region33: #{residual_block_pallas.4} parent=27 // pred_check
        %p1662 = pneg %p107
      $region34: #{residual_block_pallas.4} parent=27 // pred_check_branch
        %1664 = sbr.rel (%p1662) target = $region36
      $region35: #{residual_block_pallas.4} parent=27 // pred_region
        _
      $region36: #{residual_block_pallas.4} parent=27 // pred_fallthru
        _
      // Predicated region
      $region37: #{residual_block_pallas.4} parent=27 // pred_check
        %p1665 = pneg %p133
      $region38: #{residual_block_pallas.4} parent=27 // pred_check_branch
        %1667 = sbr.rel (%p1665) target = $region40
      $region39: #{residual_block_pallas.4} parent=27 // pred_region
        _
      $region40: #{residual_block_pallas.4} parent=27 // pred_fallthru
        _
    $region28: #{residual_block_pallas.4} parent=5 // pred_fallthru
      _
    %p1668 = scmp.le.s32.totalorder 2, %s11
    // Predicated region
    $region41: #{residual_block_pallas.4} parent=5 // pred_check
      %p1669 = pneg %p1668
    $region42: #{residual_block_pallas.4} parent=5 // pred_check_branch
      %1671 = sbr.rel (%p1669) target = $region44
    $region43: #{residual_block_pallas.4} parent=5 // pred_region
      %s1672 = ssub.s32 %s11, 2
      // Predicated region
      $region45: #{residual_block_pallas.4} parent=43 // pred_check
        %p1673 = pneg %p87
      $region46: #{residual_block_pallas.4} parent=43 // pred_check_branch
        %1675 = sbr.rel (%p1673) target = $region48
      $region47: #{residual_block_pallas.4} parent=43 // pred_region
        %p1676 = scmp.lt.s32.totalorder %s17, 1
        %s1677 = scalar_select %p1676, %s17, 1
        %s1678 = smul.addr %s1677, 8
        %s1679 = smul.addr %s1678, 4
        %s1680 = scalar_lea.vmem %s2, %s1679
      $region48: #{residual_block_pallas.4} parent=43 // pred_fallthru
        _
      // Predicated region
      $region49: #{residual_block_pallas.4} parent=43 // pred_check
        %p1681 = pneg %p113
      $region50: #{residual_block_pallas.4} parent=43 // pred_check_branch
        %1683 = sbr.rel (%p1681) target = $region52
      $region51: #{residual_block_pallas.4} parent=43 // pred_region
        %p1684 = scmp.lt.s32.totalorder %s17, 1
        %s1685 = scalar_select %p1684, %s17, 1
        %s1686 = scalar_lea.vmem %s3, %s1685
      $region52: #{residual_block_pallas.4} parent=43 // pred_fallthru
        _
      // Predicated region
      $region53: #{residual_block_pallas.4} parent=43 // pred_check
        %p1687 = pneg %p139
      $region54: #{residual_block_pallas.4} parent=43 // pred_check_branch
        %1689 = sbr.rel (%p1687) target = $region56
      $region55: #{residual_block_pallas.4} parent=43 // pred_region
        %p1690 = scmp.lt.s32.totalorder %s17, 1
        %s1691 = scalar_select %p1690, %s17, 1
        %s1692 = scalar_lea.vmem %s4, %s1691
      $region56: #{residual_block_pallas.4} parent=43 // pred_fallthru
        _
    $region44: #{residual_block_pallas.4} parent=5 // pred_fallthru
      _
  $region6: #{residual_block_pallas.4} parent=0 // loop_footer
    %s15 = sadd.s32 1, %s11
  $region7: #{residual_block_pallas.4} parent=0 // loop_footer_branch
    %10 = sbr.rel target = $region3
  $region8: #{residual_block_pallas.4} parent=0 // loop_exit
    _

// kernel: residual_block_pallas.5
$region0: #{residual_block_pallas.5}
  #allocation0 [shape = 'u32[]', space=smem, size = 0x4, offset = 0x4, fixed_abs, tag = 'smem constant byte address 0x4 - core index']
  #allocation1 [shape = 'u32[144,128]{1,0:T(1,128)}', space=vmem, size = 0x12000, scoped, tag = 'internal scratch']
  %s0 = inlined_call_operand.vmem [shape: bf16[2,8,8,8], index: 0, kind: input, shape index: {}]
  %s1 = inlined_call_operand.vmem [shape: f32[1,8], index: 1, kind: input, shape index: {}]
  %s2 = inlined_call_operand.vmem [shape: f32[1,8], index: 2, kind: input, shape index: {}]
  %s3 = inlined_call_operand.vmem [shape: bf16[9,8,8], index: 3, kind: input, shape index: {}]
  %s4 = inlined_call_operand.vmem [shape: bf16[2,8,8,8], index: 4, kind: output, shape index: {0}]
  %s5 = inlined_call_operand.vmem [shape: f32[2,1,8], index: 5, kind: output, shape index: {1}]
  %s6 = inlined_call_operand.vmem [shape: f32[2,1,8], index: 6, kind: output, shape index: {2}]
  %7 = xla_tuple %s4, %s5, %s6
  %s8 = sld [smem:[#allocation0]]
  $region65: #{residual_block_pallas.5} parent=0
    _
  %s10 = ssub.s32 1, %s8
  %s11 = scalar_select 0, %s10, %s8
  loop: start=0, step=1, limit=4
  $region2: #{residual_block_pallas.5} parent=0 // loop_pre_header
    _
  $region3: #{residual_block_pallas.5} parent=0 // loop_header
    %s13 = sphi 0, %s17
    %p14 = scmp.ge.s32.totalorder %s13, 4
    %s23 = sphi 0, %s25
    %s26 = sphi 0, %s23
    %s27 = sphi 0, %s26
    %s43 = sphi 0, %s27
    %s47 = sphi 0, %s47
    %s49 = sphi 0, %s47
    %s50 = sphi 0, %s49
    %s64 = sphi 0, %s50
    %s68 = sphi 0, %s68
    %s70 = sphi 0, %s68
    %s71 = sphi 0, %s70
    %s85 = sphi 0, %s71
    %s89 = sphi 0, %s89
    %s91 = sphi 0, %s89
    %s92 = sphi 0, %s91
    %s106 = sphi 0, %s92
    %s112 = sphi 0, %s114
    %s115 = sphi 0, %s112
    %s116 = sphi 0, %s115
    %s132 = sphi 0, %s116
    %s138 = sphi 0, %s140
    %s141 = sphi 0, %s138
    %s142 = sphi 0, %s141
    %s158 = sphi 0, %s142
    %s164 = sphi 0, %s166
    %s167 = sphi 0, %s164
    %s168 = sphi 0, %s167
    %s184 = sphi 0, %s168
  $region4: #{residual_block_pallas.5} parent=0 // loop_header_branch
    %16 = sbr.rel (%p14) target = $region8
  $region5: #{residual_block_pallas.5} parent=0 // loop_body
    %s18 = ssub.s32 %s13, 1
    %s19 = ssub.s32 %s13, 2
    %s20 = sadd.s32 %s13, 1
    %s21 = ssub.s32 %s13, %s20
    %p22 = scmp.eq.s32.totalorder %s21, 0
    %s24 = sadd.s32 %s23, 1
    %s25 = scalar_select %p22, %s23, %s24
    %p28 = pneg %p22
    %p29 = scmp.eq.s32.totalorder %s13, 1
    %p30 = por %p28, %p29
    %p31 = scmp.ne.s32.totalorder %s23, %s26
    %p32 = scmp.eq.s32.totalorder %s13, 0
    %p33 = por %p31, %p32
    %p34 = scmp.ne.s32.totalorder %s23, %s26
    %p35 = scmp.eq.s32.totalorder %s18, 1
    %p36 = por %p34, %p35
    %p37 = scmp.ne.s32.totalorder %s26, %s27
    %p38 = scmp.eq.s32.totalorder %s18, 0
    %p39 = por %p37, %p38
    %p40 = scmp.ne.s32.totalorder %s26, %s27
    %p41 = scmp.eq.s32.totalorder %s19, 1
    %p42 = por %p40, %p41
    %p44 = scmp.ne.s32.totalorder %s27, %s43
    %p45 = scmp.eq.s32.totalorder %s19, 0
    %p46 = por %p44, %p45
    %s48 = sadd.s32 %s47, 1
    %p51 = scmp.eq.s32.totalorder %s13, 1
    %p52 = scmp.ne.s32.totalorder %s47, %s49
    %p53 = scmp.eq.s32.totalorder %s13, 0
    %p54 = por %p52, %p53
    %p55 = scmp.ne.s32.totalorder %s47, %s49
    %p56 = scmp.eq.s32.totalorder %s18, 1
    %p57 = por %p55, %p56
    %p58 = scmp.ne.s32.totalorder %s49, %s50
    %p59 = scmp.eq.s32.totalorder %s18, 0
    %p60 = por %p58, %p59
    %p61 = scmp.ne.s32.totalorder %s49, %s50
    %p62 = scmp.eq.s32.totalorder %s19, 1
    %p63 = por %p61, %p62
    %p65 = scmp.ne.s32.totalorder %s50, %s64
    %p66 = scmp.eq.s32.totalorder %s19, 0
    %p67 = por %p65, %p66
    %s69 = sadd.s32 %s68, 1
    %p72 = scmp.eq.s32.totalorder %s13, 1
    %p73 = scmp.ne.s32.totalorder %s68, %s70
    %p74 = scmp.eq.s32.totalorder %s13, 0
    %p75 = por %p73, %p74
    %p76 = scmp.ne.s32.totalorder %s68, %s70
    %p77 = scmp.eq.s32.totalorder %s18, 1
    %p78 = por %p76, %p77
    %p79 = scmp.ne.s32.totalorder %s70, %s71
    %p80 = scmp.eq.s32.totalorder %s18, 0
    %p81 = por %p79, %p80
    %p82 = scmp.ne.s32.totalorder %s70, %s71
    %p83 = scmp.eq.s32.totalorder %s19, 1
    %p84 = por %p82, %p83
    %p86 = scmp.ne.s32.totalorder %s71, %s85
    %p87 = scmp.eq.s32.totalorder %s19, 0
    %p88 = por %p86, %p87
    %s90 = sadd.s32 %s89, 1
    %p93 = scmp.eq.s32.totalorder %s13, 1
    %p94 = scmp.ne.s32.totalorder %s89, %s91
    %p95 = scmp.eq.s32.totalorder %s13, 0
    %p96 = por %p94, %p95
    %p97 = scmp.ne.s32.totalorder %s89, %s91
    %p98 = scmp.eq.s32.totalorder %s18, 1
    %p99 = por %p97, %p98
    %p100 = scmp.ne.s32.totalorder %s91, %s92
    %p101 = scmp.eq.s32.totalorder %s18, 0
    %p102 = por %p100, %p101
    %p103 = scmp.ne.s32.totalorder %s91, %s92
    %p104 = scmp.eq.s32.totalorder %s19, 1
    %p105 = por %p103, %p104
    %p107 = scmp.ne.s32.totalorder %s92, %s106
    %p108 = scmp.eq.s32.totalorder %s19, 0
    %p109 = por %p107, %p108
    %s110 = ssub.s32 %s13, %s20
    %p111 = scmp.eq.s32.totalorder %s110, 0
    %s113 = sadd.s32 %s112, 1
    %s114 = scalar_select %p111, %s112, %s113
    %p117 = pneg %p111
    %p118 = scmp.eq.s32.totalorder %s13, 1
    %p119 = por %p117, %p118
    %p120 = scmp.ne.s32.totalorder %s112, %s115
    %p121 = scmp.eq.s32.totalorder %s13, 0
    %p122 = por %p120, %p121
    %p123 = scmp.ne.s32.totalorder %s112, %s115
    %p124 = scmp.eq.s32.totalorder %s18, 1
    %p125 = por %p123, %p124
    %p126 = scmp.ne.s32.totalorder %s115, %s116
    %p127 = scmp.eq.s32.totalorder %s18, 0
    %p128 = por %p126, %p127
    %p129 = scmp.ne.s32.totalorder %s115, %s116
    %p130 = scmp.eq.s32.totalorder %s19, 1
    %p131 = por %p129, %p130
    %p133 = scmp.ne.s32.totalorder %s116, %s132
    %p134 = scmp.eq.s32.totalorder %s19, 0
    %p135 = por %p133, %p134
    %s136 = ssub.s32 %s13, %s20
    %p137 = scmp.eq.s32.totalorder %s136, 0
    %s139 = sadd.s32 %s138, 1
    %s140 = scalar_select %p137, %s138, %s139
    %p143 = pneg %p137
    %p144 = scmp.eq.s32.totalorder %s13, 1
    %p145 = por %p143, %p144
    %p146 = scmp.ne.s32.totalorder %s138, %s141
    %p147 = scmp.eq.s32.totalorder %s13, 0
    %p148 = por %p146, %p147
    %p149 = scmp.ne.s32.totalorder %s138, %s141
    %p150 = scmp.eq.s32.totalorder %s18, 1
    %p151 = por %p149, %p150
    %p152 = scmp.ne.s32.totalorder %s141, %s142
    %p153 = scmp.eq.s32.totalorder %s18, 0
    %p154 = por %p152, %p153
    %p155 = scmp.ne.s32.totalorder %s141, %s142
    %p156 = scmp.eq.s32.totalorder %s19, 1
    %p157 = por %p155, %p156
    %p159 = scmp.ne.s32.totalorder %s142, %s158
    %p160 = scmp.eq.s32.totalorder %s19, 0
    %p161 = por %p159, %p160
    %s162 = ssub.s32 %s13, %s20
    %p163 = scmp.eq.s32.totalorder %s162, 0
    %s165 = sadd.s32 %s164, 1
    %s166 = scalar_select %p163, %s164, %s165
    %p169 = pneg %p163
    %p170 = scmp.eq.s32.totalorder %s13, 1
    %p171 = por %p169, %p170
    %p172 = scmp.ne.s32.totalorder %s164, %s167
    %p173 = scmp.eq.s32.totalorder %s13, 0
    %p174 = por %p172, %p173
    %p175 = scmp.ne.s32.totalorder %s164, %s167
    %p176 = scmp.eq.s32.totalorder %s18, 1
    %p177 = por %p175, %p176
    %p178 = scmp.ne.s32.totalorder %s167, %s168
    %p179 = scmp.eq.s32.totalorder %s18, 0
    %p180 = por %p178, %p179
    %p181 = scmp.ne.s32.totalorder %s167, %s168
    %p182 = scmp.eq.s32.totalorder %s19, 1
    %p183 = por %p181, %p182
    %p185 = scmp.ne.s32.totalorder %s168, %s184
    %p186 = scmp.eq.s32.totalorder %s19, 0
    %p187 = por %p185, %p186
    %p188 = scmp.le.s32.totalorder 1, %s13
    %p189 = scmp.lt.s32.totalorder %s13, 3
    %p190 = pnand %p188, %p189
    %p191 = pneg %p190
    // Predicated region
    $region9: #{residual_block_pallas.5} parent=5 // pred_check
      _
    $region10: #{residual_block_pallas.5} parent=5 // pred_check_branch
      %193 = sbr.rel (%p190) target = $region12
    $region11: #{residual_block_pallas.5} parent=5 // pred_region
      %s194 = ssub.s32 %s13, 1
      // Predicated region
      $region13: #{residual_block_pallas.5} parent=11 // pred_check
        %p195 = pneg %p60
      $region14: #{residual_block_pallas.5} parent=11 // pred_check_branch
        %197 = sbr.rel (%p195) target = $region16
      $region15: #{residual_block_pallas.5} parent=11 // pred_region
        _
      $region16: #{residual_block_pallas.5} parent=11 // pred_fallthru
        _
      // Predicated region
      $region17: #{residual_block_pallas.5} parent=11 // pred_check
        %p198 = pneg %p81
      $region18: #{residual_block_pallas.5} parent=11 // pred_check_branch
        %200 = sbr.rel (%p198) target = $region20
      $region19: #{residual_block_pallas.5} parent=11 // pred_region
        _
      $region20: #{residual_block_pallas.5} parent=11 // pred_fallthru
        _
      // Predicated region
      $region21: #{residual_block_pallas.5} parent=11 // pred_check
        %p201 = pneg %p102
      $region22: #{residual_block_pallas.5} parent=11 // pred_check_branch
        %203 = sbr.rel (%p201) target = $region24
      $region23: #{residual_block_pallas.5} parent=11 // pred_region
        _
      $region24: #{residual_block_pallas.5} parent=11 // pred_fallthru
        _
    $region12: #{residual_block_pallas.5} parent=5 // pred_fallthru
      _
    %p204 = scmp.lt.s32.totalorder %s13, 2
    // Predicated region
    $region25: #{residual_block_pallas.5} parent=5 // pred_check
      %p205 = pneg %p204
    $region26: #{residual_block_pallas.5} parent=5 // pred_check_branch
      %207 = sbr.rel (%p205) target = $region28
    $region27: #{residual_block_pallas.5} parent=5 // pred_region
      // Predicated region
      $region29: #{residual_block_pallas.5} parent=27 // pred_check
        %p208 = pneg %p33
      $region30: #{residual_block_pallas.5} parent=27 // pred_check_branch
        %210 = sbr.rel (%p208) target = $region32
      $region31: #{residual_block_pallas.5} parent=27 // pred_region
        %p211 = scmp.lt.s32.totalorder %s13, 1
        %s212 = scalar_select %p211, %s13, 1
        %s213 = smul.addr %s212, 8
        %s214 = smul.addr %s213, 4
        %s215 = scalar_lea.vmem %s0, %s214
      $region32: #{residual_block_pallas.5} parent=27 // pred_fallthru
        _
    $region28: #{residual_block_pallas.5} parent=5 // pred_fallthru
      _
    %p216 = scmp.le.s32.totalorder 1, %s13
    %p217 = scmp.lt.s32.totalorder %s13, 3
    %p218 = pnand %p216, %p217
    %p219 = pneg %p218
    // Predicated region
    $region33: #{residual_block_pallas.5} parent=5 // pred_check
      _
    $region34: #{residual_block_pallas.5} parent=5 // pred_check_branch
      %221 = sbr.rel (%p218) target = $region36
    $region35: #{residual_block_pallas.5} parent=5 // pred_region
      %s222 = ssub.s32 %s13, 1
      %p223 = scmp.lt.s32.totalorder %s18, 1
      %s224 = scalar_select %p223, %s18, 1
      %s225 = smul.addr %s224, 8
      %s226 = smul.addr %s225, 4
      %s227 = scalar_lea.vmem %s0, %s226
      %p228 = pneg %p39
      %p229 = pneg %p36
      %p230 = pneg %p60
      %p231 = pneg %p57
      %p232 = pneg %p81
      %p233 = pneg %p78
      %p234 = pneg %p102
      %p235 = pneg %p99
      %p236 = pneg %p128
      %p237 = pneg %p125
      %p238 = scmp.lt.s32.totalorder %s18, 1
      %s239 = scalar_select %p238, %s18, 1
      %s240 = smul.addr %s239, 8
      %s241 = smul.addr %s240, 4
      %s242 = scalar_lea.vmem %s4, %s241
      %p243 = pneg %p154
      %p244 = pneg %p151
      %p245 = scmp.lt.s32.totalorder %s18, 1
      %s246 = scalar_select %p245, %s18, 1
      %s247 = scalar_lea.vmem %s5, %s246
      %p248 = pneg %p180
      %p249 = pneg %p177
      %p250 = scmp.lt.s32.totalorder %s18, 1
      %s251 = scalar_select %p250, %s18, 1
      %s252 = scalar_lea.vmem %s6, %s251
      %p253 = scmp.lt.s32.totalorder %s18, 1
      %s254 = scalar_select %p253, %s18, 1
      %s255 = smul.addr %s254, 8
      %s256 = smul.addr %s255, 4
      %s257 = scalar_lea.vmem %s0, %s256
      %p258 = scmp.lt.s32.totalorder %s18, 1
      %s259 = scalar_select %p258, %s18, 1
      %s260 = smul.addr %s259, 8
      %s261 = smul.addr %s260, 4
      %s262 = scalar_lea.vmem %s4, %s261
      %p263 = scmp.lt.s32.totalorder %s18, 1
      %s264 = scalar_select %p263, %s18, 1
      %s265 = scalar_lea.vmem %s5, %s264
      %p266 = scmp.lt.s32.totalorder %s18, 1
      %s267 = scalar_select %p266, %s18, 1
      %s268 = scalar_lea.vmem %s6, %s267
      %v270 = vld [vmem:[%s257] sm:$0xf]
      %v271 = vld [vmem:[%s257 + $0x4] sm:$0xf]
      %v272 = vld [vmem:[%s257 + $0x8] sm:$0xf]
      %v273 = vld [vmem:[%s257 + $0xc] sm:$0xf]
      %v274 = vld [vmem:[%s257 + $0x10] sm:$0xf]
      %v275 = vld [vmem:[%s257 + $0x14] sm:$0xf]
      %v276 = vld [vmem:[%s257 + $0x18] sm:$0xf]
      %v277 = vld [vmem:[%s257 + $0x1c] sm:$0xf]
      %v278 = vunpack.c.l.bf16 %v270
      %v279 = vunpack.c.l.bf16 %v271
      %v280 = vunpack.c.l.bf16 %v272
      %v281 = vunpack.c.l.bf16 %v273
      %v282 = vunpack.c.l.bf16 %v274
      %v283 = vunpack.c.l.bf16 %v275
      %v284 = vunpack.c.l.bf16 %v276
      %v285 = vunpack.c.l.bf16 %v277
      %v286 = vld [vmem:[%s1] sm:$0x1]
      %v288 = vlaneseq
      %v289 = vshrl.u32 %v288, 7
      %v290 = vsub.s32 0, %v289
      %v291 = vrot.slane %v286, %v290
      %v293 = vmul.f32 %v278, %v291
      %v294 = vmul.f32 %v279, %v291
      %v295 = vmul.f32 %v280, %v291
      %v296 = vmul.f32 %v281, %v291
      %v297 = vmul.f32 %v282, %v291
      %v298 = vmul.f32 %v283, %v291
      %v299 = vmul.f32 %v284, %v291
      %v300 = vmul.f32 %v285, %v291
      %v301 = vld [vmem:[%s2] sm:$0x1]
      %v303 = vlaneseq
      %v304 = vshrl.u32 %v303, 7
      %v305 = vsub.s32 0, %v304
      %v306 = vrot.slane %v301, %v305
      %v308 = vadd.f32 %v293, %v306
      %v309 = vadd.f32 %v294, %v306
      %v310 = vadd.f32 %v295, %v306
      %v311 = vadd.f32 %v296, %v306
      %v312 = vadd.f32 %v297, %v306
      %v313 = vadd.f32 %v298, %v306
      %v314 = vadd.f32 %v299, %v306
      %v315 = vadd.f32 %v300, %v306
      %v316 = vmax.f32 %v308, 0.0
      %v317 = vmax.f32 %v309, 0.0
      %v318 = vmax.f32 %v310, 0.0
      %v319 = vmax.f32 %v311, 0.0
      %v320 = vmax.f32 %v312, 0.0
      %v321 = vmax.f32 %v313, 0.0
      %v322 = vmax.f32 %v314, 0.0
      %v323 = vmax.f32 %v315, 0.0
      %v324 = vpack.c.bf16 %v316, %v316
      %v325 = vpack.c.bf16 %v317, %v317
      %v326 = vpack.c.bf16 %v318, %v318
      %v327 = vpack.c.bf16 %v319, %v319
      %v328 = vpack.c.bf16 %v320, %v320
      %v329 = vpack.c.bf16 %v321, %v321
      %v330 = vpack.c.bf16 %v322, %v322
      %v331 = vpack.c.bf16 %v323, %v323
      %v333 = vshrl.u32 %v324, 16
      %v335 = vrot.slane %v333, 7
      %v336 = vshll.u32 %v324, 16
      %v338 = vor.u32 %v335, %v336
      %v340 = vshrl.u32 %v325, 16
      %v342 = vrot.slane %v340, 7
      %v343 = vshll.u32 %v325, 16
      %v345 = vor.u32 %v342, %v343
      %v347 = vshrl.u32 %v326, 16
      %v349 = vrot.slane %v347, 7
      %v350 = vshll.u32 %v326, 16
      %v352 = vor.u32 %v349, %v350
      %v354 = vshrl.u32 %v327, 16
      %v356 = vrot.slane %v354, 7
      %v357 = vshll.u32 %v327, 16
      %v359 = vor.u32 %v356, %v357
      %v361 = vshrl.u32 %v328, 16
      %v363 = vrot.slane %v361, 7
      %v364 = vshll.u32 %v328, 16
      %v366 = vor.u32 %v363, %v364
      %v368 = vshrl.u32 %v329, 16
      %v370 = vrot.slane %v368, 7
      %v371 = vshll.u32 %v329, 16
      %v373 = vor.u32 %v370, %v371
      %v375 = vshrl.u32 %v330, 16
      %v377 = vrot.slane %v375, 7
      %v378 = vshll.u32 %v330, 16
      %v380 = vor.u32 %v377, %v378
      %v382 = vshrl.u32 %v331, 16
      %v384 = vrot.slane %v382, 7
      %v385 = vshll.u32 %v331, 16
      %v387 = vor.u32 %v384, %v385
      %vm396 = vcmask 1040384
      %vm397 = vsmask.f32 256
      %vm398 = vmand %vm396, %vm397
      %v399 = vsel %vm398, 0, %v338
      %v400 = vsel %vm398, 0, %v345
      %v401 = vsel %vm398, 0, %v352
      %v402 = vsel %vm398, 0, %v359
      %v403 = vsel %vm398, 0, %v366
      %v404 = vsel %vm398, 0, %v373
      %v405 = vsel %vm398, 0, %v380
      %v406 = vsel %vm398, 0, %v387
      %vm407 = vcmask 1044480
      %vm408 = vsmask.f32 4352
      %vm409 = vmand %vm407, %vm408
      %v410 = vsel %vm409, %v399, 0
      %v411 = vsel %vm409, %v400, 0
      %v412 = vsel %vm409, %v401, 0
      %v413 = vsel %vm409, %v402, 0
      %v414 = vsel %vm409, %v403, 0
      %v415 = vsel %vm409, %v404, 0
      %v416 = vsel %vm409, %v405, 0
      %v417 = vsel %vm409, %v406, 0
      %v418 = vld [vmem:[%s3] sm:$0xf]
      %v427 = vunpack.c.l.b16 0
      %v428 = vunpack.c.h.b16 0
      %v429 = vunpack.c.l.b16 %v410
      %v430 = vunpack.c.h.b16 %v410
      %v431 = vunpack.c.l.b16 %v411
      %v432 = vunpack.c.h.b16 %v411
      %v433 = vunpack.c.l.b16 %v412
      %v434 = vunpack.c.h.b16 %v412
      %v435 = vunpack.c.l.b16 %v413
      %v436 = vunpack.c.h.b16 %v413
      %v437 = vunpack.c.l.b16 %v414
      %v438 = vunpack.c.h.b16 %v414
      %v439 = vunpack.c.l.b16 %v415
      %v440 = vunpack.c.h.b16 %v415
      %v441 = vunpack.c.l.b16 %v416
      %v442 = vunpack.c.h.b16 %v416
      %v443 = vpack.c.b16 %v427, %v427
      %v444 = vpack.c.b16 %v428, %v428
      %v445 = vpack.c.b16 %v429, %v429
      %v446 = vpack.c.b16 %v430, %v430
      %v447 = vpack.c.b16 %v431, %v431
      %v448 = vpack.c.b16 %v432, %v432
      %v449 = vpack.c.b16 %v433, %v433
      %v450 = vpack.c.b16 %v434, %v434
      %v451 = vpack.c.b16 %v435, %v435
      %v452 = vpack.c.b16 %v436, %v436
      %v453 = vpack.c.b16 %v437, %v437
      %v454 = vpack.c.b16 %v438, %v438
      %v455 = vpack.c.b16 %v439, %v439
      %v456 = vpack.c.b16 %v440, %v440
      %v457 = vpack.c.b16 %v441, %v441
      %v458 = vpack.c.b16 %v442, %v442
      %vm459 = vsmask.f32 3328
      %vm460 = vsmask.f32 7440
      %vm461 = vmor %vm459, %vm460
      %v463 = vshrl.u32 %v443, 16
      %v465 = vrot.slane %v463, 4
      %v466 = vshll.u32 %v443, 16
      %v468 = vrot.slane %v466, 5
      %v469 = vor.u32 %v465, %v468
      %v470 = vrot.slane %v469, 4
      %v472 = vshll.u32 %v444, 16
      %v474 = vrot.slane %v472, 5
      %v475 = vsel %vm461, %v470, %v474
      %v477 = vshrl.u32 %v445, 16
      %v479 = vrot.slane %v477, 4
      %v480 = vshll.u32 %v445, 16
      %v482 = vrot.slane %v480, 5
      %v483 = vor.u32 %v479, %v482
      %v484 = vrot.slane %v483, 4
      %v486 = vshll.u32 %v446, 16
      %v488 = vrot.slane %v486, 5
      %v489 = vsel %vm461, %v484, %v488
      %v491 = vshrl.u32 %v447, 16
      %v493 = vrot.slane %v491, 4
      %v494 = vshll.u32 %v447, 16
      %v496 = vrot.slane %v494, 5
      %v497 = vor.u32 %v493, %v496
      %v498 = vrot.slane %v497, 4
      %v500 = vshll.u32 %v448, 16
      %v502 = vrot.slane %v500, 5
      %v503 = vsel %vm461, %v498, %v502
      %v505 = vshrl.u32 %v449, 16
      %v507 = vrot.slane %v505, 4
      %v508 = vshll.u32 %v449, 16
      %v510 = vrot.slane %v508, 5
      %v511 = vor.u32 %v507, %v510
      %v512 = vrot.slane %v511, 4
      %v514 = vshll.u32 %v450, 16
      %v516 = vrot.slane %v514, 5
      %v517 = vsel %vm461, %v512, %v516
      %v519 = vshrl.u32 %v451, 16
      %v521 = vrot.slane %v519, 4
      %v522 = vshll.u32 %v451, 16
      %v524 = vrot.slane %v522, 5
      %v525 = vor.u32 %v521, %v524
      %v526 = vrot.slane %v525, 4
      %v528 = vshll.u32 %v452, 16
      %v530 = vrot.slane %v528, 5
      %v531 = vsel %vm461, %v526, %v530
      %v533 = vshrl.u32 %v453, 16
      %v535 = vrot.slane %v533, 4
      %v536 = vshll.u32 %v453, 16
      %v538 = vrot.slane %v536, 5
      %v539 = vor.u32 %v535, %v538
      %v540 = vrot.slane %v539, 4
      %v542 = vshll.u32 %v454, 16
      %v544 = vrot.slane %v542, 5
      %v545 = vsel %vm461, %v540, %v544
      %v547 = vshrl.u32 %v455, 16
      %v549 = vrot.slane %v547, 4
      %v550 = vshll.u32 %v455, 16
      %v552 = vrot.slane %v550, 5
      %v553 = vor.u32 %v549, %v552
      %v554 = vrot.slane %v553, 4
      %v556 = vshll.u32 %v456, 16
      %v558 = vrot.slane %v556, 5
      %v559 = vsel %vm461, %v554, %v558
      %v561 = vshrl.u32 %v457, 16
      %v563 = vrot.slane %v561, 4
      %v564 = vshll.u32 %v457, 16
      %v566 = vrot.slane %v564, 5
      %v567 = vor.u32 %v563, %v566
      %v568 = vrot.slane %v567, 4
      %v570 = vshll.u32 %v458, 16
      %v572 = vrot.slane %v570, 5
      %v573 = vsel %vm461, %v568, %v572
      %s574 = scalar_lea.vmem %s3, 4
      %v575 = vld [vmem:[%s574] sm:$0xf]
      %v576 = vunpack.c.l.b16 %v475
      %v577 = vunpack.c.l.b16 %v489
      %v578 = vunpack.c.l.b16 %v503
      %v579 = vunpack.c.l.b16 %v517
      %v580 = vunpack.c.l.b16 %v531
      %v581 = vunpack.c.l.b16 %v545
      %v582 = vunpack.c.l.b16 %v559
      %v583 = vunpack.c.l.b16 %v573
      %v584 = vpack.c.b16 %v577, %v576
      %v585 = vpack.c.b16 %v579, %v578
      %v586 = vpack.c.b16 %v581, %v580
      %v587 = vpack.c.b16 %v583, %v582
      %vm588 = vcmask 64512
      %v590 = vsel %vm588, %v584, 0
      %v593 = vsel %vm588, %v585, 0
      %v596 = vsel %vm588, %v586, 0
      %v599 = vsel %vm588, %v587, 0
      %vm601 = vcmask 1043456
      %v603 = vsel %vm601, %v575, 0
      %605 = vmatprep.subr.bf16.mxu0 0
      %606 = vmatpush1.bf16.msra.mxu0 %v603
      %607 = vmatprep.subr.bf16.mxu0 0
      %608 = vmatpush1.bf16.msra.mxu0 0
      %609 = vmatprep.subr.bf16.mxu0 0
      %610 = vmatpush1.bf16.msra.mxu0 0
      %611 = vmatprep.subr.bf16.mxu0 0
      %612 = vmatpush1.bf16.msra.mxu0 0
      %613 = vmatprep.subr.bf16.mxu0 0
      %614 = vmatpush1.bf16.msra.mxu0 0
      %615 = vmatprep.subr.bf16.mxu0 0
      %616 = vmatpush1.bf16.msra.mxu0 0
      %617 = vmatprep.subr.bf16.mxu0 0
      %618 = vmatpush1.bf16.msra.mxu0 0
      %619 = vmatprep.subr.bf16.mxu0 0
      %620 = vmatpush1.bf16.msra.mxu0 0
      %621 = vmatprep.subr.bf16.mxu0 0
      %622 = vmatpush1.bf16.msra.mxu0 0
      %623 = vmatprep.subr.bf16.mxu0 0
      %624 = vmatpush1.bf16.msra.mxu0 0
      %625 = vmatprep.subr.bf16.mxu0 0
      %626 = vmatpush1.bf16.msra.mxu0 0
      %627 = vmatprep.subr.bf16.mxu0 0
      %628 = vmatpush1.bf16.msra.mxu0 0
      %629 = vmatprep.subr.bf16.mxu0 0
      %630 = vmatpush1.bf16.msra.mxu0 0
      %631 = vmatprep.subr.bf16.mxu0 0
      %632 = vmatpush1.bf16.msra.mxu0 0
      %633 = vmatprep.subr.bf16.mxu0 0
      %634 = vmatpush1.bf16.msra.mxu0 0
      %635 = vmatprep.subr.bf16.mxu0 0
      %636 = vmatpush1.bf16.msra.mxu0 0
      %637 = vmatprep.mubr.bf16.mxu0 0
      %638 = vmatmul.mubr.bf16.gmra.mrb[0].mxu0 %v590
      %v639 = vpop.f32.mrb[0].mxu0
      %v640 = vadd.f32 0.0, %v639
      %v641 = vpop.f32.mrb[0].mxu0
      %v642 = vpop.f32.mrb[0].mxu0
      %v643 = vadd.f32 0.0, %v642
      %v644 = vpop.f32.mrb[0].mxu0
      %645 = vmatprep.mubr.bf16.mxu0 0
      %646 = vmatmul.mubr.bf16.gmra.mrb[0].mxu0 %v593
      %v647 = vpop.f32.mrb[0].mxu0
      %v648 = vadd.f32 0.0, %v647
      %v649 = vpop.f32.mrb[0].mxu0
      %v650 = vpop.f32.mrb[0].mxu0
      %v651 = vadd.f32 0.0, %v650
      %v652 = vpop.f32.mrb[0].mxu0
      %653 = vmatprep.mubr.bf16.mxu0 0
      %654 = vmatmul.mubr.bf16.gmra.mrb[0].mxu0 %v596
      %v655 = vpop.f32.mrb[0].mxu0
      %v656 = vadd.f32 0.0, %v655
      %v657 = vpop.f32.mrb[0].mxu0
      %v658 = vpop.f32.mrb[0].mxu0
      %v659 = vadd.f32 0.0, %v658
      %v660 = vpop.f32.mrb[0].mxu0
      %661 = vmatprep.mubr.bf16.mxu0 0
      %662 = vmatmul.mubr.bf16.gmra.mrb[0].mxu0 %v599
      %v663 = vpop.f32.mrb[0].mxu0
      %v664 = vadd.f32 0.0, %v663
      %v665 = vpop.f32.mrb[0].mxu0
      %v666 = vpop.f32.mrb[0].mxu0
      %v667 = vadd.f32 0.0, %v666
      %v668 = vpop.f32.mrb[0].mxu0
      %669 = vdwg.mxu0
      %v670 = vpack.c.b16 %v429, %v427
      %v671 = vpack.c.b16 %v433, %v431
      %v672 = vpack.c.b16 %v437, %v435
      %v673 = vpack.c.b16 %v441, %v439
      %v675 = vsel %vm588, %v670, 0
      %v678 = vsel %vm588, %v671, 0
      %v681 = vsel %vm588, %v672, 0
      %v684 = vsel %vm588, %v673, 0
      %v687 = vsel %vm601, %v418, 0
      %689 = vmatprep.subr.bf16.mxu0 0
      %690 = vmatpush1.bf16.msra.mxu0 %v687
      %691 = vmatprep.subr.bf16.mxu0 0
      %692 = vmatpush1.bf16.msra.mxu0 0
      %693 = vmatprep.subr.bf16.mxu0 0
      %694 = vmatpush1.bf16.msra.mxu0 0
      %695 = vmatprep.subr.bf16.mxu0 0
      %696 = vmatpush1.bf16.msra.mxu0 0
      %697 = vmatprep.subr.bf16.mxu0 0
      %698 = vmatpush1.bf16.msra.mxu0 0
      %699 = vmatprep.subr.bf16.mxu0 0
      %700 = vmatpush1.bf16.msra.mxu0 0
      %701 = vmatprep.subr.bf16.mxu0 0
      %702 = vmatpush1.bf16.msra.mxu0 0
      %703 = vmatprep.subr.bf16.mxu0 0
      %704 = vmatpush1.bf16.msra.mxu0 0
      %705 = vmatprep.subr.bf16.mxu0 0
      %706 = vmatpush1.bf16.msra.mxu0 0
      %707 = vmatprep.subr.bf16.mxu0 0
      %708 = vmatpush1.bf16.msra.mxu0 0
      %709 = vmatprep.subr.bf16.mxu0 0
      %710 = vmatpush1.bf16.msra.mxu0 0
      %711 = vmatprep.subr.bf16.mxu0 0
      %712 = vmatpush1.bf16.msra.mxu0 0
      %713 = vmatprep.subr.bf16.mxu0 0
      %714 = vmatpush1.bf16.msra.mxu0 0
      %715 = vmatprep.subr.bf16.mxu0 0
      %716 = vmatpush1.bf16.msra.mxu0 0
      %717 = vmatprep.subr.bf16.mxu0 0
      %718 = vmatpush1.bf16.msra.mxu0 0
      %719 = vmatprep.subr.bf16.mxu0 0
      %720 = vmatpush1.bf16.msra.mxu0 0
      %721 = vmatprep.mubr.bf16.mxu0 0
      %722 = vmatmul.mubr.bf16.gmra.mrb[0].mxu0 %v675
      %v723 = vpop.f32.mrb[0].mxu0
      %v724 = vadd.f32 %v640, %v723
      %v725 = vpop.f32.mrb[0].mxu0
      %v726 = vpop.f32.mrb[0].mxu0
      %v727 = vadd.f32 %v643, %v726
      %v728 = vpop.f32.mrb[0].mxu0
      %729 = vmatprep.mubr.bf16.mxu0 0
      %730 = vmatmul.mubr.bf16.gmra.mrb[0].mxu0 %v678
      %v731 = vpop.f32.mrb[0].mxu0
      %v732 = vadd.f32 %v648, %v731
      %v733 = vpop.f32.mrb[0].mxu0
      %v734 = vpop.f32.mrb[0].mxu0
      %v735 = vadd.f32 %v651, %v734
      %v736 = vpop.f32.mrb[0].mxu0
      %737 = vmatprep.mubr.bf16.mxu0 0
      %738 = vmatmul.mubr.bf16.gmra.mrb[0].mxu0 %v681
      %v739 = vpop.f32.mrb[0].mxu0
      %v740 = vadd.f32 %v656, %v739
      %v741 = vpop.f32.mrb[0].mxu0
      %v742 = vpop.f32.mrb[0].mxu0
      %v743 = vadd.f32 %v659, %v742
      %v744 = vpop.f32.mrb[0].mxu0
      %745 = vmatprep.mubr.bf16.mxu0 0
      %746 = vmatmul.mubr.bf16.gmra.mrb[0].mxu0 %v684
      %v747 = vpop.f32.mrb[0].mxu0
      %v748 = vadd.f32 %v664, %v747
      %v749 = vpop.f32.mrb[0].mxu0
      %v750 = vpop.f32.mrb[0].mxu0
      %v751 = vadd.f32 %v667, %v750
      %v752 = vpop.f32.mrb[0].mxu0
      %753 = vdwg.mxu0
      %vm754 = vcmask 1042432
      %vm755 = vcmask 1046532
      %vm756 = vmor %vm754, %vm755
      %v757 = vrot.slane %v443, 5
      %v758 = vrot.slane %v757, 4
      %v759 = vrot.slane %v444, 5
      %v760 = vsel %vm756, %v758, %v759
      %v761 = vrot.slane %v445, 5
      %v762 = vrot.slane %v761, 4
      %v763 = vrot.slane %v446, 5
      %v764 = vsel %vm756, %v762, %v763
      %v765 = vrot.slane %v447, 5
      %v766 = vrot.slane %v765, 4
      %v767 = vrot.slane %v448, 5
      %v768 = vsel %vm756, %v766, %v767
      %v769 = vrot.slane %v449, 5
      %v770 = vrot.slane %v769, 4
      %v771 = vrot.slane %v450, 5
      %v772 = vsel %vm756, %v770, %v771
      %v773 = vrot.slane %v451, 5
      %v774 = vrot.slane %v773, 4
      %v775 = vrot.slane %v452, 5
      %v776 = vsel %vm756, %v774, %v775
      %v777 = vrot.slane %v453, 5
      %v778 = vrot.slane %v777, 4
      %v779 = vrot.slane %v454, 5
      %v780 = vsel %vm756, %v778, %v779
      %v781 = vrot.slane %v455, 5
      %v782 = vrot.slane %v781, 4
      %v783 = vrot.slane %v456, 5
      %v784 = vsel %vm756, %v782, %v783
      %v785 = vrot.slane %v457, 5
      %v786 = vrot.slane %v785, 4
      %v787 = vrot.slane %v458, 5
      %v788 = vsel %vm756, %v786, %v787
      %s789 = scalar_lea.vmem %s3, 8
      %v790 = vld [vmem:[%s789] sm:$0xf]
      %v791 = vunpack.c.l.b16 %v760
      %v792 = vunpack.c.l.b16 %v764
      %v793 = vunpack.c.l.b16 %v768
      %v794 = vunpack.c.l.b16 %v772
      %v795 = vunpack.c.l.b16 %v776
      %v796 = vunpack.c.l.b16 %v780
      %v797 = vunpack.c.l.b16 %v784
      %v798 = vunpack.c.l.b16 %v788
      %v799 = vpack.c.b16 %v792, %v791
      %v800 = vpack.c.b16 %v794, %v793
      %v801 = vpack.c.b16 %v796, %v795
      %v802 = vpack.c.b16 %v798, %v797
      %v804 = vsel %vm588, %v799, 0
      %v807 = vsel %vm588, %v800, 0
      %v810 = vsel %vm588, %v801, 0
      %v813 = vsel %vm588, %v802, 0
      %v816 = vsel %vm601, %v790, 0
      %818 = vmatprep.subr.bf16.mxu0 0
      %819 = vmatpush1.bf16.msra.mxu0 %v816
      %820 = vmatprep.subr.bf16.mxu0 0
      %821 = vmatpush1.bf16.msra.mxu0 0
      %822 = vmatprep.subr.bf16.mxu0 0
      %823 = vmatpush1.bf16.msra.mxu0 0
      %824 = vmatprep.subr.bf16.mxu0 0
      %825 = vmatpush1.bf16.msra.mxu0 0
      %826 = vmatprep.subr.bf16.mxu0 0
      %827 = vmatpush1.bf16.msra.mxu0 0
      %828 = vmatprep.subr.bf16.mxu0 0
      %829 = vmatpush1.bf16.msra.mxu0 0
      %830 = vmatprep.subr.bf16.mxu0 0
      %831 = vmatpush1.bf16.msra.mxu0 0
      %832 = vmatprep.subr.bf16.mxu0 0
      %833 = vmatpush1.bf16.msra.mxu0 0
      %834 = vmatprep.subr.bf16.mxu0 0
      %835 = vmatpush1.bf16.msra.mxu0 0
      %836 = vmatprep.subr.bf16.mxu0 0
      %837 = vmatpush1.bf16.msra.mxu0 0
      %838 = vmatprep.subr.bf16.mxu0 0
      %839 = vmatpush1.bf16.msra.mxu0 0
      %840 = vmatprep.subr.bf16.mxu0 0
      %841 = vmatpush1.bf16.msra.mxu0 0
      %842 = vmatprep.subr.bf16.mxu0 0
      %843 = vmatpush1.bf16.msra.mxu0 0
      %844 = vmatprep.subr.bf16.mxu0 0
      %845 = vmatpush1.bf16.msra.mxu0 0
      %846 = vmatprep.subr.bf16.mxu0 0
      %847 = vmatpush1.bf16.msra.mxu0 0
      %848 = vmatprep.subr.bf16.mxu0 0
      %849 = vmatpush1.bf16.msra.mxu0 0
      %850 = vmatprep.mubr.bf16.mxu0 0
      %851 = vmatmul.mubr.bf16.gmra.mrb[0].mxu0 %v804
      %v852 = vpop.f32.mrb[0].mxu0
      %v853 = vadd.f32 0.0, %v852
      %v854 = vpop.f32.mrb[0].mxu0
      %v855 = vpop.f32.mrb[0].mxu0
      %v856 = vadd.f32 0.0, %v855
      %v857 = vpop.f32.mrb[0].mxu0
      %858 = vmatprep.mubr.bf16.mxu0 0
      %859 = vmatmul.mubr.bf16.gmra.mrb[0].mxu0 %v807
      %v860 = vpop.f32.mrb[0].mxu0
      %v861 = vadd.f32 0.0, %v860
      %v862 = vpop.f32.mrb[0].mxu0
      %v863 = vpop.f32.mrb[0].mxu0
      %v864 = vadd.f32 0.0, %v863
      %v865 = vpop.f32.mrb[0].mxu0
      %866 = vmatprep.mubr.bf16.mxu0 0
      %867 = vmatmul.mubr.bf16.gmra.mrb[0].mxu0 %v810
      %v868 = vpop.f32.mrb[0].mxu0
      %v869 = vadd.f32 0.0, %v868
      %v870 = vpop.f32.mrb[0].mxu0
      %v871 = vpop.f32.mrb[0].mxu0
      %v872 = vadd.f32 0.0, %v871
      %v873 = vpop.f32.mrb[0].mxu0
      %874 = vmatprep.mubr.bf16.mxu0 0
      %875 = vmatmul.mubr.bf16.gmra.mrb[0].mxu0 %v813
      %v876 = vpop.f32.mrb[0].mxu0
      %v877 = vadd.f32 0.0, %v876
      %v878 = vpop.f32.mrb[0].mxu0
      %v879 = vpop.f32.mrb[0].mxu0
      %v880 = vadd.f32 0.0, %v879
      %v881 = vpop.f32.mrb[0].mxu0
      %882 = vdwg.mxu0
      %v883 = vadd.f32 %v724, %v853
      %v884 = vadd.f32 %v727, %v856
      %v885 = vadd.f32 %v732, %v861
      %v886 = vadd.f32 %v735, %v864
      %v887 = vadd.f32 %v740, %v869
      %v888 = vadd.f32 %v743, %v872
      %v889 = vadd.f32 %v748, %v877
      %v890 = vadd.f32 %v751, %v880
      %s891 = scalar_lea.vmem %s3, 12
      %v892 = vld [vmem:[%s891] sm:$0xf]
      %v894 = vunpack.c.l.b16 %v417
      %v895 = vpack.c.b16 %v431, %v429
      %v896 = vpack.c.b16 %v435, %v433
      %v897 = vpack.c.b16 %v439, %v437
      %v898 = vpack.c.b16 %v894, %v441
      %v900 = vsel %vm588, %v895, 0
      %v903 = vsel %vm588, %v896, 0
      %v906 = vsel %vm588, %v897, 0
      %v909 = vsel %vm588, %v898, 0
      %v912 = vsel %vm601, %v892, 0
      %914 = vmatprep.subr.bf16.mxu0 0
      %915 = vmatpush1.bf16.msra.mxu0 %v912
      %916 = vmatprep.subr.bf16.mxu0 0
      %917 = vmatpush1.bf16.msra.mxu0 0
      %918 = vmatprep.subr.bf16.mxu0 0
      %919 = vmatpush1.bf16.msra.mxu0 0
      %920 = vmatprep.subr.bf16.mxu0 0
      %921 = vmatpush1.bf16.msra.mxu0 0
      %922 = vmatprep.subr.bf16.mxu0 0
      %923 = vmatpush1.bf16.msra.mxu0 0
      %924 = vmatprep.subr.bf16.mxu0 0
      %925 = vmatpush1.bf16.msra.mxu0 0
      %926 = vmatprep.subr.bf16.mxu0 0
      %927 = vmatpush1.bf16.msra.mxu0 0
      %928 = vmatprep.subr.bf16.mxu0 0
      %929 = vmatpush1.bf16.msra.mxu0 0
      %930 = vmatprep.subr.bf16.mxu0 0
      %931 = vmatpush1.bf16.msra.mxu0 0
      %932 = vmatprep.subr.bf16.mxu0 0
      %933 = vmatpush1.bf16.msra.mxu0 0
      %934 = vmatprep.subr.bf16.mxu0 0
      %935 = vmatpush1.bf16.msra.mxu0 0
      %936 = vmatprep.subr.bf16.mxu0 0
      %937 = vmatpush1.bf16.msra.mxu0 0
      %938 = vmatprep.subr.bf16.mxu0 0
      %939 = vmatpush1.bf16.msra.mxu0 0
      %940 = vmatprep.subr.bf16.mxu0 0
      %941 = vmatpush1.bf16.msra.mxu0 0
      %942 = vmatprep.subr.bf16.mxu0 0
      %943 = vmatpush1.bf16.msra.mxu0 0
      %944 = vmatprep.subr.bf16.mxu0 0
      %945 = vmatpush1.bf16.msra.mxu0 0
      %946 = vmatprep.mubr.bf16.mxu0 0
      %947 = vmatmul.mubr.bf16.gmra.mrb[0].mxu0 %v900
      %v948 = vpop.f32.mrb[0].mxu0
      %v949 = vadd.f32 0.0, %v948
      %v950 = vpop.f32.mrb[0].mxu0
      %v951 = vpop.f32.mrb[0].mxu0
      %v952 = vadd.f32 0.0, %v951
      %v953 = vpop.f32.mrb[0].mxu0
      %954 = vmatprep.mubr.bf16.mxu0 0
      %955 = vmatmul.mubr.bf16.gmra.mrb[0].mxu0 %v903
      %v956 = vpop.f32.mrb[0].mxu0
      %v957 = vadd.f32 0.0, %v956
      %v958 = vpop.f32.mrb[0].mxu0
      %v959 = vpop.f32.mrb[0].mxu0
      %v960 = vadd.f32 0.0, %v959
      %v961 = vpop.f32.mrb[0].mxu0
      %962 = vmatprep.mubr.bf16.mxu0 0
      %963 = vmatmul.mubr.bf16.gmra.mrb[0].mxu0 %v906
      %v964 = vpop.f32.mrb[0].mxu0
      %v965 = vadd.f32 0.0, %v964
      %v966 = vpop.f32.mrb[0].mxu0
      %v967 = vpop.f32.mrb[0].mxu0
      %v968 = vadd.f32 0.0, %v967
      %v969 = vpop.f32.mrb[0].mxu0
      %970 = vmatprep.mubr.bf16.mxu0 0
      %971 = vmatmul.mubr.bf16.gmra.mrb[0].mxu0 %v909
      %v972 = vpop.f32.mrb[0].mxu0
      %v973 = vadd.f32 0.0, %v972
      %v974 = vpop.f32.mrb[0].mxu0
      %v975 = vpop.f32.mrb[0].mxu0
      %v976 = vadd.f32 0.0, %v975
      %v977 = vpop.f32.mrb[0].mxu0
      %978 = vdwg.mxu0
      %v979 = vadd.f32 %v883, %v949
      %v980 = vadd.f32 %v884, %v952
      %v981 = vadd.f32 %v885, %v957
      %v982 = vadd.f32 %v886, %v960
      %v983 = vadd.f32 %v887, %v965
      %v984 = vadd.f32 %v888, %v968
      %v985 = vadd.f32 %v889, %v973
      %v986 = vadd.f32 %v890, %v976
      %v987 = vunpack.c.h.b16 %v417
      %v988 = vpack.c.b16 %v894, %v894
      %v989 = vpack.c.b16 %v987, %v987
      %v991 = vshrl.u32 %v988, 16
      %v993 = vrot.slane %v991, 4
      %v994 = vshll.u32 %v988, 16
      %v996 = vrot.slane %v994, 5
      %v997 = vor.u32 %v993, %v996
      %v998 = vrot.slane %v997, 4
      %v1000 = vshll.u32 %v989, 16
      %v1002 = vrot.slane %v1000, 5
      %v1003 = vsel %vm461, %v998, %v1002
      %s1004 = scalar_lea.vmem %s3, 16
      %v1005 = vld [vmem:[%s1004] sm:$0xf]
      %v1006 = vunpack.c.l.b16 %v1003
      %v1007 = vpack.c.b16 %v578, %v577
      %v1008 = vpack.c.b16 %v580, %v579
      %v1009 = vpack.c.b16 %v582, %v581
      %v1010 = vpack.c.b16 %v1006, %v583
      %v1012 = vsel %vm588, %v1007, 0
      %v1015 = vsel %vm588, %v1008, 0
      %v1018 = vsel %vm588, %v1009, 0
      %v1021 = vsel %vm588, %v1010, 0
      %v1024 = vsel %vm601, %v1005, 0
      %1026 = vmatprep.subr.bf16.mxu0 0
      %1027 = vmatpush1.bf16.msra.mxu0 %v1024
      %1028 = vmatprep.subr.bf16.mxu0 0
      %1029 = vmatpush1.bf16.msra.mxu0 0
      %1030 = vmatprep.subr.bf16.mxu0 0
      %1031 = vmatpush1.bf16.msra.mxu0 0
      %1032 = vmatprep.subr.bf16.mxu0 0
      %1033 = vmatpush1.bf16.msra.mxu0 0
      %1034 = vmatprep.subr.bf16.mxu0 0
      %1035 = vmatpush1.bf16.msra.mxu0 0
      %1036 = vmatprep.subr.bf16.mxu0 0
      %1037 = vmatpush1.bf16.msra.mxu0 0
      %1038 = vmatprep.subr.bf16.mxu0 0
      %1039 = vmatpush1.bf16.msra.mxu0 0
      %1040 = vmatprep.subr.bf16.mxu0 0
      %1041 = vmatpush1.bf16.msra.mxu0 0
      %1042 = vmatprep.subr.bf16.mxu0 0
      %1043 = vmatpush1.bf16.msra.mxu0 0
      %1044 = vmatprep.subr.bf16.mxu0 0
      %1045 = vmatpush1.bf16.msra.mxu0 0
      %1046 = vmatprep.subr.bf16.mxu0 0
      %1047 = vmatpush1.bf16.msra.mxu0 0
      %1048 = vmatprep.subr.bf16.mxu0 0
      %1049 = vmatpush1.bf16.msra.mxu0 0
      %1050 = vmatprep.subr.bf16.mxu0 0
      %1051 = vmatpush1.bf16.msra.mxu0 0
      %1052 = vmatprep.subr.bf16.mxu0 0
      %1053 = vmatpush1.bf16.msra.mxu0 0
      %1054 = vmatprep.subr.bf16.mxu0 0
      %1055 = vmatpush1.bf16.msra.mxu0 0
      %1056 = vmatprep.subr.bf16.mxu0 0
      %1057 = vmatpush1.bf16.msra.mxu0 0
      %1058 = vmatprep.mubr.bf16.mxu0 0
      %1059 = vmatmul.mubr.bf16.gmra.mrb[0].mxu0 %v1012
      %v1060 = vpop.f32.mrb[0].mxu0
      %v1061 = vadd.f32 0.0, %v1060
      %v1062 = vpop.f32.mrb[0].mxu0
      %v1063 = vpop.f32.mrb[0].mxu0
      %v1064 = vadd.f32 0.0, %v1063
      %v1065 = vpop.f32.mrb[0].mxu0
      %1066 = vmatprep.mubr.bf16.mxu0 0
      %1067 = vmatmul.mubr.bf16.gmra.mrb[0].mxu0 %v1015
      %v1068 = vpop.f32.mrb[0].mxu0
      %v1069 = vadd.f32 0.0, %v1068
      %v1070 = vpop.f32.mrb[0].mxu0
      %v1071 = vpop.f32.mrb[0].mxu0
      %v1072 = vadd.f32 0.0, %v1071
      %v1073 = vpop.f32.mrb[0].mxu0
      %1074 = vmatprep.mubr.bf16.mxu0 0
      %1075 = vmatmul.mubr.bf16.gmra.mrb[0].mxu0 %v1018
      %v1076 = vpop.f32.mrb[0].mxu0
      %v1077 = vadd.f32 0.0, %v1076
      %v1078 = vpop.f32.mrb[0].mxu0
      %v1079 = vpop.f32.mrb[0].mxu0
      %v1080 = vadd.f32 0.0, %v1079
      %v1081 = vpop.f32.mrb[0].mxu0
      %1082 = vmatprep.mubr.bf16.mxu0 0
      %1083 = vmatmul.mubr.bf16.gmra.mrb[0].mxu0 %v1021
      %v1084 = vpop.f32.mrb[0].mxu0
      %v1085 = vadd.f32 0.0, %v1084
      %v1086 = vpop.f32.mrb[0].mxu0
      %v1087 = vpop.f32.mrb[0].mxu0
      %v1088 = vadd.f32 0.0, %v1087
      %v1089 = vpop.f32.mrb[0].mxu0
      %1090 = vdwg.mxu0
      %v1091 = vadd.f32 %v979, %v1061
      %v1092 = vadd.f32 %v980, %v1064
      %v1093 = vadd.f32 %v981, %v1069
      %v1094 = vadd.f32 %v982, %v1072
      %v1095 = vadd.f32 %v983, %v1077
      %v1096 = vadd.f32 %v984, %v1080
      %v1097 = vadd.f32 %v985, %v1085
      %v1098 = vadd.f32 %v986, %v1088
      %v1099 = vrot.slane %v988, 5
      %v1100 = vrot.slane %v1099, 4
      %v1101 = vrot.slane %v989, 5
      %v1102 = vsel %vm756, %v1100, %v1101
      %s1103 = scalar_lea.vmem %s3, 20
      %v1104 = vld [vmem:[%s1103] sm:$0xf]
      %v1105 = vunpack.c.l.b16 %v1102
      %v1106 = vpack.c.b16 %v793, %v792
      %v1107 = vpack.c.b16 %v795, %v794
      %v1108 = vpack.c.b16 %v797, %v796
      %v1109 = vpack.c.b16 %v1105, %v798
      %v1111 = vsel %vm588, %v1106, 0
      %v1114 = vsel %vm588, %v1107, 0
      %v1117 = vsel %vm588, %v1108, 0
      %v1120 = vsel %vm588, %v1109, 0
      %v1123 = vsel %vm601, %v1104, 0
      %1125 = vmatprep.subr.bf16.mxu0 0
      %1126 = vmatpush1.bf16.msra.mxu0 %v1123
      %1127 = vmatprep.subr.bf16.mxu0 0
      %1128 = vmatpush1.bf16.msra.mxu0 0
      %1129 = vmatprep.subr.bf16.mxu0 0
      %1130 = vmatpush1.bf16.msra.mxu0 0
      %1131 = vmatprep.subr.bf16.mxu0 0
      %1132 = vmatpush1.bf16.msra.mxu0 0
      %1133 = vmatprep.subr.bf16.mxu0 0
      %1134 = vmatpush1.bf16.msra.mxu0 0
      %1135 = vmatprep.subr.bf16.mxu0 0
      %1136 = vmatpush1.bf16.msra.mxu0 0
      %1137 = vmatprep.subr.bf16.mxu0 0
      %1138 = vmatpush1.bf16.msra.mxu0 0
      %1139 = vmatprep.subr.bf16.mxu0 0
      %1140 = vmatpush1.bf16.msra.mxu0 0
      %1141 = vmatprep.subr.bf16.mxu0 0
      %1142 = vmatpush1.bf16.msra.mxu0 0
      %1143 = vmatprep.subr.bf16.mxu0 0
      %1144 = vmatpush1.bf16.msra.mxu0 0
      %1145 = vmatprep.subr.bf16.mxu0 0
      %1146 = vmatpush1.bf16.msra.mxu0 0
      %1147 = vmatprep.subr.bf16.mxu0 0
      %1148 = vmatpush1.bf16.msra.mxu0 0
      %1149 = vmatprep.subr.bf16.mxu0 0
      %1150 = vmatpush1.bf16.msra.mxu0 0
      %1151 = vmatprep.subr.bf16.mxu0 0
      %1152 = vmatpush1.bf16.msra.mxu0 0
      %1153 = vmatprep.subr.bf16.mxu0 0
      %1154 = vmatpush1.bf16.msra.mxu0 0
      %1155 = vmatprep.subr.bf16.mxu0 0
      %1156 = vmatpush1.bf16.msra.mxu0 0
      %1157 = vmatprep.mubr.bf16.mxu0 0
      %1158 = vmatmul.mubr.bf16.gmra.mrb[0].mxu0 %v1111
      %v1159 = vpop.f32.mrb[0].mxu0
      %v1160 = vadd.f32 0.0, %v1159
      %v1161 = vpop.f32.mrb[0].mxu0
      %v1162 = vpop.f32.mrb[0].mxu0
      %v1163 = vadd.f32 0.0, %v1162
      %v1164 = vpop.f32.mrb[0].mxu0
      %1165 = vmatprep.mubr.bf16.mxu0 0
      %1166 = vmatmul.mubr.bf16.gmra.mrb[0].mxu0 %v1114
      %v1167 = vpop.f32.mrb[0].mxu0
      %v1168 = vadd.f32 0.0, %v1167
      %v1169 = vpop.f32.mrb[0].mxu0
      %v1170 = vpop.f32.mrb[0].mxu0
      %v1171 = vadd.f32 0.0, %v1170
      %v1172 = vpop.f32.mrb[0].mxu0
      %1173 = vmatprep.mubr.bf16.mxu0 0
      %1174 = vmatmul.mubr.bf16.gmra.mrb[0].mxu0 %v1117
      %v1175 = vpop.f32.mrb[0].mxu0
      %v1176 = vadd.f32 0.0, %v1175
      %v1177 = vpop.f32.mrb[0].mxu0
      %v1178 = vpop.f32.mrb[0].mxu0
      %v1179 = vadd.f32 0.0, %v1178
      %v1180 = vpop.f32.mrb[0].mxu0
      %1181 = vmatprep.mubr.bf16.mxu0 0
      %1182 = vmatmul.mubr.bf16.gmra.mrb[0].mxu0 %v1120
      %v1183 = vpop.f32.mrb[0].mxu0
      %v1184 = vadd.f32 0.0, %v1183
      %v1185 = vpop.f32.mrb[0].mxu0
      %v1186 = vpop.f32.mrb[0].mxu0
      %v1187 = vadd.f32 0.0, %v1186
      %v1188 = vpop.f32.mrb[0].mxu0
      %1189 = vdwg.mxu0
      %v1190 = vadd.f32 %v1091, %v1160
      %v1191 = vadd.f32 %v1092, %v1163
      %v1192 = vadd.f32 %v1093, %v1168
      %v1193 = vadd.f32 %v1094, %v1171
      %v1194 = vadd.f32 %v1095, %v1176
      %v1195 = vadd.f32 %v1096, %v1179
      %v1196 = vadd.f32 %v1097, %v1184
      %v1197 = vadd.f32 %v1098, %v1187
      %s1198 = scalar_lea.vmem %s3, 24
      %v1199 = vld [vmem:[%s1198] sm:$0xf]
      %v1200 = vpack.c.b16 %v427, %v894
      %v1202 = vsel %vm588, %v1200, 0
      %v1205 = vsel %vm601, %v1199, 0
      %1207 = vmatprep.subr.bf16.mxu0 0
      %1208 = vmatpush1.bf16.msra.mxu0 %v1205
      %1209 = vmatprep.subr.bf16.mxu0 0
      %1210 = vmatpush1.bf16.msra.mxu0 0
      %1211 = vmatprep.subr.bf16.mxu0 0
      %1212 = vmatpush1.bf16.msra.mxu0 0
      %1213 = vmatprep.subr.bf16.mxu0 0
      %1214 = vmatpush1.bf16.msra.mxu0 0
      %1215 = vmatprep.subr.bf16.mxu0 0
      %1216 = vmatpush1.bf16.msra.mxu0 0
      %1217 = vmatprep.subr.bf16.mxu0 0
      %1218 = vmatpush1.bf16.msra.mxu0 0
      %1219 = vmatprep.subr.bf16.mxu0 0
      %1220 = vmatpush1.bf16.msra.mxu0 0
      %1221 = vmatprep.subr.bf16.mxu0 0
      %1222 = vmatpush1.bf16.msra.mxu0 0
      %1223 = vmatprep.subr.bf16.mxu0 0
      %1224 = vmatpush1.bf16.msra.mxu0 0
      %1225 = vmatprep.subr.bf16.mxu0 0
      %1226 = vmatpush1.bf16.msra.mxu0 0
      %1227 = vmatprep.subr.bf16.mxu0 0
      %1228 = vmatpush1.bf16.msra.mxu0 0
      %1229 = vmatprep.subr.bf16.mxu0 0
      %1230 = vmatpush1.bf16.msra.mxu0 0
      %1231 = vmatprep.subr.bf16.mxu0 0
      %1232 = vmatpush1.bf16.msra.mxu0 0
      %1233 = vmatprep.subr.bf16.mxu0 0
      %1234 = vmatpush1.bf16.msra.mxu0 0
      %1235 = vmatprep.subr.bf16.mxu0 0
      %1236 = vmatpush1.bf16.msra.mxu0 0
      %1237 = vmatprep.subr.bf16.mxu0 0
      %1238 = vmatpush1.bf16.msra.mxu0 0
      %1239 = vmatprep.mubr.bf16.mxu0 0
      %1240 = vmatmul.mubr.bf16.gmra.mrb[0].mxu0 %v678
      %v1241 = vpop.f32.mrb[0].mxu0
      %v1242 = vadd.f32 0.0, %v1241
      %v1243 = vpop.f32.mrb[0].mxu0
      %v1244 = vpop.f32.mrb[0].mxu0
      %v1245 = vadd.f32 0.0, %v1244
      %v1246 = vpop.f32.mrb[0].mxu0
      %1247 = vmatprep.mubr.bf16.mxu0 0
      %1248 = vmatmul.mubr.bf16.gmra.mrb[0].mxu0 %v681
      %v1249 = vpop.f32.mrb[0].mxu0
      %v1250 = vadd.f32 0.0, %v1249
      %v1251 = vpop.f32.mrb[0].mxu0
      %v1252 = vpop.f32.mrb[0].mxu0
      %v1253 = vadd.f32 0.0, %v1252
      %v1254 = vpop.f32.mrb[0].mxu0
      %1255 = vmatprep.mubr.bf16.mxu0 0
      %1256 = vmatmul.mubr.bf16.gmra.mrb[0].mxu0 %v684
      %v1257 = vpop.f32.mrb[0].mxu0
      %v1258 = vadd.f32 0.0, %v1257
      %v1259 = vpop.f32.mrb[0].mxu0
      %v1260 = vpop.f32.mrb[0].mxu0
      %v1261 = vadd.f32 0.0, %v1260
      %v1262 = vpop.f32.mrb[0].mxu0
      %1263 = vmatprep.mubr.bf16.mxu0 0
      %1264 = vmatmul.mubr.bf16.gmra.mrb[0].mxu0 %v1202
      %v1265 = vpop.f32.mrb[0].mxu0
      %v1266 = vadd.f32 0.0, %v1265
      %v1267 = vpop.f32.mrb[0].mxu0
      %v1268 = vpop.f32.mrb[0].mxu0
      %v1269 = vadd.f32 0.0, %v1268
      %v1270 = vpop.f32.mrb[0].mxu0
      %1271 = vdwg.mxu0
      %v1272 = vadd.f32 %v1190, %v1242
      %v1273 = vadd.f32 %v1191, %v1245
      %v1274 = vadd.f32 %v1192, %v1250
      %v1275 = vadd.f32 %v1193, %v1253
      %v1276 = vadd.f32 %v1194, %v1258
      %v1277 = vadd.f32 %v1195, %v1261
      %v1278 = vadd.f32 %v1196, %v1266
      %v1279 = vadd.f32 %v1197, %v1269
      %s1280 = scalar_lea.vmem %s3, 28
      %v1281 = vld [vmem:[%s1280] sm:$0xf]
      %v1282 = vpack.c.b16 %v576, %v1006
      %v1284 = vsel %vm588, %v1282, 0
      %v1287 = vsel %vm601, %v1281, 0
      %1289 = vmatprep.subr.bf16.mxu0 0
      %1290 = vmatpush1.bf16.msra.mxu0 %v1287
      %1291 = vmatprep.subr.bf16.mxu0 0
      %1292 = vmatpush1.bf16.msra.mxu0 0
      %1293 = vmatprep.subr.bf16.mxu0 0
      %1294 = vmatpush1.bf16.msra.mxu0 0
      %1295 = vmatprep.subr.bf16.mxu0 0
      %1296 = vmatpush1.bf16.msra.mxu0 0
      %1297 = vmatprep.subr.bf16.mxu0 0
      %1298 = vmatpush1.bf16.msra.mxu0 0
      %1299 = vmatprep.subr.bf16.mxu0 0
      %1300 = vmatpush1.bf16.msra.mxu0 0
      %1301 = vmatprep.subr.bf16.mxu0 0
      %1302 = vmatpush1.bf16.msra.mxu0 0
      %1303 = vmatprep.subr.bf16.mxu0 0
      %1304 = vmatpush1.bf16.msra.mxu0 0
      %1305 = vmatprep.subr.bf16.mxu0 0
      %1306 = vmatpush1.bf16.msra.mxu0 0
      %1307 = vmatprep.subr.bf16.mxu0 0
      %1308 = vmatpush1.bf16.msra.mxu0 0
      %1309 = vmatprep.subr.bf16.mxu0 0
      %1310 = vmatpush1.bf16.msra.mxu0 0
      %1311 = vmatprep.subr.bf16.mxu0 0
      %1312 = vmatpush1.bf16.msra.mxu0 0
      %1313 = vmatprep.subr.bf16.mxu0 0
      %1314 = vmatpush1.bf16.msra.mxu0 0
      %1315 = vmatprep.subr.bf16.mxu0 0
      %1316 = vmatpush1.bf16.msra.mxu0 0
      %1317 = vmatprep.subr.bf16.mxu0 0
      %1318 = vmatpush1.bf16.msra.mxu0 0
      %1319 = vmatprep.subr.bf16.mxu0 0
      %1320 = vmatpush1.bf16.msra.mxu0 0
      %1321 = vmatprep.mubr.bf16.mxu0 0
      %1322 = vmatmul.mubr.bf16.gmra.mrb[0].mxu0 %v593
      %v1323 = vpop.f32.mrb[0].mxu0
      %v1324 = vadd.f32 0.0, %v1323
      %v1325 = vpop.f32.mrb[0].mxu0
      %v1326 = vpop.f32.mrb[0].mxu0
      %v1327 = vadd.f32 0.0, %v1326
      %v1328 = vpop.f32.mrb[0].mxu0
      %1329 = vmatprep.mubr.bf16.mxu0 0
      %1330 = vmatmul.mubr.bf16.gmra.mrb[0].mxu0 %v596
      %v1331 = vpop.f32.mrb[0].mxu0
      %v1332 = vadd.f32 0.0, %v1331
      %v1333 = vpop.f32.mrb[0].mxu0
      %v1334 = vpop.f32.mrb[0].mxu0
      %v1335 = vadd.f32 0.0, %v1334
      %v1336 = vpop.f32.mrb[0].mxu0
      %1337 = vmatprep.mubr.bf16.mxu0 0
      %1338 = vmatmul.mubr.bf16.gmra.mrb[0].mxu0 %v599
      %v1339 = vpop.f32.mrb[0].mxu0
      %v1340 = vadd.f32 0.0, %v1339
      %v1341 = vpop.f32.mrb[0].mxu0
      %v1342 = vpop.f32.mrb[0].mxu0
      %v1343 = vadd.f32 0.0, %v1342
      %v1344 = vpop.f32.mrb[0].mxu0
      %1345 = vmatprep.mubr.bf16.mxu0 0
      %1346 = vmatmul.mubr.bf16.gmra.mrb[0].mxu0 %v1284
      %v1347 = vpop.f32.mrb[0].mxu0
      %v1348 = vadd.f32 0.0, %v1347
      %v1349 = vpop.f32.mrb[0].mxu0
      %v1350 = vpop.f32.mrb[0].mxu0
      %v1351 = vadd.f32 0.0, %v1350
      %v1352 = vpop.f32.mrb[0].mxu0
      %1353 = vdwg.mxu0
      %v1354 = vadd.f32 %v1272, %v1324
      %v1355 = vadd.f32 %v1273, %v1327
      %v1356 = vadd.f32 %v1274, %v1332
      %v1357 = vadd.f32 %v1275, %v1335
      %v1358 = vadd.f32 %v1276, %v1340
      %v1359 = vadd.f32 %v1277, %v1343
      %v1360 = vadd.f32 %v1278, %v1348
      %v1361 = vadd.f32 %v1279, %v1351
      %s1362 = scalar_lea.vmem %s3, 32
      %v1363 = vld [vmem:[%s1362] sm:$0xf]
      %v1364 = vpack.c.b16 %v791, %v1105
      %v1366 = vsel %vm588, %v1364, 0
      %v1369 = vsel %vm601, %v1363, 0
      %1371 = vmatprep.subr.bf16.mxu0 0
      %1372 = vmatpush1.bf16.msra.mxu0 %v1369
      %1373 = vmatprep.subr.bf16.mxu0 0
      %1374 = vmatpush1.bf16.msra.mxu0 0
      %1375 = vmatprep.subr.bf16.mxu0 0
      %1376 = vmatpush1.bf16.msra.mxu0 0
      %1377 = vmatprep.subr.bf16.mxu0 0
      %1378 = vmatpush1.bf16.msra.mxu0 0
      %1379 = vmatprep.subr.bf16.mxu0 0
      %1380 = vmatpush1.bf16.msra.mxu0 0
      %1381 = vmatprep.subr.bf16.mxu0 0
      %1382 = vmatpush1.bf16.msra.mxu0 0
      %1383 = vmatprep.subr.bf16.mxu0 0
      %1384 = vmatpush1.bf16.msra.mxu0 0
      %1385 = vmatprep.subr.bf16.mxu0 0
      %1386 = vmatpush1.bf16.msra.mxu0 0
      %1387 = vmatprep.subr.bf16.mxu0 0
      %1388 = vmatpush1.bf16.msra.mxu0 0
      %1389 = vmatprep.subr.bf16.mxu0 0
      %1390 = vmatpush1.bf16.msra.mxu0 0
      %1391 = vmatprep.subr.bf16.mxu0 0
      %1392 = vmatpush1.bf16.msra.mxu0 0
      %1393 = vmatprep.subr.bf16.mxu0 0
      %1394 = vmatpush1.bf16.msra.mxu0 0
      %1395 = vmatprep.subr.bf16.mxu0 0
      %1396 = vmatpush1.bf16.msra.mxu0 0
      %1397 = vmatprep.subr.bf16.mxu0 0
      %1398 = vmatpush1.bf16.msra.mxu0 0
      %1399 = vmatprep.subr.bf16.mxu0 0
      %1400 = vmatpush1.bf16.msra.mxu0 0
      %1401 = vmatprep.subr.bf16.mxu0 0
      %1402 = vmatpush1.bf16.msra.mxu0 0
      %1403 = vmatprep.mubr.bf16.mxu0 0
      %1404 = vmatmul.mubr.bf16.gmra.mrb[0].mxu0 %v807
      %v1405 = vpop.f32.mrb[0].mxu0
      %v1406 = vadd.f32 0.0, %v1405
      %v1407 = vpop.f32.mrb[0].mxu0
      %v1408 = vpop.f32.mrb[0].mxu0
      %v1409 = vadd.f32 0.0, %v1408
      %v1410 = vpop.f32.mrb[0].mxu0
      %1411 = vmatprep.mubr.bf16.mxu0 0
      %1412 = vmatmul.mubr.bf16.gmra.mrb[0].mxu0 %v810
      %v1413 = vpop.f32.mrb[0].mxu0
      %v1414 = vadd.f32 0.0, %v1413
      %v1415 = vpop.f32.mrb[0].mxu0
      %v1416 = vpop.f32.mrb[0].mxu0
      %v1417 = vadd.f32 0.0, %v1416
      %v1418 = vpop.f32.mrb[0].mxu0
      %1419 = vmatprep.mubr.bf16.mxu0 0
      %1420 = vmatmul.mubr.bf16.gmra.mrb[0].mxu0 %v813
      %v1421 = vpop.f32.mrb[0].mxu0
      %v1422 = vadd.f32 0.0, %v1421
      %v1423 = vpop.f32.mrb[0].mxu0
      %v1424 = vpop.f32.mrb[0].mxu0
      %v1425 = vadd.f32 0.0, %v1424
      %v1426 = vpop.f32.mrb[0].mxu0
      %1427 = vmatprep.mubr.bf16.mxu0 0
      %1428 = vmatmul.mubr.bf16.gmra.mrb[0].mxu0 %v1366
      %v1429 = vpop.f32.mrb[0].mxu0
      %v1430 = vadd.f32 0.0, %v1429
      %v1431 = vpop.f32.mrb[0].mxu0
      %v1432 = vpop.f32.mrb[0].mxu0
      %v1433 = vadd.f32 0.0, %v1432
      %v1434 = vpop.f32.mrb[0].mxu0
      %1435 = vdwg.mxu0
      %v1436 = vadd.f32 %v1354, %v1406
      %v1437 = vadd.f32 %v1355, %v1409
      %v1438 = vadd.f32 %v1356, %v1414
      %v1439 = vadd.f32 %v1357, %v1417
      %v1440 = vadd.f32 %v1358, %v1422
      %v1441 = vadd.f32 %v1359, %v1425
      %v1442 = vadd.f32 %v1360, %v1430
      %v1443 = vadd.f32 %v1361, %v1433
      %v1444 = vpack.c.bf16 %v1436, %v1436
      %v1445 = vpack.c.bf16 %v1437, %v1437
      %v1446 = vpack.c.bf16 %v1438, %v1438
      %v1447 = vpack.c.bf16 %v1439, %v1439
      %v1448 = vpack.c.bf16 %v1440, %v1440
      %v1449 = vpack.c.bf16 %v1441, %v1441
      %v1450 = vpack.c.bf16 %v1442, %v1442
      %v1451 = vpack.c.bf16 %v1443, %v1443
      %vm1452 = vcmask 60416
      %1453 = vst.msk [vmem:[%s262] sm:$0xf] %vm1452, %v1444
      %1454 = vst.msk [vmem:[%s262 + $0x4] sm:$0xf] %vm1452, %v1445
      %1455 = vst.msk [vmem:[%s262 + $0x8] sm:$0xf] %vm1452, %v1446
      %1456 = vst.msk [vmem:[%s262 + $0xc] sm:$0xf] %vm1452, %v1447
      %1457 = vst.msk [vmem:[%s262 + $0x10] sm:$0xf] %vm1452, %v1448
      %1458 = vst.msk [vmem:[%s262 + $0x14] sm:$0xf] %vm1452, %v1449
      %1459 = vst.msk [vmem:[%s262 + $0x18] sm:$0xf] %vm1452, %v1450
      %1460 = vst.msk [vmem:[%s262 + $0x1c] sm:$0xf] %vm1452, %v1451
      %v1461 = vsel %vm588, %v1436, 0.0
      %v1462 = vsel %vm588, %v1437, 0.0
      %v1463 = vadd.f32 %v1461, %v1462
      %v1464 = vsel %vm588, %v1438, 0.0
      %v1465 = vadd.f32 %v1463, %v1464
      %v1466 = vsel %vm588, %v1439, 0.0
      %v1467 = vadd.f32 %v1465, %v1466
      %v1468 = vsel %vm588, %v1440, 0.0
      %v1469 = vadd.f32 %v1467, %v1468
      %v1470 = vsel %vm588, %v1441, 0.0
      %v1471 = vadd.f32 %v1469, %v1470
      %v1472 = vsel %vm588, %v1442, 0.0
      %v1473 = vadd.f32 %v1471, %v1472
      %v1474 = vsel %vm588, %v1443, 0.0
      %v1475 = vadd.f32 %v1473, %v1474
      %v1476 = vrot.slane %v1475, 4
      %v1477 = vadd.f32 %v1475, %v1476
      %v1478 = vrot.slane %v1477, 2
      %v1479 = vadd.f32 %v1477, %v1478
      %v1480 = vrot.slane %v1479, 1
      %v1481 = vadd.f32 %v1479, %v1480
      %vm1482 = vcmask 57344
      %1483 = vst.msk [vmem:[%s265] sm:$0x1] %vm1482, %v1481
      %v1484 = vmul.f32 %v1436, %v1436
      %v1485 = vmul.f32 %v1437, %v1437
      %v1486 = vmul.f32 %v1438, %v1438
      %v1487 = vmul.f32 %v1439, %v1439
      %v1488 = vmul.f32 %v1440, %v1440
      %v1489 = vmul.f32 %v1441, %v1441
      %v1490 = vmul.f32 %v1442, %v1442
      %v1491 = vmul.f32 %v1443, %v1443
      %v1492 = vsel %vm588, %v1484, 0.0
      %v1493 = vsel %vm588, %v1485, 0.0
      %v1494 = vadd.f32 %v1492, %v1493
      %v1495 = vsel %vm588, %v1486, 0.0
      %v1496 = vadd.f32 %v1494, %v1495
      %v1497 = vsel %vm588, %v1487, 0.0
      %v1498 = vadd.f32 %v1496, %v1497
      %v1499 = vsel %vm588, %v1488, 0.0
      %v1500 = vadd.f32 %v1498, %v1499
      %v1501 = vsel %vm588, %v1489, 0.0
      %v1502 = vadd.f32 %v1500, %v1501
      %v1503 = vsel %vm588, %v1490, 0.0
      %v1504 = vadd.f32 %v1502, %v1503
      %v1505 = vsel %vm588, %v1491, 0.0
      %v1506 = vadd.f32 %v1504, %v1505
      %v1507 = vrot.slane %v1506, 4
      %v1508 = vadd.f32 %v1506, %v1507
      %v1509 = vrot.slane %v1508, 2
      %v1510 = vadd.f32 %v1508, %v1509
      %v1511 = vrot.slane %v1510, 1
      %v1512 = vadd.f32 %v1510, %v1511
      %1513 = vst.msk [vmem:[%s268] sm:$0x1] %vm1482, %v1512
      %p1514 = scmp.lt.s32.totalorder %s18, 1
      %s1515 = scalar_select %p1514, %s18, 1
      %s1516 = smul.addr %s1515, 8
      %s1517 = smul.addr %s1516, 4
      %s1518 = scalar_lea.vmem %s4, %s1517
      %p1519 = scmp.lt.s32.totalorder %s18, 1
      %s1520 = scalar_select %p1519, %s18, 1
      %s1521 = scalar_lea.vmem %s5, %s1520
      %p1522 = scmp.lt.s32.totalorder %s18, 1
      %s1523 = scalar_select %p1522, %s18, 1
      %s1524 = scalar_lea.vmem %s6, %s1523
      // Predicated region
      $region37: #{residual_block_pallas.5} parent=35 // pred_check
        %p1525 = pneg %p125
      $region38: #{residual_block_pallas.5} parent=35 // pred_check_branch
        %1527 = sbr.rel (%p1525) target = $region40
      $region39: #{residual_block_pallas.5} parent=35 // pred_region
        _
      $region40: #{residual_block_pallas.5} parent=35 // pred_fallthru
        _
      // Predicated region
      $region41: #{residual_block_pallas.5} parent=35 // pred_check
        %p1528 = pneg %p151
      $region42: #{residual_block_pallas.5} parent=35 // pred_check_branch
        %1530 = sbr.rel (%p1528) target = $region44
      $region43: #{residual_block_pallas.5} parent=35 // pred_region
        _
      $region44: #{residual_block_pallas.5} parent=35 // pred_fallthru
        _
      // Predicated region
      $region45: #{residual_block_pallas.5} parent=35 // pred_check
        %p1531 = pneg %p177
      $region46: #{residual_block_pallas.5} parent=35 // pred_check_branch
        %1533 = sbr.rel (%p1531) target = $region48
      $region47: #{residual_block_pallas.5} parent=35 // pred_region
        _
      $region48: #{residual_block_pallas.5} parent=35 // pred_fallthru
        _
    $region36: #{residual_block_pallas.5} parent=5 // pred_fallthru
      _
    %p1534 = scmp.le.s32.totalorder 2, %s13
    // Predicated region
    $region49: #{residual_block_pallas.5} parent=5 // pred_check
      %p1535 = pneg %p1534
    $region50: #{residual_block_pallas.5} parent=5 // pred_check_branch
      %1537 = sbr.rel (%p1535) target = $region52
    $region51: #{residual_block_pallas.5} parent=5 // pred_region
      %s1538 = ssub.s32 %s13, 2
      // Predicated region
      $region53: #{residual_block_pallas.5} parent=51 // pred_check
        %p1539 = pneg %p131
      $region54: #{residual_block_pallas.5} parent=51 // pred_check_branch
        %1541 = sbr.rel (%p1539) target = $region56
      $region55: #{residual_block_pallas.5} parent=51 // pred_region
        %p1542 = scmp.lt.s32.totalorder %s19, 1
        %s1543 = scalar_select %p1542, %s19, 1
        %s1544 = smul.addr %s1543, 8
        %s1545 = smul.addr %s1544, 4
        %s1546 = scalar_lea.vmem %s4, %s1545
      $region56: #{residual_block_pallas.5} parent=51 // pred_fallthru
        _
      // Predicated region
      $region57: #{residual_block_pallas.5} parent=51 // pred_check
        %p1547 = pneg %p157
      $region58: #{residual_block_pallas.5} parent=51 // pred_check_branch
        %1549 = sbr.rel (%p1547) target = $region60
      $region59: #{residual_block_pallas.5} parent=51 // pred_region
        %p1550 = scmp.lt.s32.totalorder %s19, 1
        %s1551 = scalar_select %p1550, %s19, 1
        %s1552 = scalar_lea.vmem %s5, %s1551
      $region60: #{residual_block_pallas.5} parent=51 // pred_fallthru
        _
      // Predicated region
      $region61: #{residual_block_pallas.5} parent=51 // pred_check
        %p1553 = pneg %p183
      $region62: #{residual_block_pallas.5} parent=51 // pred_check_branch
        %1555 = sbr.rel (%p1553) target = $region64
      $region63: #{residual_block_pallas.5} parent=51 // pred_region
        %p1556 = scmp.lt.s32.totalorder %s19, 1
        %s1557 = scalar_select %p1556, %s19, 1
        %s1558 = scalar_lea.vmem %s6, %s1557
      $region64: #{residual_block_pallas.5} parent=51 // pred_fallthru
        _
    $region52: #{residual_block_pallas.5} parent=5 // pred_fallthru
      _
  $region6: #{residual_block_pallas.5} parent=0 // loop_footer
    %s17 = sadd.s32 1, %s13
  $region7: #{residual_block_pallas.5} parent=0 // loop_footer_branch
    %12 = sbr.rel target = $region3
  $region8: #{residual_block_pallas.5} parent=0 // loop_exit
    _

</llo_original>
